<compile_context>
chip_gen: v6e
topology: v6e:2x2x1
jax: 0.10.0
libtpu: 0.0.40
codegen_flags: <defaults>
</compile_context>

<pallas_src>
import jax
import jax.numpy as jnp
from jax.experimental import pallas as pl
from jax.experimental.pallas import tpu as pltpu

BLK = 128  # lane-dense padding unit; every layer dim in this config is <= 128


def _round_up(n, m):
    return ((n + m - 1) // m) * m


def _make_food_kernel(widx, bidx):
    """Fused FoodEmbeddingsNet forward.

    widx / bidx map layer names to *static* indices into the packed weight /
    bias tensors (baked in at trace time -> plain VMEM loads, no gathers).
    """

    def kernel(ax_ref, ix_ref, fx_ref, w_ref, b_ref, preds_ref, fout_ref):
        f32, bf16 = jnp.float32, jnp.bfloat16

        def lin(x, wname, bname):
            # bf16 operands on the MXU, f32 accumulation, f32 bias add.
            return (jnp.dot(x.astype(bf16), w_ref[widx[wname]],
                            preferred_element_type=f32)
                    + b_ref[bidx[bname]])

        def mlp3(x, p):
            h = jnp.maximum(lin(x, p + "1", p + "1"), 0.0)
            h = jnp.maximum(lin(h, p + "2", p + "2"), 0.0)
            return lin(h, p + "3", p + "3")

        def combine(e1, e2, p):
            # torch.cat + fc1 expressed as ONE K=256 matmul: lane-concat of the
            # two (already lane-dense, zero-padded) embeddings against the
            # sublane-stacked weight halves.  Full MXU depth on v6e/v7x.
            x = jnp.concatenate([e1.astype(bf16), e2.astype(bf16)], axis=-1)
            w1 = jnp.concatenate([w_ref[widx[p + "1a"]],
                                  w_ref[widx[p + "1b"]]], axis=0)
            h = jnp.maximum(jnp.dot(x, w1, preferred_element_type=f32)
                            + b_ref[bidx[p + "1"]], 0.0)
            h = jnp.maximum(lin(h, p + "2", p + "2"), 0.0)
            return lin(h, p + "3", p + "3")

        def log_softmax(z):
            # Padded class lanes already carry -1e30 (folded into the bias),
            # so no iota/where mask is needed here.
            m = jnp.max(z, axis=-1, keepdims=True)
            s = z - m
            return s - jnp.log(jnp.sum(jnp.exp(s), axis=-1, keepdims=True))

        def classifier(emb, p):
            alpha = b_ref[bidx["alpha_" + p]]     # (1,128) broadcast PReLU weight
            act = jnp.where(emb > 0, emb, alpha * emb)
            return log_softmax(lin(act, p, p))

        audio_out = mlp3(ax_ref[...], "a")
        image_out = mlp3(ix_ref[...], "i")
        force_out = mlp3(fx_ref[...], "f")
        af_out = combine(audio_out, force_out, "af")
        final_out = combine(image_out, af_out, "fin")

        # Four heads packed into one lane-dense output slab (static offsets).
        preds_ref[:, 0 * BLK:1 * BLK] = classifier(audio_out, "ca").astype(preds_ref.dtype)
        preds_ref[:, 1 * BLK:2 * BLK] = classifier(image_out, "ci").astype(preds_ref.dtype)
        preds_ref[:, 2 * BLK:3 * BLK] = classifier(force_out, "cf").astype(preds_ref.dtype)
        preds_ref[:, 3 * BLK:4 * BLK] = classifier(final_out, "cl").astype(preds_ref.dtype)
        fout_ref[...] = final_out.astype(fout_ref.dtype)

    return kernel


def food_embeddings_forward(params, audio_x, image_feat, force_x, n_classes,
                            tb_max=256):
    """Fused FoodEmbeddingsNet forward.

    audio_x:    (B, audio_in)     f32
    image_feat: (B, resnet_feats) f32 -- precomputed ResNet features
    force_x:    (B, force_in)     f32
    Returns (audio_pred, image_pred, force_pred, final_pred, final_out),
    sliced back to the un-padded batch / logical widths.
    """
    f32, bf16 = jnp.float32, jnp.bfloat16
    B = audio_x.shape[0]

    # --- batch tiling: >= 2 grid steps when B >= 16 (pipelining + v7x 2-TC
    #     sharding), TB capped at 256 so live activations stay in-vreg. ---
    B8 = _round_up(B, 8)
    if B8 >= 16:
        TB = min(tb_max, max(8, _round_up(-(-B8 // 2), 8)))
    else:
        TB = B8
    B_pad = _round_up(B8, TB)
    grid = (B_pad // TB,)

    # --- packed parameter tensors: 2 resident DMAs instead of ~45 ---
    w_blocks, b_blocks = [], []
    widx, bidx = {}, {}

    def wt_block(w):  # torch Linear weight (out,in) -> transposed, padded, bf16
        wt = jnp.transpose(w).astype(f32)
        # TODO(synk): layer dims > 128 (e.g. the default image_fc1=2048 config)
        # would need multiple 128x128 blocks per layer; this small config fits.
        assert wt.shape[0] <= BLK and wt.shape[1] <= BLK
        return jnp.pad(wt, ((0, BLK - wt.shape[0]),
                            (0, BLK - wt.shape[1]))).astype(bf16)

    def bias_block(b, fill=0.0):
        bb = b.astype(f32).reshape(1, -1)
        return jnp.pad(bb, ((0, 0), (0, BLK - bb.shape[1])),
                       constant_values=fill)

    def add_w(name, blk):
        widx[name] = len(w_blocks)
        w_blocks.append(blk)

    def add_b(name, blk):
        bidx[name] = len(b_blocks)
        b_blocks.append(blk)

    def add_mlp(prefix, p):
        for n in ("1", "2", "3"):
            add_w(prefix + n, wt_block(p["w" + n]))
            add_b(prefix + n, bias_block(p["b" + n]))

    def add_combine(prefix, p, in1):
        wt = jnp.transpose(p["w1"]).astype(f32)

        def pad(m):
            return jnp.pad(m, ((0, BLK - m.shape[0]),
                               (0, BLK - m.shape[1]))).astype(bf16)

        add_w(prefix + "1a", pad(wt[:in1]))      # rows for embedding 1
        add_w(prefix + "1b", pad(wt[in1:]))      # rows for embedding 2
        add_b(prefix + "1", bias_block(p["b1"]))
        for n in ("2", "3"):
            add_w(prefix + n, wt_block(p["w" + n]))
            add_b(prefix + n, bias_block(p["b" + n]))

    def add_cls(name, p):
        add_w(name, wt_block(p["w"]))
        # -1e30 in padded class lanes => free log-softmax lane mask (the padded
        # weight columns are exactly zero, so padded logits become -1e30).
        add_b(name, bias_block(p["b"], fill=-1e30))
        add_b("alpha_" + name, jnp.full((1, BLK), p["alpha"], dtype=f32))

    pa, pi, pf = params["audio"], params["image"], params["force"]
    paf, pfin = params["audio_force"], params["final"]
    a_embed = pa["w3"].shape[0]
    i_embed = pi["w3"].shape[0]
    final_embed = pfin["w3"].shape[0]

    add_mlp("a", pa)
    add_mlp("i", pi)
    add_mlp("f", pf)
    add_combine("af", paf, a_embed)
    add_combine("fin", pfin, i_embed)
    add_cls("ca", params["audio_cls"])
    add_cls("ci", params["image_cls"])
    add_cls("cf", params["force_cls"])
    add_cls("cl", params["final_cls"])

    w_packed = jnp.stack(w_blocks)          # (Nw, 128, 128) bf16, resident
    b_packed = jnp.stack(b_blocks)          # (Nb,   1, 128) f32, resident

    def pad_input(x):
        # Row tiles stay f32 (negligible bytes); cast to bf16 in-kernel at the
        # first matmul, which also sidesteps bf16 (16,128) sublane tiling.
        return jnp.pad(x.astype(f32),
                       ((0, B_pad - x.shape[0]), (0, BLK - x.shape[1])))

    ax = pad_input(audio_x)
    ix = pad_input(image_feat)
    fx = pad_input(force_x)

    def row_spec(d):
        return pl.BlockSpec((TB, d), lambda i: (i, 0))

    def resident_spec(a):
        nd = a.ndim
        # Constant block index => DMA'd to VMEM once, resident across the grid.
        return pl.BlockSpec(a.shape, lambda i: (0,) * nd)

    in_specs = [row_spec(BLK), row_spec(BLK), row_spec(BLK),
                resident_spec(w_packed), resident_spec(b_packed)]

    C_slab = 4 * BLK
    out_shape = (jax.ShapeDtypeStruct((B_pad, C_slab), f32),
                 jax.ShapeDtypeStruct((B_pad, BLK), f32))
    out_specs = (row_spec(C_slab), row_spec(BLK))

    n_w = w_packed.shape[0]
    flops = 2 * B_pad * n_w * BLK * BLK
    bytes_accessed = int(w_packed.size * 2 + b_packed.size * 4
                         + 4 * (ax.size + ix.size + fx.size)
                         + 4 * B_pad * (C_slab + BLK))
    cost = pl.CostEstimate(flops=flops,
                           transcendentals=4 * B_pad * BLK,
                           bytes_accessed=bytes_accessed)

    preds, fout = pl.pallas_call(
        _make_food_kernel(widx, bidx),
        out_shape=out_shape,
        grid=grid,
        in_specs=in_specs,
        out_specs=out_specs,
        compiler_params=pltpu.CompilerParams(
            dimension_semantics=("parallel",)),
        cost_estimate=cost,
    )(ax, ix, fx, w_packed, b_packed)

    def head(h):
        return preds[:B, h * BLK:h * BLK + n_classes]

    return head(0), head(1), head(2), head(3), fout[:B, :final_embed]


# ------------------------- parameter init + reference -------------------------

def _linear_init(key, in_dim, out_dim):
    kw, kb = jax.random.split(key)
    bound = 1.0 / float(in_dim) ** 0.5   # PyTorch nn.Linear default init
    w = jax.random.uniform(kw, (out_dim, in_dim), minval=-bound, maxval=bound,
                           dtype=jnp.float32)
    b = jax.random.uniform(kb, (out_dim,), minval=-bound, maxval=bound,
                           dtype=jnp.float32)
    return w, b


def _mlp_init(key, d_in, h1, h2, d_out):
    k1, k2, k3 = jax.random.split(key, 3)
    w1, b1 = _linear_init(k1, d_in, h1)
    w2, b2 = _linear_init(k2, h1, h2)
    w3, b3 = _linear_init(k3, h2, d_out)
    return dict(w1=w1, b1=b1, w2=w2, b2=b2, w3=w3, b3=b3)


def _cls_init(key, d_in, n_classes):
    w, b = _linear_init(key, d_in, n_classes)
    return dict(w=w, b=b, alpha=jnp.float32(0.25))   # nn.PReLU default init


def reference_forward(params, audio_x, image_feat, force_x):
    hp = jax.lax.Precision.HIGHEST

    def lin(x, w, b):
        return jnp.dot(x, w.T, precision=hp) + b

    def mlp(x, p):
        h = jax.nn.relu(lin(x, p["w1"], p["b1"]))
        h = jax.nn.relu(lin(h, p["w2"], p["b2"]))
        return lin(h, p["w3"], p["b3"])

    def classify(emb, p):
        act = jnp.where(emb > 0, emb, p["alpha"] * emb)
        return jax.nn.log_softmax(lin(act, p["w"], p["b"]), axis=-1)

    audio_out = mlp(audio_x, params["audio"])
    image_out = mlp(image_feat, params["image"])
    force_out = mlp(force_x, params["force"])
    af_out = mlp(jnp.concatenate([audio_out, force_out], axis=-1),
                 params["audio_force"])
    final_out = mlp(jnp.concatenate([image_out, af_out], axis=-1),
                    params["final"])
    return (classify(audio_out, params["audio_cls"]),
            classify(image_out, params["image_cls"]),
            classify(force_out, params["force_cls"]),
            classify(final_out, params["final_cls"]),
            final_out)


if __name__ == "__main__":
    # Small constructor sizes consistent with FoodEmbeddingsNet.
    B = 32            # B >= 16 => grid has 2 steps (pipelining + v7x megacore)
    n_classes = 16
    audio_in, audio_fc1, audio_fc2, audio_embed = 40, 64, 64, 32
    force_in, force_fc1, force_fc2, force_embed = 24, 64, 64, 32
    resnet_feat, image_fc1, image_fc2, image_embed = 96, 128, 64, 64
    af_fc1, af_fc2, af_embed = 64, 64, 32
    final_fc1, final_fc2, final_embed = 128, 64, 64

    key = jax.random.PRNGKey(0)
    (k_a, k_i, k_f, k_af, k_fin, k_ca, k_ci, k_cf, k_cl,
     k_xa, k_xi, k_xf) = jax.random.split(key, 12)

    params = dict(
        audio=_mlp_init(k_a, audio_in, audio_fc1, audio_fc2, audio_embed),
        image=_mlp_init(k_i, resnet_feat, image_fc1, image_fc2, image_embed),
        force=_mlp_init(k_f, force_in, force_fc1, force_fc2, force_embed),
        audio_force=_mlp_init(k_af, audio_embed + force_embed,
                              af_fc1, af_fc2, af_embed),
        final=_mlp_init(k_fin, image_embed + af_embed,
                        final_fc1, final_fc2, final_embed),
        audio_cls=_cls_init(k_ca, audio_embed, n_classes),
        image_cls=_cls_init(k_ci, image_embed, n_classes),
        force_cls=_cls_init(k_cf, force_embed, n_classes),
        final_cls=_cls_init(k_cl, final_embed, n_classes),
    )

    audio_x = jax.random.normal(k_xa, (B, audio_in), dtype=jnp.float32)
    # TODO(synk): the pretrained torchvision ResNet34 backbone inside
    # ResNetEmbeddingsNet has no clean Pallas equivalent here; the kernel
    # consumes precomputed per-sequence ResNet features (a stand-in for
    # resnet.fc.in_features * sequence_length wide features) instead.
    image_feat = jax.random.normal(k_xi, (B, resnet_feat), dtype=jnp.float32)
    force_x = jax.random.normal(k_xf, (B, force_in), dtype=jnp.float32)

    outs = food_embeddings_forward(params, audio_x, image_feat, force_x, n_classes)
    outs = jax.block_until_ready(outs)

    refs = reference_forward(params, audio_x, image_feat, force_x)
    names = ("audio_pred", "image_pred", "force_pred", "final_pred", "final_out")
    for name, o, r in zip(names, outs, refs):
        assert o.shape == r.shape, (name, o.shape, r.shape)
        # Tolerance reflects the bf16 weight / MXU-operand path (perf item 2);
        # accumulation and all nonlinearity math remain f32.
        assert jnp.allclose(o, r, atol=2e-2, rtol=2e-2), (
            name, float(jnp.max(jnp.abs(o - r))))

    print("KERNEL_OK")
</pallas_src>

<mosaic_0001>
module attributes {stable_mosaic.version = 11 : i64} {
  func.func @kernel(%arg0: i32, %arg1: memref<16x128xf32, #tpu.memory_space<vmem>>, %arg2: memref<16x128xf32, #tpu.memory_space<vmem>>, %arg3: memref<16x128xf32, #tpu.memory_space<vmem>>, %arg4: memref<21x128x128xbf16, #tpu.memory_space<vmem>>, %arg5: memref<23x1x128xf32, #tpu.memory_space<vmem>>, %arg6: memref<16x512xf32, #tpu.memory_space<vmem>>, %arg7: memref<16x128xf32, #tpu.memory_space<vmem>>) attributes {dimension_semantics = [#tpu.dimension_semantics<parallel>], iteration_bounds = array<i64: 2>, scalar_prefetch = 0 : i64, scratch_operands = 0 : i64, tpu.core_type = #tpu.core_type<tc>, window_params = [{transform_indices = @transform_0, window_bounds = array<i64: 16, 128>}, {transform_indices = @transform_1, window_bounds = array<i64: 16, 128>}, {transform_indices = @transform_2, window_bounds = array<i64: 16, 128>}, {pipeline_mode = #tpu.pipeline_mode<synchronous>, transform_indices = @transform_3, window_bounds = array<i64: 21, 128, 128>}, {pipeline_mode = #tpu.pipeline_mode<synchronous>, transform_indices = @transform_4, window_bounds = array<i64: 23, 1, 128>}, {transform_indices = @transform_5, window_bounds = array<i64: 16, 512>}, {transform_indices = @transform_6, window_bounds = array<i64: 16, 128>}]} {
    %c0 = arith.constant 0 : index
    %c0_0 = arith.constant 0 : index
    %0 = vector.load %arg1[%c0, %c0_0] : memref<16x128xf32, #tpu.memory_space<vmem>>, vector<16x128xf32>
    %1 = arith.truncf %0 : vector<16x128xf32> to vector<16x128xbf16>
    %c0_1 = arith.constant 0 : index
    %c0_2 = arith.constant 0 : index
    %c0_3 = arith.constant 0 : index
    %2 = vector.load %arg4[%c0_1, %c0_2, %c0_3] : memref<21x128x128xbf16, #tpu.memory_space<vmem>>, vector<1x128x128xbf16>
    %3 = vector.shape_cast %2 : vector<1x128x128xbf16> to vector<128x128xbf16>
    %cst = arith.constant dense<0.000000e+00> : vector<16x128xf32>
    %4 = tpu.matmul %1, %3, %cst {dimension_numbers = #tpu.dot_dimension_numbers<[1], [0], [0], [1], [0, 0, 1, 1], [], []>} : vector<16x128xbf16>, vector<128x128xbf16>, vector<16x128xf32> -> vector<16x128xf32>
    %c0_4 = arith.constant 0 : index
    %c0_5 = arith.constant 0 : index
    %c0_6 = arith.constant 0 : index
    %5 = vector.load %arg5[%c0_4, %c0_5, %c0_6] : memref<23x1x128xf32, #tpu.memory_space<vmem>>, vector<1x1x128xf32>
    %6 = vector.shape_cast %5 : vector<1x1x128xf32> to vector<1x128xf32>
    %7 = vector.broadcast %6 : vector<1x128xf32> to vector<16x128xf32>
    %8 = arith.addf %4, %7 : vector<16x128xf32>
    %cst_7 = arith.constant 0.000000e+00 : f32
    %9 = vector.broadcast %cst_7 : f32 to vector<16x128xf32>
    %10 = arith.maximumf %8, %9 : vector<16x128xf32>
    %11 = arith.truncf %10 : vector<16x128xf32> to vector<16x128xbf16>
    %c1 = arith.constant 1 : index
    %c0_8 = arith.constant 0 : index
    %c0_9 = arith.constant 0 : index
    %12 = vector.load %arg4[%c1, %c0_8, %c0_9] : memref<21x128x128xbf16, #tpu.memory_space<vmem>>, vector<1x128x128xbf16>
    %13 = vector.shape_cast %12 : vector<1x128x128xbf16> to vector<128x128xbf16>
    %cst_10 = arith.constant dense<0.000000e+00> : vector<16x128xf32>
    %14 = tpu.matmul %11, %13, %cst_10 {dimension_numbers = #tpu.dot_dimension_numbers<[1], [0], [0], [1], [0, 0, 1, 1], [], []>} : vector<16x128xbf16>, vector<128x128xbf16>, vector<16x128xf32> -> vector<16x128xf32>
    %c1_11 = arith.constant 1 : index
    %c0_12 = arith.constant 0 : index
    %c0_13 = arith.constant 0 : index
    %15 = vector.load %arg5[%c1_11, %c0_12, %c0_13] : memref<23x1x128xf32, #tpu.memory_space<vmem>>, vector<1x1x128xf32>
    %16 = vector.shape_cast %15 : vector<1x1x128xf32> to vector<1x128xf32>
    %17 = vector.broadcast %16 : vector<1x128xf32> to vector<16x128xf32>
    %18 = arith.addf %14, %17 : vector<16x128xf32>
    %cst_14 = arith.constant 0.000000e+00 : f32
    %19 = vector.broadcast %cst_14 : f32 to vector<16x128xf32>
    %20 = arith.maximumf %18, %19 : vector<16x128xf32>
    %21 = arith.truncf %20 : vector<16x128xf32> to vector<16x128xbf16>
    %c2 = arith.constant 2 : index
    %c0_15 = arith.constant 0 : index
    %c0_16 = arith.constant 0 : index
    %22 = vector.load %arg4[%c2, %c0_15, %c0_16] : memref<21x128x128xbf16, #tpu.memory_space<vmem>>, vector<1x128x128xbf16>
    %23 = vector.shape_cast %22 : vector<1x128x128xbf16> to vector<128x128xbf16>
    %cst_17 = arith.constant dense<0.000000e+00> : vector<16x128xf32>
    %24 = tpu.matmul %21, %23, %cst_17 {dimension_numbers = #tpu.dot_dimension_numbers<[1], [0], [0], [1], [0, 0, 1, 1], [], []>} : vector<16x128xbf16>, vector<128x128xbf16>, vector<16x128xf32> -> vector<16x128xf32>
    %c2_18 = arith.constant 2 : index
    %c0_19 = arith.constant 0 : index
    %c0_20 = arith.constant 0 : index
    %25 = vector.load %arg5[%c2_18, %c0_19, %c0_20] : memref<23x1x128xf32, #tpu.memory_space<vmem>>, vector<1x1x128xf32>
    %26 = vector.shape_cast %25 : vector<1x1x128xf32> to vector<1x128xf32>
    %27 = vector.broadcast %26 : vector<1x128xf32> to vector<16x128xf32>
    %28 = arith.addf %24, %27 : vector<16x128xf32>
    %c0_21 = arith.constant 0 : index
    %c0_22 = arith.constant 0 : index
    %29 = vector.load %arg2[%c0_21, %c0_22] : memref<16x128xf32, #tpu.memory_space<vmem>>, vector<16x128xf32>
    %30 = arith.truncf %29 : vector<16x128xf32> to vector<16x128xbf16>
    %c3 = arith.constant 3 : index
    %c0_23 = arith.constant 0 : index
    %c0_24 = arith.constant 0 : index
    %31 = vector.load %arg4[%c3, %c0_23, %c0_24] : memref<21x128x128xbf16, #tpu.memory_space<vmem>>, vector<1x128x128xbf16>
    %32 = vector.shape_cast %31 : vector<1x128x128xbf16> to vector<128x128xbf16>
    %cst_25 = arith.constant dense<0.000000e+00> : vector<16x128xf32>
    %33 = tpu.matmul %30, %32, %cst_25 {dimension_numbers = #tpu.dot_dimension_numbers<[1], [0], [0], [1], [0, 0, 1, 1], [], []>} : vector<16x128xbf16>, vector<128x128xbf16>, vector<16x128xf32> -> vector<16x128xf32>
    %c3_26 = arith.constant 3 : index
    %c0_27 = arith.constant 0 : index
    %c0_28 = arith.constant 0 : index
    %34 = vector.load %arg5[%c3_26, %c0_27, %c0_28] : memref<23x1x128xf32, #tpu.memory_space<vmem>>, vector<1x1x128xf32>
    %35 = vector.shape_cast %34 : vector<1x1x128xf32> to vector<1x128xf32>
    %36 = vector.broadcast %35 : vector<1x128xf32> to vector<16x128xf32>
    %37 = arith.addf %33, %36 : vector<16x128xf32>
    %cst_29 = arith.constant 0.000000e+00 : f32
    %38 = vector.broadcast %cst_29 : f32 to vector<16x128xf32>
    %39 = arith.maximumf %37, %38 : vector<16x128xf32>
    %40 = arith.truncf %39 : vector<16x128xf32> to vector<16x128xbf16>
    %c4 = arith.constant 4 : index
    %c0_30 = arith.constant 0 : index
    %c0_31 = arith.constant 0 : index
    %41 = vector.load %arg4[%c4, %c0_30, %c0_31] : memref<21x128x128xbf16, #tpu.memory_space<vmem>>, vector<1x128x128xbf16>
    %42 = vector.shape_cast %41 : vector<1x128x128xbf16> to vector<128x128xbf16>
    %cst_32 = arith.constant dense<0.000000e+00> : vector<16x128xf32>
    %43 = tpu.matmul %40, %42, %cst_32 {dimension_numbers = #tpu.dot_dimension_numbers<[1], [0], [0], [1], [0, 0, 1, 1], [], []>} : vector<16x128xbf16>, vector<128x128xbf16>, vector<16x128xf32> -> vector<16x128xf32>
    %c4_33 = arith.constant 4 : index
    %c0_34 = arith.constant 0 : index
    %c0_35 = arith.constant 0 : index
    %44 = vector.load %arg5[%c4_33, %c0_34, %c0_35] : memref<23x1x128xf32, #tpu.memory_space<vmem>>, vector<1x1x128xf32>
    %45 = vector.shape_cast %44 : vector<1x1x128xf32> to vector<1x128xf32>
    %46 = vector.broadcast %45 : vector<1x128xf32> to vector<16x128xf32>
    %47 = arith.addf %43, %46 : vector<16x128xf32>
    %cst_36 = arith.constant 0.000000e+00 : f32
    %48 = vector.broadcast %cst_36 : f32 to vector<16x128xf32>
    %49 = arith.maximumf %47, %48 : vector<16x128xf32>
    %50 = arith.truncf %49 : vector<16x128xf32> to vector<16x128xbf16>
    %c5 = arith.constant 5 : index
    %c0_37 = arith.constant 0 : index
    %c0_38 = arith.constant 0 : index
    %51 = vector.load %arg4[%c5, %c0_37, %c0_38] : memref<21x128x128xbf16, #tpu.memory_space<vmem>>, vector<1x128x128xbf16>
    %52 = vector.shape_cast %51 : vector<1x128x128xbf16> to vector<128x128xbf16>
    %cst_39 = arith.constant dense<0.000000e+00> : vector<16x128xf32>
    %53 = tpu.matmul %50, %52, %cst_39 {dimension_numbers = #tpu.dot_dimension_numbers<[1], [0], [0], [1], [0, 0, 1, 1], [], []>} : vector<16x128xbf16>, vector<128x128xbf16>, vector<16x128xf32> -> vector<16x128xf32>
    %c5_40 = arith.constant 5 : index
    %c0_41 = arith.constant 0 : index
    %c0_42 = arith.constant 0 : index
    %54 = vector.load %arg5[%c5_40, %c0_41, %c0_42] : memref<23x1x128xf32, #tpu.memory_space<vmem>>, vector<1x1x128xf32>
    %55 = vector.shape_cast %54 : vector<1x1x128xf32> to vector<1x128xf32>
    %56 = vector.broadcast %55 : vector<1x128xf32> to vector<16x128xf32>
    %57 = arith.addf %53, %56 : vector<16x128xf32>
    %c0_43 = arith.constant 0 : index
    %c0_44 = arith.constant 0 : index
    %58 = vector.load %arg3[%c0_43, %c0_44] : memref<16x128xf32, #tpu.memory_space<vmem>>, vector<16x128xf32>
    %59 = arith.truncf %58 : vector<16x128xf32> to vector<16x128xbf16>
    %c6 = arith.constant 6 : index
    %c0_45 = arith.constant 0 : index
    %c0_46 = arith.constant 0 : index
    %60 = vector.load %arg4[%c6, %c0_45, %c0_46] : memref<21x128x128xbf16, #tpu.memory_space<vmem>>, vector<1x128x128xbf16>
    %61 = vector.shape_cast %60 : vector<1x128x128xbf16> to vector<128x128xbf16>
    %cst_47 = arith.constant dense<0.000000e+00> : vector<16x128xf32>
    %62 = tpu.matmul %59, %61, %cst_47 {dimension_numbers = #tpu.dot_dimension_numbers<[1], [0], [0], [1], [0, 0, 1, 1], [], []>} : vector<16x128xbf16>, vector<128x128xbf16>, vector<16x128xf32> -> vector<16x128xf32>
    %c6_48 = arith.constant 6 : index
    %c0_49 = arith.constant 0 : index
    %c0_50 = arith.constant 0 : index
    %63 = vector.load %arg5[%c6_48, %c0_49, %c0_50] : memref<23x1x128xf32, #tpu.memory_space<vmem>>, vector<1x1x128xf32>
    %64 = vector.shape_cast %63 : vector<1x1x128xf32> to vector<1x128xf32>
    %65 = vector.broadcast %64 : vector<1x128xf32> to vector<16x128xf32>
    %66 = arith.addf %62, %65 : vector<16x128xf32>
    %cst_51 = arith.constant 0.000000e+00 : f32
    %67 = vector.broadcast %cst_51 : f32 to vector<16x128xf32>
    %68 = arith.maximumf %66, %67 : vector<16x128xf32>
    %69 = arith.truncf %68 : vector<16x128xf32> to vector<16x128xbf16>
    %c7 = arith.constant 7 : index
    %c0_52 = arith.constant 0 : index
    %c0_53 = arith.constant 0 : index
    %70 = vector.load %arg4[%c7, %c0_52, %c0_53] : memref<21x128x128xbf16, #tpu.memory_space<vmem>>, vector<1x128x128xbf16>
    %71 = vector.shape_cast %70 : vector<1x128x128xbf16> to vector<128x128xbf16>
    %cst_54 = arith.constant dense<0.000000e+00> : vector<16x128xf32>
    %72 = tpu.matmul %69, %71, %cst_54 {dimension_numbers = #tpu.dot_dimension_numbers<[1], [0], [0], [1], [0, 0, 1, 1], [], []>} : vector<16x128xbf16>, vector<128x128xbf16>, vector<16x128xf32> -> vector<16x128xf32>
    %c7_55 = arith.constant 7 : index
    %c0_56 = arith.constant 0 : index
    %c0_57 = arith.constant 0 : index
    %73 = vector.load %arg5[%c7_55, %c0_56, %c0_57] : memref<23x1x128xf32, #tpu.memory_space<vmem>>, vector<1x1x128xf32>
    %74 = vector.shape_cast %73 : vector<1x1x128xf32> to vector<1x128xf32>
    %75 = vector.broadcast %74 : vector<1x128xf32> to vector<16x128xf32>
    %76 = arith.addf %72, %75 : vector<16x128xf32>
    %cst_58 = arith.constant 0.000000e+00 : f32
    %77 = vector.broadcast %cst_58 : f32 to vector<16x128xf32>
    %78 = arith.maximumf %76, %77 : vector<16x128xf32>
    %79 = arith.truncf %78 : vector<16x128xf32> to vector<16x128xbf16>
    %c8 = arith.constant 8 : index
    %c0_59 = arith.constant 0 : index
    %c0_60 = arith.constant 0 : index
    %80 = vector.load %arg4[%c8, %c0_59, %c0_60] : memref<21x128x128xbf16, #tpu.memory_space<vmem>>, vector<1x128x128xbf16>
    %81 = vector.shape_cast %80 : vector<1x128x128xbf16> to vector<128x128xbf16>
    %cst_61 = arith.constant dense<0.000000e+00> : vector<16x128xf32>
    %82 = tpu.matmul %79, %81, %cst_61 {dimension_numbers = #tpu.dot_dimension_numbers<[1], [0], [0], [1], [0, 0, 1, 1], [], []>} : vector<16x128xbf16>, vector<128x128xbf16>, vector<16x128xf32> -> vector<16x128xf32>
    %c8_62 = arith.constant 8 : index
    %c0_63 = arith.constant 0 : index
    %c0_64 = arith.constant 0 : index
    %83 = vector.load %arg5[%c8_62, %c0_63, %c0_64] : memref<23x1x128xf32, #tpu.memory_space<vmem>>, vector<1x1x128xf32>
    %84 = vector.shape_cast %83 : vector<1x1x128xf32> to vector<1x128xf32>
    %85 = vector.broadcast %84 : vector<1x128xf32> to vector<16x128xf32>
    %86 = arith.addf %82, %85 : vector<16x128xf32>
    %87 = arith.truncf %28 : vector<16x128xf32> to vector<16x128xbf16>
    %88 = arith.truncf %86 : vector<16x128xf32> to vector<16x128xbf16>
    %89 = tpu.concatenate %87, %88 in 1 : vector<16x128xbf16>, vector<16x128xbf16> -> vector<16x256xbf16>
    %c9 = arith.constant 9 : index
    %c0_65 = arith.constant 0 : index
    %c0_66 = arith.constant 0 : index
    %90 = vector.load %arg4[%c9, %c0_65, %c0_66] : memref<21x128x128xbf16, #tpu.memory_space<vmem>>, vector<1x128x128xbf16>
    %91 = vector.shape_cast %90 : vector<1x128x128xbf16> to vector<128x128xbf16>
    %c10 = arith.constant 10 : index
    %c0_67 = arith.constant 0 : index
    %c0_68 = arith.constant 0 : index
    %92 = vector.load %arg4[%c10, %c0_67, %c0_68] : memref<21x128x128xbf16, #tpu.memory_space<vmem>>, vector<1x128x128xbf16>
    %93 = vector.shape_cast %92 : vector<1x128x128xbf16> to vector<128x128xbf16>
    %94 = tpu.concatenate %91, %93 in 0 : vector<128x128xbf16>, vector<128x128xbf16> -> vector<256x128xbf16>
    %cst_69 = arith.constant dense<0.000000e+00> : vector<16x128xf32>
    %95 = tpu.matmul %89, %94, %cst_69 {dimension_numbers = #tpu.dot_dimension_numbers<[1], [0], [0], [1], [0, 0, 1, 1], [], []>} : vector<16x256xbf16>, vector<256x128xbf16>, vector<16x128xf32> -> vector<16x128xf32>
    %c9_70 = arith.constant 9 : index
    %c0_71 = arith.constant 0 : index
    %c0_72 = arith.constant 0 : index
    %96 = vector.load %arg5[%c9_70, %c0_71, %c0_72] : memref<23x1x128xf32, #tpu.memory_space<vmem>>, vector<1x1x128xf32>
    %97 = vector.shape_cast %96 : vector<1x1x128xf32> to vector<1x128xf32>
    %98 = vector.broadcast %97 : vector<1x128xf32> to vector<16x128xf32>
    %99 = arith.addf %95, %98 : vector<16x128xf32>
    %cst_73 = arith.constant 0.000000e+00 : f32
    %100 = vector.broadcast %cst_73 : f32 to vector<16x128xf32>
    %101 = arith.maximumf %99, %100 : vector<16x128xf32>
    %102 = arith.truncf %101 : vector<16x128xf32> to vector<16x128xbf16>
    %c11 = arith.constant 11 : index
    %c0_74 = arith.constant 0 : index
    %c0_75 = arith.constant 0 : index
    %103 = vector.load %arg4[%c11, %c0_74, %c0_75] : memref<21x128x128xbf16, #tpu.memory_space<vmem>>, vector<1x128x128xbf16>
    %104 = vector.shape_cast %103 : vector<1x128x128xbf16> to vector<128x128xbf16>
    %cst_76 = arith.constant dense<0.000000e+00> : vector<16x128xf32>
    %105 = tpu.matmul %102, %104, %cst_76 {dimension_numbers = #tpu.dot_dimension_numbers<[1], [0], [0], [1], [0, 0, 1, 1], [], []>} : vector<16x128xbf16>, vector<128x128xbf16>, vector<16x128xf32> -> vector<16x128xf32>
    %c10_77 = arith.constant 10 : index
    %c0_78 = arith.constant 0 : index
    %c0_79 = arith.constant 0 : index
    %106 = vector.load %arg5[%c10_77, %c0_78, %c0_79] : memref<23x1x128xf32, #tpu.memory_space<vmem>>, vector<1x1x128xf32>
    %107 = vector.shape_cast %106 : vector<1x1x128xf32> to vector<1x128xf32>
    %108 = vector.broadcast %107 : vector<1x128xf32> to vector<16x128xf32>
    %109 = arith.addf %105, %108 : vector<16x128xf32>
    %cst_80 = arith.constant 0.000000e+00 : f32
    %110 = vector.broadcast %cst_80 : f32 to vector<16x128xf32>
    %111 = arith.maximumf %109, %110 : vector<16x128xf32>
    %112 = arith.truncf %111 : vector<16x128xf32> to vector<16x128xbf16>
    %c12 = arith.constant 12 : index
    %c0_81 = arith.constant 0 : index
    %c0_82 = arith.constant 0 : index
    %113 = vector.load %arg4[%c12, %c0_81, %c0_82] : memref<21x128x128xbf16, #tpu.memory_space<vmem>>, vector<1x128x128xbf16>
    %114 = vector.shape_cast %113 : vector<1x128x128xbf16> to vector<128x128xbf16>
    %cst_83 = arith.constant dense<0.000000e+00> : vector<16x128xf32>
    %115 = tpu.matmul %112, %114, %cst_83 {dimension_numbers = #tpu.dot_dimension_numbers<[1], [0], [0], [1], [0, 0, 1, 1], [], []>} : vector<16x128xbf16>, vector<128x128xbf16>, vector<16x128xf32> -> vector<16x128xf32>
    %c11_84 = arith.constant 11 : index
    %c0_85 = arith.constant 0 : index
    %c0_86 = arith.constant 0 : index
    %116 = vector.load %arg5[%c11_84, %c0_85, %c0_86] : memref<23x1x128xf32, #tpu.memory_space<vmem>>, vector<1x1x128xf32>
    %117 = vector.shape_cast %116 : vector<1x1x128xf32> to vector<1x128xf32>
    %118 = vector.broadcast %117 : vector<1x128xf32> to vector<16x128xf32>
    %119 = arith.addf %115, %118 : vector<16x128xf32>
    %120 = arith.truncf %57 : vector<16x128xf32> to vector<16x128xbf16>
    %121 = arith.truncf %119 : vector<16x128xf32> to vector<16x128xbf16>
    %122 = tpu.concatenate %120, %121 in 1 : vector<16x128xbf16>, vector<16x128xbf16> -> vector<16x256xbf16>
    %c13 = arith.constant 13 : index
    %c0_87 = arith.constant 0 : index
    %c0_88 = arith.constant 0 : index
    %123 = vector.load %arg4[%c13, %c0_87, %c0_88] : memref<21x128x128xbf16, #tpu.memory_space<vmem>>, vector<1x128x128xbf16>
    %124 = vector.shape_cast %123 : vector<1x128x128xbf16> to vector<128x128xbf16>
    %c14 = arith.constant 14 : index
    %c0_89 = arith.constant 0 : index
    %c0_90 = arith.constant 0 : index
    %125 = vector.load %arg4[%c14, %c0_89, %c0_90] : memref<21x128x128xbf16, #tpu.memory_space<vmem>>, vector<1x128x128xbf16>
    %126 = vector.shape_cast %125 : vector<1x128x128xbf16> to vector<128x128xbf16>
    %127 = tpu.concatenate %124, %126 in 0 : vector<128x128xbf16>, vector<128x128xbf16> -> vector<256x128xbf16>
    %cst_91 = arith.constant dense<0.000000e+00> : vector<16x128xf32>
    %128 = tpu.matmul %122, %127, %cst_91 {dimension_numbers = #tpu.dot_dimension_numbers<[1], [0], [0], [1], [0, 0, 1, 1], [], []>} : vector<16x256xbf16>, vector<256x128xbf16>, vector<16x128xf32> -> vector<16x128xf32>
    %c12_92 = arith.constant 12 : index
    %c0_93 = arith.constant 0 : index
    %c0_94 = arith.constant 0 : index
    %129 = vector.load %arg5[%c12_92, %c0_93, %c0_94] : memref<23x1x128xf32, #tpu.memory_space<vmem>>, vector<1x1x128xf32>
    %130 = vector.shape_cast %129 : vector<1x1x128xf32> to vector<1x128xf32>
    %131 = vector.broadcast %130 : vector<1x128xf32> to vector<16x128xf32>
    %132 = arith.addf %128, %131 : vector<16x128xf32>
    %cst_95 = arith.constant 0.000000e+00 : f32
    %133 = vector.broadcast %cst_95 : f32 to vector<16x128xf32>
    %134 = arith.maximumf %132, %133 : vector<16x128xf32>
    %135 = arith.truncf %134 : vector<16x128xf32> to vector<16x128xbf16>
    %c15 = arith.constant 15 : index
    %c0_96 = arith.constant 0 : index
    %c0_97 = arith.constant 0 : index
    %136 = vector.load %arg4[%c15, %c0_96, %c0_97] : memref<21x128x128xbf16, #tpu.memory_space<vmem>>, vector<1x128x128xbf16>
    %137 = vector.shape_cast %136 : vector<1x128x128xbf16> to vector<128x128xbf16>
    %cst_98 = arith.constant dense<0.000000e+00> : vector<16x128xf32>
    %138 = tpu.matmul %135, %137, %cst_98 {dimension_numbers = #tpu.dot_dimension_numbers<[1], [0], [0], [1], [0, 0, 1, 1], [], []>} : vector<16x128xbf16>, vector<128x128xbf16>, vector<16x128xf32> -> vector<16x128xf32>
    %c13_99 = arith.constant 13 : index
    %c0_100 = arith.constant 0 : index
    %c0_101 = arith.constant 0 : index
    %139 = vector.load %arg5[%c13_99, %c0_100, %c0_101] : memref<23x1x128xf32, #tpu.memory_space<vmem>>, vector<1x1x128xf32>
    %140 = vector.shape_cast %139 : vector<1x1x128xf32> to vector<1x128xf32>
    %141 = vector.broadcast %140 : vector<1x128xf32> to vector<16x128xf32>
    %142 = arith.addf %138, %141 : vector<16x128xf32>
    %cst_102 = arith.constant 0.000000e+00 : f32
    %143 = vector.broadcast %cst_102 : f32 to vector<16x128xf32>
    %144 = arith.maximumf %142, %143 : vector<16x128xf32>
    %145 = arith.truncf %144 : vector<16x128xf32> to vector<16x128xbf16>
    %c16 = arith.constant 16 : index
    %c0_103 = arith.constant 0 : index
    %c0_104 = arith.constant 0 : index
    %146 = vector.load %arg4[%c16, %c0_103, %c0_104] : memref<21x128x128xbf16, #tpu.memory_space<vmem>>, vector<1x128x128xbf16>
    %147 = vector.shape_cast %146 : vector<1x128x128xbf16> to vector<128x128xbf16>
    %cst_105 = arith.constant dense<0.000000e+00> : vector<16x128xf32>
    %148 = tpu.matmul %145, %147, %cst_105 {dimension_numbers = #tpu.dot_dimension_numbers<[1], [0], [0], [1], [0, 0, 1, 1], [], []>} : vector<16x128xbf16>, vector<128x128xbf16>, vector<16x128xf32> -> vector<16x128xf32>
    %c14_106 = arith.constant 14 : index
    %c0_107 = arith.constant 0 : index
    %c0_108 = arith.constant 0 : index
    %149 = vector.load %arg5[%c14_106, %c0_107, %c0_108] : memref<23x1x128xf32, #tpu.memory_space<vmem>>, vector<1x1x128xf32>
    %150 = vector.shape_cast %149 : vector<1x1x128xf32> to vector<1x128xf32>
    %151 = vector.broadcast %150 : vector<1x128xf32> to vector<16x128xf32>
    %152 = arith.addf %148, %151 : vector<16x128xf32>
    %c16_109 = arith.constant 16 : index
    %c0_110 = arith.constant 0 : index
    %c0_111 = arith.constant 0 : index
    %153 = vector.load %arg5[%c16_109, %c0_110, %c0_111] : memref<23x1x128xf32, #tpu.memory_space<vmem>>, vector<1x1x128xf32>
    %154 = vector.shape_cast %153 : vector<1x1x128xf32> to vector<1x128xf32>
    %cst_112 = arith.constant 0.000000e+00 : f32
    %155 = vector.broadcast %cst_112 : f32 to vector<16x128xf32>
    %156 = arith.cmpf ogt, %28, %155 : vector<16x128xf32>
    %157 = vector.broadcast %154 : vector<1x128xf32> to vector<16x128xf32>
    %158 = arith.mulf %157, %28 : vector<16x128xf32>
    %159 = arith.select %156, %28, %158 : vector<16x128xi1>, vector<16x128xf32>
    %160 = arith.truncf %159 : vector<16x128xf32> to vector<16x128xbf16>
    %c17 = arith.constant 17 : index
    %c0_113 = arith.constant 0 : index
    %c0_114 = arith.constant 0 : index
    %161 = vector.load %arg4[%c17, %c0_113, %c0_114] : memref<21x128x128xbf16, #tpu.memory_space<vmem>>, vector<1x128x128xbf16>
    %162 = vector.shape_cast %161 : vector<1x128x128xbf16> to vector<128x128xbf16>
    %cst_115 = arith.constant dense<0.000000e+00> : vector<16x128xf32>
    %163 = tpu.matmul %160, %162, %cst_115 {dimension_numbers = #tpu.dot_dimension_numbers<[1], [0], [0], [1], [0, 0, 1, 1], [], []>} : vector<16x128xbf16>, vector<128x128xbf16>, vector<16x128xf32> -> vector<16x128xf32>
    %c15_116 = arith.constant 15 : index
    %c0_117 = arith.constant 0 : index
    %c0_118 = arith.constant 0 : index
    %164 = vector.load %arg5[%c15_116, %c0_117, %c0_118] : memref<23x1x128xf32, #tpu.memory_space<vmem>>, vector<1x1x128xf32>
    %165 = vector.shape_cast %164 : vector<1x1x128xf32> to vector<1x128xf32>
    %166 = vector.broadcast %165 : vector<1x128xf32> to vector<16x128xf32>
    %167 = arith.addf %163, %166 : vector<16x128xf32>
    %cst_119 = arith.constant dense<0xFF800000> : vector<16xf32>
    %168 = vector.multi_reduction <maximumf>, %167, %cst_119 [1] : vector<16x128xf32> to vector<16xf32>
    %169 = vector.shape_cast %168 : vector<16xf32> to vector<16x1xf32>
    %170 = vector.broadcast %169 : vector<16x1xf32> to vector<16x128xf32>
    %171 = arith.subf %167, %170 : vector<16x128xf32>
    %172 = math.exp %171 : vector<16x128xf32>
    %cst_120 = arith.constant dense<0.000000e+00> : vector<16xf32>
    %173 = vector.multi_reduction <add>, %172, %cst_120 [1] : vector<16x128xf32> to vector<16xf32>
    %174 = vector.shape_cast %173 : vector<16xf32> to vector<16x1xf32>
    %175 = math.log %174 : vector<16x1xf32>
    %176 = vector.broadcast %175 : vector<16x1xf32> to vector<16x128xf32>
    %177 = arith.subf %171, %176 : vector<16x128xf32>
    %c0_121 = arith.constant 0 : index
    %c0_122 = arith.constant 0 : index
    %178 = vector.load %arg6[%c0_121, %c0_122] : memref<16x512xf32, #tpu.memory_space<vmem>>, vector<16x128xf32>
    tpu.vector_store %arg6[%c0_121, %c0_122], %177 {strides = array<i32>} : memref<16x512xf32, #tpu.memory_space<vmem>>, vector<16x128xf32>,
    %c18 = arith.constant 18 : index
    %c0_123 = arith.constant 0 : index
    %c0_124 = arith.constant 0 : index
    %179 = vector.load %arg5[%c18, %c0_123, %c0_124] : memref<23x1x128xf32, #tpu.memory_space<vmem>>, vector<1x1x128xf32>
    %180 = vector.shape_cast %179 : vector<1x1x128xf32> to vector<1x128xf32>
    %cst_125 = arith.constant 0.000000e+00 : f32
    %181 = vector.broadcast %cst_125 : f32 to vector<16x128xf32>
    %182 = arith.cmpf ogt, %57, %181 : vector<16x128xf32>
    %183 = vector.broadcast %180 : vector<1x128xf32> to vector<16x128xf32>
    %184 = arith.mulf %183, %57 : vector<16x128xf32>
    %185 = arith.select %182, %57, %184 : vector<16x128xi1>, vector<16x128xf32>
    %186 = arith.truncf %185 : vector<16x128xf32> to vector<16x128xbf16>
    %c18_126 = arith.constant 18 : index
    %c0_127 = arith.constant 0 : index
    %c0_128 = arith.constant 0 : index
    %187 = vector.load %arg4[%c18_126, %c0_127, %c0_128] : memref<21x128x128xbf16, #tpu.memory_space<vmem>>, vector<1x128x128xbf16>
    %188 = vector.shape_cast %187 : vector<1x128x128xbf16> to vector<128x128xbf16>
    %cst_129 = arith.constant dense<0.000000e+00> : vector<16x128xf32>
    %189 = tpu.matmul %186, %188, %cst_129 {dimension_numbers = #tpu.dot_dimension_numbers<[1], [0], [0], [1], [0, 0, 1, 1], [], []>} : vector<16x128xbf16>, vector<128x128xbf16>, vector<16x128xf32> -> vector<16x128xf32>
    %c17_130 = arith.constant 17 : index
    %c0_131 = arith.constant 0 : index
    %c0_132 = arith.constant 0 : index
    %190 = vector.load %arg5[%c17_130, %c0_131, %c0_132] : memref<23x1x128xf32, #tpu.memory_space<vmem>>, vector<1x1x128xf32>
    %191 = vector.shape_cast %190 : vector<1x1x128xf32> to vector<1x128xf32>
    %192 = vector.broadcast %191 : vector<1x128xf32> to vector<16x128xf32>
    %193 = arith.addf %189, %192 : vector<16x128xf32>
    %cst_133 = arith.constant dense<0xFF800000> : vector<16xf32>
    %194 = vector.multi_reduction <maximumf>, %193, %cst_133 [1] : vector<16x128xf32> to vector<16xf32>
    %195 = vector.shape_cast %194 : vector<16xf32> to vector<16x1xf32>
    %196 = vector.broadcast %195 : vector<16x1xf32> to vector<16x128xf32>
    %197 = arith.subf %193, %196 : vector<16x128xf32>
    %198 = math.exp %197 : vector<16x128xf32>
    %cst_134 = arith.constant dense<0.000000e+00> : vector<16xf32>
    %199 = vector.multi_reduction <add>, %198, %cst_134 [1] : vector<16x128xf32> to vector<16xf32>
    %200 = vector.shape_cast %199 : vector<16xf32> to vector<16x1xf32>
    %201 = math.log %200 : vector<16x1xf32>
    %202 = vector.broadcast %201 : vector<16x1xf32> to vector<16x128xf32>
    %203 = arith.subf %197, %202 : vector<16x128xf32>
    %c0_135 = arith.constant 0 : index
    %c128 = arith.constant 128 : index
    %204 = vector.load %arg6[%c0_135, %c128] : memref<16x512xf32, #tpu.memory_space<vmem>>, vector<16x128xf32>
    tpu.vector_store %arg6[%c0_135, %c128], %203 {strides = array<i32>} : memref<16x512xf32, #tpu.memory_space<vmem>>, vector<16x128xf32>,
    %c20 = arith.constant 20 : index
    %c0_136 = arith.constant 0 : index
    %c0_137 = arith.constant 0 : index
    %205 = vector.load %arg5[%c20, %c0_136, %c0_137] : memref<23x1x128xf32, #tpu.memory_space<vmem>>, vector<1x1x128xf32>
    %206 = vector.shape_cast %205 : vector<1x1x128xf32> to vector<1x128xf32>
    %cst_138 = arith.constant 0.000000e+00 : f32
    %207 = vector.broadcast %cst_138 : f32 to vector<16x128xf32>
    %208 = arith.cmpf ogt, %86, %207 : vector<16x128xf32>
    %209 = vector.broadcast %206 : vector<1x128xf32> to vector<16x128xf32>
    %210 = arith.mulf %209, %86 : vector<16x128xf32>
    %211 = arith.select %208, %86, %210 : vector<16x128xi1>, vector<16x128xf32>
    %212 = arith.truncf %211 : vector<16x128xf32> to vector<16x128xbf16>
    %c19 = arith.constant 19 : index
    %c0_139 = arith.constant 0 : index
    %c0_140 = arith.constant 0 : index
    %213 = vector.load %arg4[%c19, %c0_139, %c0_140] : memref<21x128x128xbf16, #tpu.memory_space<vmem>>, vector<1x128x128xbf16>
    %214 = vector.shape_cast %213 : vector<1x128x128xbf16> to vector<128x128xbf16>
    %cst_141 = arith.constant dense<0.000000e+00> : vector<16x128xf32>
    %215 = tpu.matmul %212, %214, %cst_141 {dimension_numbers = #tpu.dot_dimension_numbers<[1], [0], [0], [1], [0, 0, 1, 1], [], []>} : vector<16x128xbf16>, vector<128x128xbf16>, vector<16x128xf32> -> vector<16x128xf32>
    %c19_142 = arith.constant 19 : index
    %c0_143 = arith.constant 0 : index
    %c0_144 = arith.constant 0 : index
    %216 = vector.load %arg5[%c19_142, %c0_143, %c0_144] : memref<23x1x128xf32, #tpu.memory_space<vmem>>, vector<1x1x128xf32>
    %217 = vector.shape_cast %216 : vector<1x1x128xf32> to vector<1x128xf32>
    %218 = vector.broadcast %217 : vector<1x128xf32> to vector<16x128xf32>
    %219 = arith.addf %215, %218 : vector<16x128xf32>
    %cst_145 = arith.constant dense<0xFF800000> : vector<16xf32>
    %220 = vector.multi_reduction <maximumf>, %219, %cst_145 [1] : vector<16x128xf32> to vector<16xf32>
    %221 = vector.shape_cast %220 : vector<16xf32> to vector<16x1xf32>
    %222 = vector.broadcast %221 : vector<16x1xf32> to vector<16x128xf32>
    %223 = arith.subf %219, %222 : vector<16x128xf32>
    %224 = math.exp %223 : vector<16x128xf32>
    %cst_146 = arith.constant dense<0.000000e+00> : vector<16xf32>
    %225 = vector.multi_reduction <add>, %224, %cst_146 [1] : vector<16x128xf32> to vector<16xf32>
    %226 = vector.shape_cast %225 : vector<16xf32> to vector<16x1xf32>
    %227 = math.log %226 : vector<16x1xf32>
    %228 = vector.broadcast %227 : vector<16x1xf32> to vector<16x128xf32>
    %229 = arith.subf %223, %228 : vector<16x128xf32>
    %c0_147 = arith.constant 0 : index
    %c256 = arith.constant 256 : index
    %230 = vector.load %arg6[%c0_147, %c256] : memref<16x512xf32, #tpu.memory_space<vmem>>, vector<16x128xf32>
    tpu.vector_store %arg6[%c0_147, %c256], %229 {strides = array<i32>} : memref<16x512xf32, #tpu.memory_space<vmem>>, vector<16x128xf32>,
    %c22 = arith.constant 22 : index
    %c0_148 = arith.constant 0 : index
    %c0_149 = arith.constant 0 : index
    %231 = vector.load %arg5[%c22, %c0_148, %c0_149] : memref<23x1x128xf32, #tpu.memory_space<vmem>>, vector<1x1x128xf32>
    %232 = vector.shape_cast %231 : vector<1x1x128xf32> to vector<1x128xf32>
    %cst_150 = arith.constant 0.000000e+00 : f32
    %233 = vector.broadcast %cst_150 : f32 to vector<16x128xf32>
    %234 = arith.cmpf ogt, %152, %233 : vector<16x128xf32>
    %235 = vector.broadcast %232 : vector<1x128xf32> to vector<16x128xf32>
    %236 = arith.mulf %235, %152 : vector<16x128xf32>
    %237 = arith.select %234, %152, %236 : vector<16x128xi1>, vector<16x128xf32>
    %238 = arith.truncf %237 : vector<16x128xf32> to vector<16x128xbf16>
    %c20_151 = arith.constant 20 : index
    %c0_152 = arith.constant 0 : index
    %c0_153 = arith.constant 0 : index
    %239 = vector.load %arg4[%c20_151, %c0_152, %c0_153] : memref<21x128x128xbf16, #tpu.memory_space<vmem>>, vector<1x128x128xbf16>
    %240 = vector.shape_cast %239 : vector<1x128x128xbf16> to vector<128x128xbf16>
    %cst_154 = arith.constant dense<0.000000e+00> : vector<16x128xf32>
    %241 = tpu.matmul %238, %240, %cst_154 {dimension_numbers = #tpu.dot_dimension_numbers<[1], [0], [0], [1], [0, 0, 1, 1], [], []>} : vector<16x128xbf16>, vector<128x128xbf16>, vector<16x128xf32> -> vector<16x128xf32>
    %c21 = arith.constant 21 : index
    %c0_155 = arith.constant 0 : index
    %c0_156 = arith.constant 0 : index
    %242 = vector.load %arg5[%c21, %c0_155, %c0_156] : memref<23x1x128xf32, #tpu.memory_space<vmem>>, vector<1x1x128xf32>
    %243 = vector.shape_cast %242 : vector<1x1x128xf32> to vector<1x128xf32>
    %244 = vector.broadcast %243 : vector<1x128xf32> to vector<16x128xf32>
    %245 = arith.addf %241, %244 : vector<16x128xf32>
    %cst_157 = arith.constant dense<0xFF800000> : vector<16xf32>
    %246 = vector.multi_reduction <maximumf>, %245, %cst_157 [1] : vector<16x128xf32> to vector<16xf32>
    %247 = vector.shape_cast %246 : vector<16xf32> to vector<16x1xf32>
    %248 = vector.broadcast %247 : vector<16x1xf32> to vector<16x128xf32>
    %249 = arith.subf %245, %248 : vector<16x128xf32>
    %250 = math.exp %249 : vector<16x128xf32>
    %cst_158 = arith.constant dense<0.000000e+00> : vector<16xf32>
    %251 = vector.multi_reduction <add>, %250, %cst_158 [1] : vector<16x128xf32> to vector<16xf32>
    %252 = vector.shape_cast %251 : vector<16xf32> to vector<16x1xf32>
    %253 = math.log %252 : vector<16x1xf32>
    %254 = vector.broadcast %253 : vector<16x1xf32> to vector<16x128xf32>
    %255 = arith.subf %249, %254 : vector<16x128xf32>
    %c0_159 = arith.constant 0 : index
    %c384 = arith.constant 384 : index
    %256 = vector.load %arg6[%c0_159, %c384] : memref<16x512xf32, #tpu.memory_space<vmem>>, vector<16x128xf32>
    tpu.vector_store %arg6[%c0_159, %c384], %255 {strides = array<i32>} : memref<16x512xf32, #tpu.memory_space<vmem>>, vector<16x128xf32>,
    %c0_160 = arith.constant 0 : index
    %c0_161 = arith.constant 0 : index
    %257 = vector.load %arg7[%c0_160, %c0_161] : memref<16x128xf32, #tpu.memory_space<vmem>>, vector<16x128xf32>
    tpu.vector_store %arg7[%c0_160, %c0_161], %152 {strides = array<i32>} : memref<16x128xf32, #tpu.memory_space<vmem>>, vector<16x128xf32>,
    return
  }
  func.func @transform_0(%arg0: i32) -> (i32, i32) {
    %c0_i32 = arith.constant 0 : i32
    %c0_i32_0 = arith.constant 0 : i32
    return %arg0, %c0_i32 : i32, i32
  }
  func.func @transform_1(%arg0: i32) -> (i32, i32) {
    %c0_i32 = arith.constant 0 : i32
    %c0_i32_0 = arith.constant 0 : i32
    return %arg0, %c0_i32 : i32, i32
  }
  func.func @transform_2(%arg0: i32) -> (i32, i32) {
    %c0_i32 = arith.constant 0 : i32
    %c0_i32_0 = arith.constant 0 : i32
    return %arg0, %c0_i32 : i32, i32
  }
  func.func @transform_3(%arg0: i32) -> (i32, i32, i32) {
    %c0_i32 = arith.constant 0 : i32
    %c0_i32_0 = arith.constant 0 : i32
    %c0_i32_1 = arith.constant 0 : i32
    %c0_i32_2 = arith.constant 0 : i32
    return %c0_i32, %c0_i32_0, %c0_i32_1 : i32, i32, i32
  }
  func.func @transform_4(%arg0: i32) -> (i32, i32, i32) {
    %c0_i32 = arith.constant 0 : i32
    %c0_i32_0 = arith.constant 0 : i32
    %c0_i32_1 = arith.constant 0 : i32
    %c0_i32_2 = arith.constant 0 : i32
    return %c0_i32, %c0_i32_0, %c0_i32_1 : i32, i32, i32
  }
  func.func @transform_5(%arg0: i32) -> (i32, i32) {
    %c0_i32 = arith.constant 0 : i32
    %c0_i32_0 = arith.constant 0 : i32
    return %arg0, %c0_i32 : i32, i32
  }
  func.func @transform_6(%arg0: i32) -> (i32, i32) {
    %c0_i32 = arith.constant 0 : i32
    %c0_i32_0 = arith.constant 0 : i32
    return %arg0, %c0_i32 : i32, i32
  }
}

</mosaic_0001>

<llo_original>
// kernel: tpu_custom_call.1
$region0: #{tpu_custom_call.1}
  #allocation0 [shape = 'u32[]', space=smem, size = 0x4, offset = 0x4, fixed_abs, tag = 'smem constant byte address 0x4 - core index']
  #allocation1 [shape = 'u32[144,128]{1,0:T(1,128)}', space=vmem, size = 0x12000, scoped, tag = 'internal scratch']
  %s0 = inlined_call_operand.hbm [shape: f32[32,128], index: 0, kind: input, shape index: {}]
  %s1 = inlined_call_operand.hbm [shape: f32[32,128], index: 1, kind: input, shape index: {}]
  %s2 = inlined_call_operand.hbm [shape: f32[32,128], index: 2, kind: input, shape index: {}]
  %s3 = inlined_call_operand.hbm [shape: bf16[21,128,128], index: 3, kind: input, shape index: {}]
  %s4 = inlined_call_operand.hbm [shape: f32[23,1,128], index: 4, kind: input, shape index: {}]
  %s5 = inlined_call_operand.hbm [shape: f32[32,512], index: 5, kind: output, shape index: {0}]
  %s6 = inlined_call_operand.hbm [shape: f32[32,128], index: 6, kind: output, shape index: {1}]
  %7 = xla_tuple %s5, %s6
  %s8 = sld [smem:[#allocation0]]
  $region81: #{tpu_custom_call.1} parent=0
    _
  %s10 = ssub.s32 1, %s8
  %s11 = scalar_select 0, %s10, %s8
  $region1: #{tpu_custom_call.1} parent=0
    #allocation2 [shape = 'u8[16384]{0}', space=vmem, size = 0x4000, scoped, tag = 'input window, operand 0']
    #allocation3 [shape = 's32[2]{0}', space=sflag, size = 0x8, scoped, tag = 'scoped memory for tpu_custom_call.1']
    #allocation4 [shape = 's32[2]{0}', space=sflag, size = 0x8, scoped, tag = 'scoped memory for tpu_custom_call.1']
    #allocation5 [shape = 'u8[16384]{0}', space=vmem, size = 0x4000, scoped, tag = 'input window, operand 1']
    #allocation6 [shape = 's32[2]{0}', space=sflag, size = 0x8, scoped, tag = 'scoped memory for tpu_custom_call.1']
    #allocation7 [shape = 'u8[16384]{0}', space=vmem, size = 0x4000, scoped, tag = 'input window, operand 2']
    #allocation8 [shape = 'u8[688128]{0}', space=vmem, size = 0xa8000, scoped, tag = 'input window, operand 3, single buffered']
    #allocation9 [shape = 's32[1]{0}', space=sflag, size = 0x4, scoped, tag = 'scoped memory for tpu_custom_call.1']
    #allocation10 [shape = 'u8[11776]{0}', space=vmem, size = 0x3000, scoped, tag = 'input window, operand 4, single buffered']
    #allocation11 [shape = 'u8[65536]{0}', space=vmem, size = 0x10000, scoped, tag = 'output window, operand 0']
    #allocation12 [shape = 'u8[16384]{0}', space=vmem, size = 0x4000, scoped, tag = 'output window, operand 1']
    #allocation13 [shape = 's32[2]{0}', space=sflag, size = 0x8, scoped, tag = 'scoped memory for tpu_custom_call.1']
    %12 = vsyncpa [#allocation3], 0
    %s13 = scalar_lea.sflag [#allocation3], 1
    %14 = vsyncpa %s13, 0
    %15 = vsyncpa [#allocation6], 0
    %s16 = scalar_lea.sflag [#allocation6], 1
    %17 = vsyncpa %s16, 0
    %18 = vsyncpa [#allocation9], 0
    %19 = vsyncpa [#allocation4], 0
    %s20 = scalar_lea.sflag [#allocation4], 1
    %21 = vsyncpa %s20, 0
    %22 = vsyncpa [#allocation13], 0
    %s23 = scalar_lea.sflag [#allocation13], 1
    %24 = vsyncpa %s23, 0
    loop: start=0, step=1, limit=4
    $region2: #{tpu_custom_call.1} parent=1 // loop_pre_header
      _
    $region3: #{tpu_custom_call.1} parent=1 // loop_header
      %s26 = sphi 0, %s30
      %p27 = scmp.ge.s32.totalorder %s26, 4
      %s36 = sphi 0, %s38
      %s39 = sphi 0, %s36
      %s40 = sphi 0, %s39
      %s56 = sphi 0, %s40
      %s62 = sphi 0, %s64
      %s65 = sphi 0, %s62
      %s66 = sphi 0, %s65
      %s82 = sphi 0, %s66
      %s88 = sphi 0, %s90
      %s91 = sphi 0, %s88
      %s92 = sphi 0, %s91
      %s108 = sphi 0, %s92
      %s112 = sphi 0, %s112
      %s114 = sphi 0, %s112
      %s115 = sphi 0, %s114
      %s129 = sphi 0, %s115
      %s133 = sphi 0, %s133
      %s135 = sphi 0, %s133
      %s136 = sphi 0, %s135
      %s150 = sphi 0, %s136
      %s156 = sphi 0, %s158
      %s159 = sphi 0, %s156
      %s160 = sphi 0, %s159
      %s176 = sphi 0, %s160
      %s182 = sphi 0, %s184
      %s185 = sphi 0, %s182
      %s186 = sphi 0, %s185
      %s202 = sphi 0, %s186
    $region4: #{tpu_custom_call.1} parent=1 // loop_header_branch
      %29 = sbr.rel (%p27) target = $region8
    $region5: #{tpu_custom_call.1} parent=1 // loop_body
      %s31 = ssub.s32 %s26, 1
      %s32 = ssub.s32 %s26, 2
      %s33 = sadd.s32 %s26, 1
      %s34 = ssub.s32 %s26, %s33
      %p35 = scmp.eq.s32.totalorder %s34, 0
      %s37 = sadd.s32 %s36, 1
      %s38 = scalar_select %p35, %s36, %s37
      %p41 = pneg %p35
      %p42 = scmp.eq.s32.totalorder %s26, 1
      %p43 = por %p41, %p42
      %p44 = scmp.ne.s32.totalorder %s36, %s39
      %p45 = scmp.eq.s32.totalorder %s26, 0
      %p46 = por %p44, %p45
      %p47 = scmp.ne.s32.totalorder %s36, %s39
      %p48 = scmp.eq.s32.totalorder %s31, 1
      %p49 = por %p47, %p48
      %p50 = scmp.ne.s32.totalorder %s39, %s40
      %p51 = scmp.eq.s32.totalorder %s31, 0
      %p52 = por %p50, %p51
      %p53 = scmp.ne.s32.totalorder %s39, %s40
      %p54 = scmp.eq.s32.totalorder %s32, 1
      %p55 = por %p53, %p54
      %p57 = scmp.ne.s32.totalorder %s40, %s56
      %p58 = scmp.eq.s32.totalorder %s32, 0
      %p59 = por %p57, %p58
      %s60 = ssub.s32 %s26, %s33
      %p61 = scmp.eq.s32.totalorder %s60, 0
      %s63 = sadd.s32 %s62, 1
      %s64 = scalar_select %p61, %s62, %s63
      %p67 = pneg %p61
      %p68 = scmp.eq.s32.totalorder %s26, 1
      %p69 = por %p67, %p68
      %p70 = scmp.ne.s32.totalorder %s62, %s65
      %p71 = scmp.eq.s32.totalorder %s26, 0
      %p72 = por %p70, %p71
      %p73 = scmp.ne.s32.totalorder %s62, %s65
      %p74 = scmp.eq.s32.totalorder %s31, 1
      %p75 = por %p73, %p74
      %p76 = scmp.ne.s32.totalorder %s65, %s66
      %p77 = scmp.eq.s32.totalorder %s31, 0
      %p78 = por %p76, %p77
      %p79 = scmp.ne.s32.totalorder %s65, %s66
      %p80 = scmp.eq.s32.totalorder %s32, 1
      %p81 = por %p79, %p80
      %p83 = scmp.ne.s32.totalorder %s66, %s82
      %p84 = scmp.eq.s32.totalorder %s32, 0
      %p85 = por %p83, %p84
      %s86 = ssub.s32 %s26, %s33
      %p87 = scmp.eq.s32.totalorder %s86, 0
      %s89 = sadd.s32 %s88, 1
      %s90 = scalar_select %p87, %s88, %s89
      %p93 = pneg %p87
      %p94 = scmp.eq.s32.totalorder %s26, 1
      %p95 = por %p93, %p94
      %p96 = scmp.ne.s32.totalorder %s88, %s91
      %p97 = scmp.eq.s32.totalorder %s26, 0
      %p98 = por %p96, %p97
      %p99 = scmp.ne.s32.totalorder %s88, %s91
      %p100 = scmp.eq.s32.totalorder %s31, 1
      %p101 = por %p99, %p100
      %p102 = scmp.ne.s32.totalorder %s91, %s92
      %p103 = scmp.eq.s32.totalorder %s31, 0
      %p104 = por %p102, %p103
      %p105 = scmp.ne.s32.totalorder %s91, %s92
      %p106 = scmp.eq.s32.totalorder %s32, 1
      %p107 = por %p105, %p106
      %p109 = scmp.ne.s32.totalorder %s92, %s108
      %p110 = scmp.eq.s32.totalorder %s32, 0
      %p111 = por %p109, %p110
      %s113 = sadd.s32 %s112, 1
      %p116 = scmp.eq.s32.totalorder %s26, 1
      %p117 = scmp.ne.s32.totalorder %s112, %s114
      %p118 = scmp.eq.s32.totalorder %s26, 0
      %p119 = por %p117, %p118
      %p120 = scmp.ne.s32.totalorder %s112, %s114
      %p121 = scmp.eq.s32.totalorder %s31, 1
      %p122 = por %p120, %p121
      %p123 = scmp.ne.s32.totalorder %s114, %s115
      %p124 = scmp.eq.s32.totalorder %s31, 0
      %p125 = por %p123, %p124
      %p126 = scmp.ne.s32.totalorder %s114, %s115
      %p127 = scmp.eq.s32.totalorder %s32, 1
      %p128 = por %p126, %p127
      %p130 = scmp.ne.s32.totalorder %s115, %s129
      %p131 = scmp.eq.s32.totalorder %s32, 0
      %p132 = por %p130, %p131
      %s134 = sadd.s32 %s133, 1
      %p137 = scmp.eq.s32.totalorder %s26, 1
      %p138 = scmp.ne.s32.totalorder %s133, %s135
      %p139 = scmp.eq.s32.totalorder %s26, 0
      %p140 = por %p138, %p139
      %p141 = scmp.ne.s32.totalorder %s133, %s135
      %p142 = scmp.eq.s32.totalorder %s31, 1
      %p143 = por %p141, %p142
      %p144 = scmp.ne.s32.totalorder %s135, %s136
      %p145 = scmp.eq.s32.totalorder %s31, 0
      %p146 = por %p144, %p145
      %p147 = scmp.ne.s32.totalorder %s135, %s136
      %p148 = scmp.eq.s32.totalorder %s32, 1
      %p149 = por %p147, %p148
      %p151 = scmp.ne.s32.totalorder %s136, %s150
      %p152 = scmp.eq.s32.totalorder %s32, 0
      %p153 = por %p151, %p152
      %s154 = ssub.s32 %s26, %s33
      %p155 = scmp.eq.s32.totalorder %s154, 0
      %s157 = sadd.s32 %s156, 1
      %s158 = scalar_select %p155, %s156, %s157
      %p161 = pneg %p155
      %p162 = scmp.eq.s32.totalorder %s26, 1
      %p163 = por %p161, %p162
      %p164 = scmp.ne.s32.totalorder %s156, %s159
      %p165 = scmp.eq.s32.totalorder %s26, 0
      %p166 = por %p164, %p165
      %p167 = scmp.ne.s32.totalorder %s156, %s159
      %p168 = scmp.eq.s32.totalorder %s31, 1
      %p169 = por %p167, %p168
      %p170 = scmp.ne.s32.totalorder %s159, %s160
      %p171 = scmp.eq.s32.totalorder %s31, 0
      %p172 = por %p170, %p171
      %p173 = scmp.ne.s32.totalorder %s159, %s160
      %p174 = scmp.eq.s32.totalorder %s32, 1
      %p175 = por %p173, %p174
      %p177 = scmp.ne.s32.totalorder %s160, %s176
      %p178 = scmp.eq.s32.totalorder %s32, 0
      %p179 = por %p177, %p178
      %s180 = ssub.s32 %s26, %s33
      %p181 = scmp.eq.s32.totalorder %s180, 0
      %s183 = sadd.s32 %s182, 1
      %s184 = scalar_select %p181, %s182, %s183
      %p187 = pneg %p181
      %p188 = scmp.eq.s32.totalorder %s26, 1
      %p189 = por %p187, %p188
      %p190 = scmp.ne.s32.totalorder %s182, %s185
      %p191 = scmp.eq.s32.totalorder %s26, 0
      %p192 = por %p190, %p191
      %p193 = scmp.ne.s32.totalorder %s182, %s185
      %p194 = scmp.eq.s32.totalorder %s31, 1
      %p195 = por %p193, %p194
      %p196 = scmp.ne.s32.totalorder %s185, %s186
      %p197 = scmp.eq.s32.totalorder %s31, 0
      %p198 = por %p196, %p197
      %p199 = scmp.ne.s32.totalorder %s185, %s186
      %p200 = scmp.eq.s32.totalorder %s32, 1
      %p201 = por %p199, %p200
      %p203 = scmp.ne.s32.totalorder %s186, %s202
      %p204 = scmp.eq.s32.totalorder %s32, 0
      %p205 = por %p203, %p204
      %p206 = scmp.le.s32.totalorder 1, %s26
      %p207 = scmp.lt.s32.totalorder %s26, 3
      %p208 = pnand %p206, %p207
      %p209 = pneg %p208
      // Predicated region
      $region9: #{tpu_custom_call.1} parent=5 // pred_check
        _
      $region10: #{tpu_custom_call.1} parent=5 // pred_check_branch
        %211 = sbr.rel (%p208) target = $region12
      $region11: #{tpu_custom_call.1} parent=5 // pred_region
        %s212 = ssub.s32 %s26, 1
        // Predicated region
        $region13: #{tpu_custom_call.1} parent=11 // pred_check
          %p213 = pneg %p125
        $region14: #{tpu_custom_call.1} parent=11 // pred_check_branch
          %215 = sbr.rel (%p213) target = $region16
        $region15: #{tpu_custom_call.1} parent=11 // pred_region
          %s217 = ssub.s32 21504, 21504
          %218 = vsyncadd [#allocation9], %s217
          %s219 = sshll.u32 [#allocation8], 4
          %s220 = int_to_ptr.vmem [resolvable:$true] %s219
          %225 = dma.hbm_to_vmem [thread:$0]  %s3, 21504, %s220, [#allocation9], 64, 64, 4
        $region16: #{tpu_custom_call.1} parent=11 // pred_fallthru
          _
        // Predicated region
        $region17: #{tpu_custom_call.1} parent=11 // pred_check
          %p226 = pneg %p146
        $region18: #{tpu_custom_call.1} parent=11 // pred_check_branch
          %228 = sbr.rel (%p226) target = $region20
        $region19: #{tpu_custom_call.1} parent=11 // pred_region
          %s230 = ssub.s32 368, 368
          %231 = vsyncadd [#allocation9], %s230
          %s232 = sshll.u32 [#allocation10], 4
          %s233 = int_to_ptr.vmem [resolvable:$true] %s232
          %238 = dma.hbm_to_vmem [thread:$0]  %s4, 368, %s233, [#allocation9], 16, 16, 1
        $region20: #{tpu_custom_call.1} parent=11 // pred_fallthru
          _
      $region12: #{tpu_custom_call.1} parent=5 // pred_fallthru
        _
      %p239 = scmp.lt.s32.totalorder %s26, 2
      // Predicated region
      $region21: #{tpu_custom_call.1} parent=5 // pred_check
        %p240 = pneg %p239
      $region22: #{tpu_custom_call.1} parent=5 // pred_check_branch
        %242 = sbr.rel (%p240) target = $region24
      $region23: #{tpu_custom_call.1} parent=5 // pred_region
        // Predicated region
        $region25: #{tpu_custom_call.1} parent=23 // pred_check
          %p243 = pneg %p46
        $region26: #{tpu_custom_call.1} parent=23 // pred_check_branch
          %245 = sbr.rel (%p243) target = $region28
        $region27: #{tpu_custom_call.1} parent=23 // pred_region
          %s246 = sand.u32 %s36, 1
          %s247 = scalar_lea.sflag [#allocation3], %s246
          %s248 = sand.u32 %s36, 1
          %s249 = smul.addr %s248, 16
          %s250 = scalar_lea.vmem [#allocation2], %s249
          %s251 = smul.u32 2, %s26
          %s253 = ssub.s32 256, 256
          %254 = vsyncadd %s247, %s253
          %s255 = smul.addr %s251, 128
          %s256 = scalar_lea.hbm %s0, %s255
          %s257 = sshll.u32 %s250, 4
          %s258 = int_to_ptr.vmem [resolvable:$true] %s257
          %263 = dma.hbm_to_vmem [thread:$0]  %s256, 256, %s258, %s247, 128, 128, 8
        $region28: #{tpu_custom_call.1} parent=23 // pred_fallthru
          _
        // Predicated region
        $region29: #{tpu_custom_call.1} parent=23 // pred_check
          %p264 = pneg %p72
        $region30: #{tpu_custom_call.1} parent=23 // pred_check_branch
          %266 = sbr.rel (%p264) target = $region32
        $region31: #{tpu_custom_call.1} parent=23 // pred_region
          %s267 = sand.u32 %s26, 1
          %s268 = scalar_lea.sflag [#allocation6], %s267
          %s269 = sand.u32 %s62, 1
          %s270 = smul.addr %s269, 16
          %s271 = scalar_lea.vmem [#allocation5], %s270
          %s272 = smul.u32 2, %s26
          %s274 = ssub.s32 256, 256
          %275 = vsyncadd %s268, %s274
          %s276 = smul.addr %s272, 128
          %s277 = scalar_lea.hbm %s1, %s276
          %s278 = sshll.u32 %s271, 4
          %s279 = int_to_ptr.vmem [resolvable:$true] %s278
          %284 = dma.hbm_to_vmem [thread:$0]  %s277, 256, %s279, %s268, 128, 128, 8
        $region32: #{tpu_custom_call.1} parent=23 // pred_fallthru
          _
        // Predicated region
        $region33: #{tpu_custom_call.1} parent=23 // pred_check
          %p285 = pneg %p98
        $region34: #{tpu_custom_call.1} parent=23 // pred_check_branch
          %287 = sbr.rel (%p285) target = $region36
        $region35: #{tpu_custom_call.1} parent=23 // pred_region
          %s288 = sand.u32 %s26, 1
          %s289 = scalar_lea.sflag [#allocation6], %s288
          %s290 = sand.u32 %s88, 1
          %s291 = smul.addr %s290, 16
          %s292 = scalar_lea.vmem [#allocation7], %s291
          %s293 = smul.u32 2, %s26
          %s295 = ssub.s32 256, 256
          %296 = vsyncadd %s289, %s295
          %s297 = smul.addr %s293, 128
          %s298 = scalar_lea.hbm %s2, %s297
          %s299 = sshll.u32 %s292, 4
          %s300 = int_to_ptr.vmem [resolvable:$true] %s299
          %305 = dma.hbm_to_vmem [thread:$0]  %s298, 256, %s300, %s289, 128, 128, 8
        $region36: #{tpu_custom_call.1} parent=23 // pred_fallthru
          _
      $region24: #{tpu_custom_call.1} parent=5 // pred_fallthru
        _
      %p306 = scmp.le.s32.totalorder 1, %s26
      %p307 = scmp.lt.s32.totalorder %s26, 3
      %p308 = pnand %p306, %p307
      %p309 = pneg %p308
      // Predicated region
      $region37: #{tpu_custom_call.1} parent=5 // pred_check
        _
      $region38: #{tpu_custom_call.1} parent=5 // pred_check_branch
        %311 = sbr.rel (%p308) target = $region40
      $region39: #{tpu_custom_call.1} parent=5 // pred_region
        %s312 = ssub.s32 %s26, 1
        %s313 = sand.u32 %s39, 1
        %s314 = scalar_lea.sflag [#allocation3], %s313
        %s315 = sand.u32 %s39, 1
        %s316 = smul.addr %s315, 16
        %s317 = scalar_lea.vmem [#allocation2], %s316
        // Predicated region
        $region41: #{tpu_custom_call.1} parent=39 // pred_check
          %p318 = pneg %p52
        $region42: #{tpu_custom_call.1} parent=39 // pred_check_branch
          %320 = sbr.rel (%p318) target = $region44
        $region43: #{tpu_custom_call.1} parent=39 // pred_region
          %321 = dma.done %s314, 256
        $region44: #{tpu_custom_call.1} parent=39 // pred_fallthru
          _
        %s322 = sand.u32 %s31, 1
        %s323 = scalar_lea.sflag [#allocation6], %s322
        %s324 = sand.u32 %s65, 1
        %s325 = smul.addr %s324, 16
        %s326 = scalar_lea.vmem [#allocation5], %s325
        // Predicated region
        $region45: #{tpu_custom_call.1} parent=39 // pred_check
          %p327 = pneg %p78
        $region46: #{tpu_custom_call.1} parent=39 // pred_check_branch
          %329 = sbr.rel (%p327) target = $region48
        $region47: #{tpu_custom_call.1} parent=39 // pred_region
          %330 = dma.done %s323, 256
        $region48: #{tpu_custom_call.1} parent=39 // pred_fallthru
          _
        %s331 = sand.u32 %s31, 1
        %s332 = scalar_lea.sflag [#allocation6], %s331
        %s333 = sand.u32 %s91, 1
        %s334 = smul.addr %s333, 16
        %s335 = scalar_lea.vmem [#allocation7], %s334
        // Predicated region
        $region49: #{tpu_custom_call.1} parent=39 // pred_check
          %p336 = pneg %p104
        $region50: #{tpu_custom_call.1} parent=39 // pred_check_branch
          %338 = sbr.rel (%p336) target = $region52
        $region51: #{tpu_custom_call.1} parent=39 // pred_region
          %339 = dma.done %s332, 256
        $region52: #{tpu_custom_call.1} parent=39 // pred_fallthru
          _
        // Predicated region
        $region53: #{tpu_custom_call.1} parent=39 // pred_check
          %p340 = pneg %p125
        $region54: #{tpu_custom_call.1} parent=39 // pred_check_branch
          %342 = sbr.rel (%p340) target = $region56
        $region55: #{tpu_custom_call.1} parent=39 // pred_region
          %343 = dma.done [#allocation9], 21504
        $region56: #{tpu_custom_call.1} parent=39 // pred_fallthru
          _
        // Predicated region
        $region57: #{tpu_custom_call.1} parent=39 // pred_check
          %p344 = pneg %p146
        $region58: #{tpu_custom_call.1} parent=39 // pred_check_branch
          %346 = sbr.rel (%p344) target = $region60
        $region59: #{tpu_custom_call.1} parent=39 // pred_region
          %347 = dma.done [#allocation9], 368
        $region60: #{tpu_custom_call.1} parent=39 // pred_fallthru
          _
        %s348 = sand.u32 %s39, 1
        %s349 = scalar_lea.sflag [#allocation3], %s348
        %s350 = sand.u32 %s39, 1
        %s351 = smul.addr %s350, 16
        %s352 = scalar_lea.vmem [#allocation2], %s351
        %p353 = pneg %p52
        %p354 = pneg %p49
        %s355 = sand.u32 %s31, 1
        %s356 = scalar_lea.sflag [#allocation6], %s355
        %s357 = sand.u32 %s65, 1
        %s358 = smul.addr %s357, 16
        %s359 = scalar_lea.vmem [#allocation5], %s358
        %p360 = pneg %p78
        %p361 = pneg %p75
        %s362 = sand.u32 %s31, 1
        %s363 = scalar_lea.sflag [#allocation6], %s362
        %s364 = sand.u32 %s91, 1
        %s365 = smul.addr %s364, 16
        %s366 = scalar_lea.vmem [#allocation7], %s365
        %p367 = pneg %p104
        %p368 = pneg %p101
        %p369 = pneg %p125
        %p370 = pneg %p122
        %p371 = pneg %p146
        %p372 = pneg %p143
        %p373 = pneg %p172
        %p374 = pneg %p169
        %s375 = sand.u32 %s159, 1
        %s376 = scalar_lea.sflag [#allocation4], %s375
        %s377 = sand.u32 %s159, 1
        %s378 = smul.addr %s377, 64
        %s379 = scalar_lea.vmem [#allocation11], %s378
        %p380 = pneg %p198
        %p381 = pneg %p195
        %s382 = sand.u32 %s185, 1
        %s383 = scalar_lea.sflag [#allocation13], %s382
        %s384 = sand.u32 %s185, 1
        %s385 = smul.addr %s384, 16
        %s386 = scalar_lea.vmem [#allocation12], %s385
        %s387 = smul.u32 2, %s31
        %s388 = smul.u32 2, %s31
        %s389 = smul.u32 2, %s31
        %s390 = smul.u32 2, %s31
        %s391 = smul.u32 2, %s31
        %v393 = vld [vmem:[%s317] sm:$0xff]
        %v394 = vld [vmem:[%s317 + $0x8] sm:$0xff]
        %v395 = vpack.c.bf16 %v394, %v393
        %v396 = vld [vmem:[#allocation8] sm:$0xf]
        %v397 = vld [vmem:[#allocation8 + $0x4] sm:$0xf]
        %v398 = vld [vmem:[#allocation8 + $0x8] sm:$0xf]
        %v399 = vld [vmem:[#allocation8 + $0xc] sm:$0xf]
        %v400 = vld [vmem:[#allocation8 + $0x10] sm:$0xf]
        %v401 = vld [vmem:[#allocation8 + $0x14] sm:$0xf]
        %v402 = vld [vmem:[#allocation8 + $0x18] sm:$0xf]
        %v403 = vld [vmem:[#allocation8 + $0x1c] sm:$0xf]
        %v404 = vld [vmem:[#allocation8 + $0x20] sm:$0xf]
        %v405 = vld [vmem:[#allocation8 + $0x24] sm:$0xf]
        %v406 = vld [vmem:[#allocation8 + $0x28] sm:$0xf]
        %v407 = vld [vmem:[#allocation8 + $0x2c] sm:$0xf]
        %v408 = vld [vmem:[#allocation8 + $0x30] sm:$0xf]
        %v409 = vld [vmem:[#allocation8 + $0x34] sm:$0xf]
        %v410 = vld [vmem:[#allocation8 + $0x38] sm:$0xf]
        %v411 = vld [vmem:[#allocation8 + $0x3c] sm:$0xf]
        %v412 = vld [vmem:[#allocation10] sm:$0x1]
        %v414 = vlaneseq
        %v415 = vshrl.u32 %v414, 7
        %v416 = vsub.s32 0, %v415
        %v417 = vrot.slane %v412, %v416
        %v435 = vunpack.c.l.b16 %v396
        %v436 = vunpack.c.l.b16 %v397
        %v437 = vunpack.c.l.b16 %v398
        %v438 = vunpack.c.l.b16 %v399
        %v439 = vunpack.c.l.b16 %v400
        %v440 = vunpack.c.l.b16 %v401
        %v441 = vunpack.c.l.b16 %v402
        %v442 = vunpack.c.l.b16 %v403
        %v443 = vunpack.c.l.b16 %v404
        %v444 = vunpack.c.l.b16 %v405
        %v445 = vunpack.c.l.b16 %v406
        %v446 = vunpack.c.l.b16 %v407
        %v447 = vunpack.c.l.b16 %v408
        %v448 = vunpack.c.l.b16 %v409
        %v449 = vunpack.c.l.b16 %v410
        %v450 = vunpack.c.l.b16 %v411
        %v451 = vpack.c.b16 %v436, %v435
        %v452 = vpack.c.b16 %v438, %v437
        %v453 = vpack.c.b16 %v440, %v439
        %v454 = vpack.c.b16 %v442, %v441
        %v455 = vpack.c.b16 %v444, %v443
        %v456 = vpack.c.b16 %v446, %v445
        %v457 = vpack.c.b16 %v448, %v447
        %v458 = vpack.c.b16 %v450, %v449
        %467 = vmatprep.subr.bf16.mxu0 0
        %468 = vmatpush1.bf16.msra.mxu0 %v458
        %469 = vmatprep.subr.bf16.mxu0 0
        %470 = vmatpush1.bf16.msra.mxu0 %v457
        %471 = vmatprep.subr.bf16.mxu0 0
        %472 = vmatpush1.bf16.msra.mxu0 %v456
        %473 = vmatprep.subr.bf16.mxu0 0
        %474 = vmatpush1.bf16.msra.mxu0 %v455
        %475 = vmatprep.subr.bf16.mxu0 0
        %476 = vmatpush1.bf16.msra.mxu0 %v454
        %477 = vmatprep.subr.bf16.mxu0 0
        %478 = vmatpush1.bf16.msra.mxu0 %v453
        %479 = vmatprep.subr.bf16.mxu0 0
        %480 = vmatpush1.bf16.msra.mxu0 %v452
        %481 = vmatprep.subr.bf16.mxu0 0
        %482 = vmatpush1.bf16.msra.mxu0 %v451
        %483 = vmatprep.subr.bf16.mxu0 0
        %484 = vmatpush2.bf16.msra.mxu0 0
        %485 = vmatprep.subr.bf16.mxu0 0
        %486 = vmatpush2.bf16.msra.mxu0 0
        %487 = vmatprep.subr.bf16.mxu0 0
        %488 = vmatpush2.bf16.msra.mxu0 0
        %489 = vmatprep.subr.bf16.mxu0 0
        %490 = vmatpush2.bf16.msra.mxu0 0
        %491 = vmatprep.subr.bf16.mxu0 0
        %492 = vmatpush2.bf16.msra.mxu0 0
        %493 = vmatprep.subr.bf16.mxu0 0
        %494 = vmatpush2.bf16.msra.mxu0 0
        %495 = vmatprep.subr.bf16.mxu0 0
        %496 = vmatpush2.bf16.msra.mxu0 0
        %497 = vmatprep.subr.bf16.mxu0 0
        %498 = vmatpush2.bf16.msra.mxu0 0
        %499 = vmatprep.mubr.bf16.mxu0 0
        %500 = vmatmul.mubr.bf16.gmra.mxu0 %v395
        %v501 = vpop.f32.mrf.mxu0
        %v502 = vadd.f32 %v417, %v501
        %v503 = vpop.f32.mrf.mxu0
        %v504 = vpop.f32.mrf.mxu0
        %v505 = vadd.f32 %v417, %v504
        %v506 = vpop.f32.mrf.mxu0
        %507 = vdwg.mxu0
        %v508 = vmax.f32 %v502, 0.0
        %v509 = vmax.f32 %v505, 0.0
        %v510 = vpack.c.bf16 %v509, %v508
        %s511 = scalar_lea.vmem [#allocation8], 64
        %v512 = vld [vmem:[%s511] sm:$0xf]
        %v513 = vld [vmem:[%s511 + $0x4] sm:$0xf]
        %v514 = vld [vmem:[%s511 + $0x8] sm:$0xf]
        %v515 = vld [vmem:[%s511 + $0xc] sm:$0xf]
        %v516 = vld [vmem:[%s511 + $0x10] sm:$0xf]
        %v517 = vld [vmem:[%s511 + $0x14] sm:$0xf]
        %v518 = vld [vmem:[%s511 + $0x18] sm:$0xf]
        %v519 = vld [vmem:[%s511 + $0x1c] sm:$0xf]
        %v520 = vld [vmem:[%s511 + $0x20] sm:$0xf]
        %v521 = vld [vmem:[%s511 + $0x24] sm:$0xf]
        %v522 = vld [vmem:[%s511 + $0x28] sm:$0xf]
        %v523 = vld [vmem:[%s511 + $0x2c] sm:$0xf]
        %v524 = vld [vmem:[%s511 + $0x30] sm:$0xf]
        %v525 = vld [vmem:[%s511 + $0x34] sm:$0xf]
        %v526 = vld [vmem:[%s511 + $0x38] sm:$0xf]
        %v527 = vld [vmem:[%s511 + $0x3c] sm:$0xf]
        %s528 = scalar_lea.vmem [#allocation10], 1
        %v529 = vld [vmem:[%s528] sm:$0x1]
        %v531 = vlaneseq
        %v532 = vshrl.u32 %v531, 7
        %v533 = vsub.s32 0, %v532
        %v534 = vrot.slane %v529, %v533
        %v552 = vunpack.c.l.b16 %v512
        %v553 = vunpack.c.l.b16 %v513
        %v554 = vunpack.c.l.b16 %v514
        %v555 = vunpack.c.l.b16 %v515
        %v556 = vunpack.c.l.b16 %v516
        %v557 = vunpack.c.l.b16 %v517
        %v558 = vunpack.c.l.b16 %v518
        %v559 = vunpack.c.l.b16 %v519
        %v560 = vunpack.c.l.b16 %v520
        %v561 = vunpack.c.l.b16 %v521
        %v562 = vunpack.c.l.b16 %v522
        %v563 = vunpack.c.l.b16 %v523
        %v564 = vunpack.c.l.b16 %v524
        %v565 = vunpack.c.l.b16 %v525
        %v566 = vunpack.c.l.b16 %v526
        %v567 = vunpack.c.l.b16 %v527
        %v568 = vpack.c.b16 %v553, %v552
        %v569 = vpack.c.b16 %v555, %v554
        %v570 = vpack.c.b16 %v557, %v556
        %v571 = vpack.c.b16 %v559, %v558
        %v572 = vpack.c.b16 %v561, %v560
        %v573 = vpack.c.b16 %v563, %v562
        %v574 = vpack.c.b16 %v565, %v564
        %v575 = vpack.c.b16 %v567, %v566
        %584 = vmatprep.subr.bf16.mxu0 0
        %585 = vmatpush1.bf16.msra.mxu0 %v575
        %586 = vmatprep.subr.bf16.mxu0 0
        %587 = vmatpush1.bf16.msra.mxu0 %v574
        %588 = vmatprep.subr.bf16.mxu0 0
        %589 = vmatpush1.bf16.msra.mxu0 %v573
        %590 = vmatprep.subr.bf16.mxu0 0
        %591 = vmatpush1.bf16.msra.mxu0 %v572
        %592 = vmatprep.subr.bf16.mxu0 0
        %593 = vmatpush1.bf16.msra.mxu0 %v571
        %594 = vmatprep.subr.bf16.mxu0 0
        %595 = vmatpush1.bf16.msra.mxu0 %v570
        %596 = vmatprep.subr.bf16.mxu0 0
        %597 = vmatpush1.bf16.msra.mxu0 %v569
        %598 = vmatprep.subr.bf16.mxu0 0
        %599 = vmatpush1.bf16.msra.mxu0 %v568
        %600 = vmatprep.subr.bf16.mxu0 0
        %601 = vmatpush2.bf16.msra.mxu0 0
        %602 = vmatprep.subr.bf16.mxu0 0
        %603 = vmatpush2.bf16.msra.mxu0 0
        %604 = vmatprep.subr.bf16.mxu0 0
        %605 = vmatpush2.bf16.msra.mxu0 0
        %606 = vmatprep.subr.bf16.mxu0 0
        %607 = vmatpush2.bf16.msra.mxu0 0
        %608 = vmatprep.subr.bf16.mxu0 0
        %609 = vmatpush2.bf16.msra.mxu0 0
        %610 = vmatprep.subr.bf16.mxu0 0
        %611 = vmatpush2.bf16.msra.mxu0 0
        %612 = vmatprep.subr.bf16.mxu0 0
        %613 = vmatpush2.bf16.msra.mxu0 0
        %614 = vmatprep.subr.bf16.mxu0 0
        %615 = vmatpush2.bf16.msra.mxu0 0
        %616 = vmatprep.mubr.bf16.mxu0 0
        %617 = vmatmul.mubr.bf16.gmra.mxu0 %v510
        %v618 = vpop.f32.mrf.mxu0
        %v619 = vadd.f32 %v534, %v618
        %v620 = vpop.f32.mrf.mxu0
        %v621 = vpop.f32.mrf.mxu0
        %v622 = vadd.f32 %v534, %v621
        %v623 = vpop.f32.mrf.mxu0
        %624 = vdwg.mxu0
        %v625 = vmax.f32 %v619, 0.0
        %v626 = vmax.f32 %v622, 0.0
        %v627 = vpack.c.bf16 %v626, %v625
        %s628 = scalar_lea.vmem [#allocation8], 128
        %v629 = vld [vmem:[%s628] sm:$0xf]
        %v630 = vld [vmem:[%s628 + $0x4] sm:$0xf]
        %v631 = vld [vmem:[%s628 + $0x8] sm:$0xf]
        %v632 = vld [vmem:[%s628 + $0xc] sm:$0xf]
        %v633 = vld [vmem:[%s628 + $0x10] sm:$0xf]
        %v634 = vld [vmem:[%s628 + $0x14] sm:$0xf]
        %v635 = vld [vmem:[%s628 + $0x18] sm:$0xf]
        %v636 = vld [vmem:[%s628 + $0x1c] sm:$0xf]
        %v637 = vld [vmem:[%s628 + $0x20] sm:$0xf]
        %v638 = vld [vmem:[%s628 + $0x24] sm:$0xf]
        %v639 = vld [vmem:[%s628 + $0x28] sm:$0xf]
        %v640 = vld [vmem:[%s628 + $0x2c] sm:$0xf]
        %v641 = vld [vmem:[%s628 + $0x30] sm:$0xf]
        %v642 = vld [vmem:[%s628 + $0x34] sm:$0xf]
        %v643 = vld [vmem:[%s628 + $0x38] sm:$0xf]
        %v644 = vld [vmem:[%s628 + $0x3c] sm:$0xf]
        %s645 = scalar_lea.vmem [#allocation10], 2
        %v646 = vld [vmem:[%s645] sm:$0x1]
        %v648 = vlaneseq
        %v649 = vshrl.u32 %v648, 7
        %v650 = vsub.s32 0, %v649
        %v651 = vrot.slane %v646, %v650
        %v669 = vunpack.c.l.b16 %v629
        %v670 = vunpack.c.l.b16 %v630
        %v671 = vunpack.c.l.b16 %v631
        %v672 = vunpack.c.l.b16 %v632
        %v673 = vunpack.c.l.b16 %v633
        %v674 = vunpack.c.l.b16 %v634
        %v675 = vunpack.c.l.b16 %v635
        %v676 = vunpack.c.l.b16 %v636
        %v677 = vunpack.c.l.b16 %v637
        %v678 = vunpack.c.l.b16 %v638
        %v679 = vunpack.c.l.b16 %v639
        %v680 = vunpack.c.l.b16 %v640
        %v681 = vunpack.c.l.b16 %v641
        %v682 = vunpack.c.l.b16 %v642
        %v683 = vunpack.c.l.b16 %v643
        %v684 = vunpack.c.l.b16 %v644
        %v685 = vpack.c.b16 %v670, %v669
        %v686 = vpack.c.b16 %v672, %v671
        %v687 = vpack.c.b16 %v674, %v673
        %v688 = vpack.c.b16 %v676, %v675
        %v689 = vpack.c.b16 %v678, %v677
        %v690 = vpack.c.b16 %v680, %v679
        %v691 = vpack.c.b16 %v682, %v681
        %v692 = vpack.c.b16 %v684, %v683
        %701 = vmatprep.subr.bf16.mxu0 0
        %702 = vmatpush1.bf16.msra.mxu0 %v692
        %703 = vmatprep.subr.bf16.mxu0 0
        %704 = vmatpush1.bf16.msra.mxu0 %v691
        %705 = vmatprep.subr.bf16.mxu0 0
        %706 = vmatpush1.bf16.msra.mxu0 %v690
        %707 = vmatprep.subr.bf16.mxu0 0
        %708 = vmatpush1.bf16.msra.mxu0 %v689
        %709 = vmatprep.subr.bf16.mxu0 0
        %710 = vmatpush1.bf16.msra.mxu0 %v688
        %711 = vmatprep.subr.bf16.mxu0 0
        %712 = vmatpush1.bf16.msra.mxu0 %v687
        %713 = vmatprep.subr.bf16.mxu0 0
        %714 = vmatpush1.bf16.msra.mxu0 %v686
        %715 = vmatprep.subr.bf16.mxu0 0
        %716 = vmatpush1.bf16.msra.mxu0 %v685
        %717 = vmatprep.subr.bf16.mxu0 0
        %718 = vmatpush2.bf16.msra.mxu0 0
        %719 = vmatprep.subr.bf16.mxu0 0
        %720 = vmatpush2.bf16.msra.mxu0 0
        %721 = vmatprep.subr.bf16.mxu0 0
        %722 = vmatpush2.bf16.msra.mxu0 0
        %723 = vmatprep.subr.bf16.mxu0 0
        %724 = vmatpush2.bf16.msra.mxu0 0
        %725 = vmatprep.subr.bf16.mxu0 0
        %726 = vmatpush2.bf16.msra.mxu0 0
        %727 = vmatprep.subr.bf16.mxu0 0
        %728 = vmatpush2.bf16.msra.mxu0 0
        %729 = vmatprep.subr.bf16.mxu0 0
        %730 = vmatpush2.bf16.msra.mxu0 0
        %731 = vmatprep.subr.bf16.mxu0 0
        %732 = vmatpush2.bf16.msra.mxu0 0
        %733 = vmatprep.mubr.bf16.mxu0 0
        %734 = vmatmul.mubr.bf16.gmra.mxu0 %v627
        %v735 = vpop.f32.mrf.mxu0
        %v736 = vadd.f32 %v651, %v735
        %v737 = vpop.f32.mrf.mxu0
        %v738 = vpop.f32.mrf.mxu0
        %v739 = vadd.f32 %v651, %v738
        %v740 = vpop.f32.mrf.mxu0
        %741 = vdwg.mxu0
        %v742 = vld [vmem:[%s326] sm:$0xff]
        %v743 = vld [vmem:[%s326 + $0x8] sm:$0xff]
        %v744 = vpack.c.bf16 %v743, %v742
        %s745 = scalar_lea.vmem [#allocation8], 192
        %v746 = vld [vmem:[%s745] sm:$0xf]
        %v747 = vld [vmem:[%s745 + $0x4] sm:$0xf]
        %v748 = vld [vmem:[%s745 + $0x8] sm:$0xf]
        %v749 = vld [vmem:[%s745 + $0xc] sm:$0xf]
        %v750 = vld [vmem:[%s745 + $0x10] sm:$0xf]
        %v751 = vld [vmem:[%s745 + $0x14] sm:$0xf]
        %v752 = vld [vmem:[%s745 + $0x18] sm:$0xf]
        %v753 = vld [vmem:[%s745 + $0x1c] sm:$0xf]
        %v754 = vld [vmem:[%s745 + $0x20] sm:$0xf]
        %v755 = vld [vmem:[%s745 + $0x24] sm:$0xf]
        %v756 = vld [vmem:[%s745 + $0x28] sm:$0xf]
        %v757 = vld [vmem:[%s745 + $0x2c] sm:$0xf]
        %v758 = vld [vmem:[%s745 + $0x30] sm:$0xf]
        %v759 = vld [vmem:[%s745 + $0x34] sm:$0xf]
        %v760 = vld [vmem:[%s745 + $0x38] sm:$0xf]
        %v761 = vld [vmem:[%s745 + $0x3c] sm:$0xf]
        %s762 = scalar_lea.vmem [#allocation10], 3
        %v763 = vld [vmem:[%s762] sm:$0x1]
        %v765 = vlaneseq
        %v766 = vshrl.u32 %v765, 7
        %v767 = vsub.s32 0, %v766
        %v768 = vrot.slane %v763, %v767
        %v786 = vunpack.c.l.b16 %v746
        %v787 = vunpack.c.l.b16 %v747
        %v788 = vunpack.c.l.b16 %v748
        %v789 = vunpack.c.l.b16 %v749
        %v790 = vunpack.c.l.b16 %v750
        %v791 = vunpack.c.l.b16 %v751
        %v792 = vunpack.c.l.b16 %v752
        %v793 = vunpack.c.l.b16 %v753
        %v794 = vunpack.c.l.b16 %v754
        %v795 = vunpack.c.l.b16 %v755
        %v796 = vunpack.c.l.b16 %v756
        %v797 = vunpack.c.l.b16 %v757
        %v798 = vunpack.c.l.b16 %v758
        %v799 = vunpack.c.l.b16 %v759
        %v800 = vunpack.c.l.b16 %v760
        %v801 = vunpack.c.l.b16 %v761
        %v802 = vpack.c.b16 %v787, %v786
        %v803 = vpack.c.b16 %v789, %v788
        %v804 = vpack.c.b16 %v791, %v790
        %v805 = vpack.c.b16 %v793, %v792
        %v806 = vpack.c.b16 %v795, %v794
        %v807 = vpack.c.b16 %v797, %v796
        %v808 = vpack.c.b16 %v799, %v798
        %v809 = vpack.c.b16 %v801, %v800
        %818 = vmatprep.subr.bf16.mxu0 0
        %819 = vmatpush1.bf16.msra.mxu0 %v809
        %820 = vmatprep.subr.bf16.mxu0 0
        %821 = vmatpush1.bf16.msra.mxu0 %v808
        %822 = vmatprep.subr.bf16.mxu0 0
        %823 = vmatpush1.bf16.msra.mxu0 %v807
        %824 = vmatprep.subr.bf16.mxu0 0
        %825 = vmatpush1.bf16.msra.mxu0 %v806
        %826 = vmatprep.subr.bf16.mxu0 0
        %827 = vmatpush1.bf16.msra.mxu0 %v805
        %828 = vmatprep.subr.bf16.mxu0 0
        %829 = vmatpush1.bf16.msra.mxu0 %v804
        %830 = vmatprep.subr.bf16.mxu0 0
        %831 = vmatpush1.bf16.msra.mxu0 %v803
        %832 = vmatprep.subr.bf16.mxu0 0
        %833 = vmatpush1.bf16.msra.mxu0 %v802
        %834 = vmatprep.subr.bf16.mxu0 0
        %835 = vmatpush2.bf16.msra.mxu0 0
        %836 = vmatprep.subr.bf16.mxu0 0
        %837 = vmatpush2.bf16.msra.mxu0 0
        %838 = vmatprep.subr.bf16.mxu0 0
        %839 = vmatpush2.bf16.msra.mxu0 0
        %840 = vmatprep.subr.bf16.mxu0 0
        %841 = vmatpush2.bf16.msra.mxu0 0
        %842 = vmatprep.subr.bf16.mxu0 0
        %843 = vmatpush2.bf16.msra.mxu0 0
        %844 = vmatprep.subr.bf16.mxu0 0
        %845 = vmatpush2.bf16.msra.mxu0 0
        %846 = vmatprep.subr.bf16.mxu0 0
        %847 = vmatpush2.bf16.msra.mxu0 0
        %848 = vmatprep.subr.bf16.mxu0 0
        %849 = vmatpush2.bf16.msra.mxu0 0
        %850 = vmatprep.mubr.bf16.mxu0 0
        %851 = vmatmul.mubr.bf16.gmra.mxu0 %v744
        %v852 = vpop.f32.mrf.mxu0
        %v853 = vadd.f32 %v768, %v852
        %v854 = vpop.f32.mrf.mxu0
        %v855 = vpop.f32.mrf.mxu0
        %v856 = vadd.f32 %v768, %v855
        %v857 = vpop.f32.mrf.mxu0
        %858 = vdwg.mxu0
        %v859 = vmax.f32 %v853, 0.0
        %v860 = vmax.f32 %v856, 0.0
        %v861 = vpack.c.bf16 %v860, %v859
        %s862 = scalar_lea.vmem [#allocation8], 256
        %v863 = vld [vmem:[%s862] sm:$0xf]
        %v864 = vld [vmem:[%s862 + $0x4] sm:$0xf]
        %v865 = vld [vmem:[%s862 + $0x8] sm:$0xf]
        %v866 = vld [vmem:[%s862 + $0xc] sm:$0xf]
        %v867 = vld [vmem:[%s862 + $0x10] sm:$0xf]
        %v868 = vld [vmem:[%s862 + $0x14] sm:$0xf]
        %v869 = vld [vmem:[%s862 + $0x18] sm:$0xf]
        %v870 = vld [vmem:[%s862 + $0x1c] sm:$0xf]
        %v871 = vld [vmem:[%s862 + $0x20] sm:$0xf]
        %v872 = vld [vmem:[%s862 + $0x24] sm:$0xf]
        %v873 = vld [vmem:[%s862 + $0x28] sm:$0xf]
        %v874 = vld [vmem:[%s862 + $0x2c] sm:$0xf]
        %v875 = vld [vmem:[%s862 + $0x30] sm:$0xf]
        %v876 = vld [vmem:[%s862 + $0x34] sm:$0xf]
        %v877 = vld [vmem:[%s862 + $0x38] sm:$0xf]
        %v878 = vld [vmem:[%s862 + $0x3c] sm:$0xf]
        %s879 = scalar_lea.vmem [#allocation10], 4
        %v880 = vld [vmem:[%s879] sm:$0x1]
        %v882 = vlaneseq
        %v883 = vshrl.u32 %v882, 7
        %v884 = vsub.s32 0, %v883
        %v885 = vrot.slane %v880, %v884
        %v903 = vunpack.c.l.b16 %v863
        %v904 = vunpack.c.l.b16 %v864
        %v905 = vunpack.c.l.b16 %v865
        %v906 = vunpack.c.l.b16 %v866
        %v907 = vunpack.c.l.b16 %v867
        %v908 = vunpack.c.l.b16 %v868
        %v909 = vunpack.c.l.b16 %v869
        %v910 = vunpack.c.l.b16 %v870
        %v911 = vunpack.c.l.b16 %v871
        %v912 = vunpack.c.l.b16 %v872
        %v913 = vunpack.c.l.b16 %v873
        %v914 = vunpack.c.l.b16 %v874
        %v915 = vunpack.c.l.b16 %v875
        %v916 = vunpack.c.l.b16 %v876
        %v917 = vunpack.c.l.b16 %v877
        %v918 = vunpack.c.l.b16 %v878
        %v919 = vpack.c.b16 %v904, %v903
        %v920 = vpack.c.b16 %v906, %v905
        %v921 = vpack.c.b16 %v908, %v907
        %v922 = vpack.c.b16 %v910, %v909
        %v923 = vpack.c.b16 %v912, %v911
        %v924 = vpack.c.b16 %v914, %v913
        %v925 = vpack.c.b16 %v916, %v915
        %v926 = vpack.c.b16 %v918, %v917
        %935 = vmatprep.subr.bf16.mxu0 0
        %936 = vmatpush1.bf16.msra.mxu0 %v926
        %937 = vmatprep.subr.bf16.mxu0 0
        %938 = vmatpush1.bf16.msra.mxu0 %v925
        %939 = vmatprep.subr.bf16.mxu0 0
        %940 = vmatpush1.bf16.msra.mxu0 %v924
        %941 = vmatprep.subr.bf16.mxu0 0
        %942 = vmatpush1.bf16.msra.mxu0 %v923
        %943 = vmatprep.subr.bf16.mxu0 0
        %944 = vmatpush1.bf16.msra.mxu0 %v922
        %945 = vmatprep.subr.bf16.mxu0 0
        %946 = vmatpush1.bf16.msra.mxu0 %v921
        %947 = vmatprep.subr.bf16.mxu0 0
        %948 = vmatpush1.bf16.msra.mxu0 %v920
        %949 = vmatprep.subr.bf16.mxu0 0
        %950 = vmatpush1.bf16.msra.mxu0 %v919
        %951 = vmatprep.subr.bf16.mxu0 0
        %952 = vmatpush2.bf16.msra.mxu0 0
        %953 = vmatprep.subr.bf16.mxu0 0
        %954 = vmatpush2.bf16.msra.mxu0 0
        %955 = vmatprep.subr.bf16.mxu0 0
        %956 = vmatpush2.bf16.msra.mxu0 0
        %957 = vmatprep.subr.bf16.mxu0 0
        %958 = vmatpush2.bf16.msra.mxu0 0
        %959 = vmatprep.subr.bf16.mxu0 0
        %960 = vmatpush2.bf16.msra.mxu0 0
        %961 = vmatprep.subr.bf16.mxu0 0
        %962 = vmatpush2.bf16.msra.mxu0 0
        %963 = vmatprep.subr.bf16.mxu0 0
        %964 = vmatpush2.bf16.msra.mxu0 0
        %965 = vmatprep.subr.bf16.mxu0 0
        %966 = vmatpush2.bf16.msra.mxu0 0
        %967 = vmatprep.mubr.bf16.mxu0 0
        %968 = vmatmul.mubr.bf16.gmra.mxu0 %v861
        %v969 = vpop.f32.mrf.mxu0
        %v970 = vadd.f32 %v885, %v969
        %v971 = vpop.f32.mrf.mxu0
        %v972 = vpop.f32.mrf.mxu0
        %v973 = vadd.f32 %v885, %v972
        %v974 = vpop.f32.mrf.mxu0
        %975 = vdwg.mxu0
        %v976 = vmax.f32 %v970, 0.0
        %v977 = vmax.f32 %v973, 0.0
        %v978 = vpack.c.bf16 %v977, %v976
        %s979 = scalar_lea.vmem [#allocation8], 320
        %v980 = vld [vmem:[%s979] sm:$0xf]
        %v981 = vld [vmem:[%s979 + $0x4] sm:$0xf]
        %v982 = vld [vmem:[%s979 + $0x8] sm:$0xf]
        %v983 = vld [vmem:[%s979 + $0xc] sm:$0xf]
        %v984 = vld [vmem:[%s979 + $0x10] sm:$0xf]
        %v985 = vld [vmem:[%s979 + $0x14] sm:$0xf]
        %v986 = vld [vmem:[%s979 + $0x18] sm:$0xf]
        %v987 = vld [vmem:[%s979 + $0x1c] sm:$0xf]
        %v988 = vld [vmem:[%s979 + $0x20] sm:$0xf]
        %v989 = vld [vmem:[%s979 + $0x24] sm:$0xf]
        %v990 = vld [vmem:[%s979 + $0x28] sm:$0xf]
        %v991 = vld [vmem:[%s979 + $0x2c] sm:$0xf]
        %v992 = vld [vmem:[%s979 + $0x30] sm:$0xf]
        %v993 = vld [vmem:[%s979 + $0x34] sm:$0xf]
        %v994 = vld [vmem:[%s979 + $0x38] sm:$0xf]
        %v995 = vld [vmem:[%s979 + $0x3c] sm:$0xf]
        %s996 = scalar_lea.vmem [#allocation10], 5
        %v997 = vld [vmem:[%s996] sm:$0x1]
        %v999 = vlaneseq
        %v1000 = vshrl.u32 %v999, 7
        %v1001 = vsub.s32 0, %v1000
        %v1002 = vrot.slane %v997, %v1001
        %v1020 = vunpack.c.l.b16 %v980
        %v1021 = vunpack.c.l.b16 %v981
        %v1022 = vunpack.c.l.b16 %v982
        %v1023 = vunpack.c.l.b16 %v983
        %v1024 = vunpack.c.l.b16 %v984
        %v1025 = vunpack.c.l.b16 %v985
        %v1026 = vunpack.c.l.b16 %v986
        %v1027 = vunpack.c.l.b16 %v987
        %v1028 = vunpack.c.l.b16 %v988
        %v1029 = vunpack.c.l.b16 %v989
        %v1030 = vunpack.c.l.b16 %v990
        %v1031 = vunpack.c.l.b16 %v991
        %v1032 = vunpack.c.l.b16 %v992
        %v1033 = vunpack.c.l.b16 %v993
        %v1034 = vunpack.c.l.b16 %v994
        %v1035 = vunpack.c.l.b16 %v995
        %v1036 = vpack.c.b16 %v1021, %v1020
        %v1037 = vpack.c.b16 %v1023, %v1022
        %v1038 = vpack.c.b16 %v1025, %v1024
        %v1039 = vpack.c.b16 %v1027, %v1026
        %v1040 = vpack.c.b16 %v1029, %v1028
        %v1041 = vpack.c.b16 %v1031, %v1030
        %v1042 = vpack.c.b16 %v1033, %v1032
        %v1043 = vpack.c.b16 %v1035, %v1034
        %1052 = vmatprep.subr.bf16.mxu0 0
        %1053 = vmatpush1.bf16.msra.mxu0 %v1043
        %1054 = vmatprep.subr.bf16.mxu0 0
        %1055 = vmatpush1.bf16.msra.mxu0 %v1042
        %1056 = vmatprep.subr.bf16.mxu0 0
        %1057 = vmatpush1.bf16.msra.mxu0 %v1041
        %1058 = vmatprep.subr.bf16.mxu0 0
        %1059 = vmatpush1.bf16.msra.mxu0 %v1040
        %1060 = vmatprep.subr.bf16.mxu0 0
        %1061 = vmatpush1.bf16.msra.mxu0 %v1039
        %1062 = vmatprep.subr.bf16.mxu0 0
        %1063 = vmatpush1.bf16.msra.mxu0 %v1038
        %1064 = vmatprep.subr.bf16.mxu0 0
        %1065 = vmatpush1.bf16.msra.mxu0 %v1037
        %1066 = vmatprep.subr.bf16.mxu0 0
        %1067 = vmatpush1.bf16.msra.mxu0 %v1036
        %1068 = vmatprep.subr.bf16.mxu0 0
        %1069 = vmatpush2.bf16.msra.mxu0 0
        %1070 = vmatprep.subr.bf16.mxu0 0
        %1071 = vmatpush2.bf16.msra.mxu0 0
        %1072 = vmatprep.subr.bf16.mxu0 0
        %1073 = vmatpush2.bf16.msra.mxu0 0
        %1074 = vmatprep.subr.bf16.mxu0 0
        %1075 = vmatpush2.bf16.msra.mxu0 0
        %1076 = vmatprep.subr.bf16.mxu0 0
        %1077 = vmatpush2.bf16.msra.mxu0 0
        %1078 = vmatprep.subr.bf16.mxu0 0
        %1079 = vmatpush2.bf16.msra.mxu0 0
        %1080 = vmatprep.subr.bf16.mxu0 0
        %1081 = vmatpush2.bf16.msra.mxu0 0
        %1082 = vmatprep.subr.bf16.mxu0 0
        %1083 = vmatpush2.bf16.msra.mxu0 0
        %1084 = vmatprep.mubr.bf16.mxu0 0
        %1085 = vmatmul.mubr.bf16.gmra.mxu0 %v978
        %v1086 = vpop.f32.mrf.mxu0
        %v1087 = vadd.f32 %v1002, %v1086
        %v1088 = vpop.f32.mrf.mxu0
        %v1089 = vpop.f32.mrf.mxu0
        %v1090 = vadd.f32 %v1002, %v1089
        %v1091 = vpop.f32.mrf.mxu0
        %1092 = vdwg.mxu0
        %v1093 = vld [vmem:[%s335] sm:$0xff]
        %v1094 = vld [vmem:[%s335 + $0x8] sm:$0xff]
        %v1095 = vpack.c.bf16 %v1094, %v1093
        %s1096 = scalar_lea.vmem [#allocation8], 384
        %v1097 = vld [vmem:[%s1096] sm:$0xf]
        %v1098 = vld [vmem:[%s1096 + $0x4] sm:$0xf]
        %v1099 = vld [vmem:[%s1096 + $0x8] sm:$0xf]
        %v1100 = vld [vmem:[%s1096 + $0xc] sm:$0xf]
        %v1101 = vld [vmem:[%s1096 + $0x10] sm:$0xf]
        %v1102 = vld [vmem:[%s1096 + $0x14] sm:$0xf]
        %v1103 = vld [vmem:[%s1096 + $0x18] sm:$0xf]
        %v1104 = vld [vmem:[%s1096 + $0x1c] sm:$0xf]
        %v1105 = vld [vmem:[%s1096 + $0x20] sm:$0xf]
        %v1106 = vld [vmem:[%s1096 + $0x24] sm:$0xf]
        %v1107 = vld [vmem:[%s1096 + $0x28] sm:$0xf]
        %v1108 = vld [vmem:[%s1096 + $0x2c] sm:$0xf]
        %v1109 = vld [vmem:[%s1096 + $0x30] sm:$0xf]
        %v1110 = vld [vmem:[%s1096 + $0x34] sm:$0xf]
        %v1111 = vld [vmem:[%s1096 + $0x38] sm:$0xf]
        %v1112 = vld [vmem:[%s1096 + $0x3c] sm:$0xf]
        %s1113 = scalar_lea.vmem [#allocation10], 6
        %v1114 = vld [vmem:[%s1113] sm:$0x1]
        %v1116 = vlaneseq
        %v1117 = vshrl.u32 %v1116, 7
        %v1118 = vsub.s32 0, %v1117
        %v1119 = vrot.slane %v1114, %v1118
        %v1137 = vunpack.c.l.b16 %v1097
        %v1138 = vunpack.c.l.b16 %v1098
        %v1139 = vunpack.c.l.b16 %v1099
        %v1140 = vunpack.c.l.b16 %v1100
        %v1141 = vunpack.c.l.b16 %v1101
        %v1142 = vunpack.c.l.b16 %v1102
        %v1143 = vunpack.c.l.b16 %v1103
        %v1144 = vunpack.c.l.b16 %v1104
        %v1145 = vunpack.c.l.b16 %v1105
        %v1146 = vunpack.c.l.b16 %v1106
        %v1147 = vunpack.c.l.b16 %v1107
        %v1148 = vunpack.c.l.b16 %v1108
        %v1149 = vunpack.c.l.b16 %v1109
        %v1150 = vunpack.c.l.b16 %v1110
        %v1151 = vunpack.c.l.b16 %v1111
        %v1152 = vunpack.c.l.b16 %v1112
        %v1153 = vpack.c.b16 %v1138, %v1137
        %v1154 = vpack.c.b16 %v1140, %v1139
        %v1155 = vpack.c.b16 %v1142, %v1141
        %v1156 = vpack.c.b16 %v1144, %v1143
        %v1157 = vpack.c.b16 %v1146, %v1145
        %v1158 = vpack.c.b16 %v1148, %v1147
        %v1159 = vpack.c.b16 %v1150, %v1149
        %v1160 = vpack.c.b16 %v1152, %v1151
        %1169 = vmatprep.subr.bf16.mxu0 0
        %1170 = vmatpush1.bf16.msra.mxu0 %v1160
        %1171 = vmatprep.subr.bf16.mxu0 0
        %1172 = vmatpush1.bf16.msra.mxu0 %v1159
        %1173 = vmatprep.subr.bf16.mxu0 0
        %1174 = vmatpush1.bf16.msra.mxu0 %v1158
        %1175 = vmatprep.subr.bf16.mxu0 0
        %1176 = vmatpush1.bf16.msra.mxu0 %v1157
        %1177 = vmatprep.subr.bf16.mxu0 0
        %1178 = vmatpush1.bf16.msra.mxu0 %v1156
        %1179 = vmatprep.subr.bf16.mxu0 0
        %1180 = vmatpush1.bf16.msra.mxu0 %v1155
        %1181 = vmatprep.subr.bf16.mxu0 0
        %1182 = vmatpush1.bf16.msra.mxu0 %v1154
        %1183 = vmatprep.subr.bf16.mxu0 0
        %1184 = vmatpush1.bf16.msra.mxu0 %v1153
        %1185 = vmatprep.subr.bf16.mxu0 0
        %1186 = vmatpush2.bf16.msra.mxu0 0
        %1187 = vmatprep.subr.bf16.mxu0 0
        %1188 = vmatpush2.bf16.msra.mxu0 0
        %1189 = vmatprep.subr.bf16.mxu0 0
        %1190 = vmatpush2.bf16.msra.mxu0 0
        %1191 = vmatprep.subr.bf16.mxu0 0
        %1192 = vmatpush2.bf16.msra.mxu0 0
        %1193 = vmatprep.subr.bf16.mxu0 0
        %1194 = vmatpush2.bf16.msra.mxu0 0
        %1195 = vmatprep.subr.bf16.mxu0 0
        %1196 = vmatpush2.bf16.msra.mxu0 0
        %1197 = vmatprep.subr.bf16.mxu0 0
        %1198 = vmatpush2.bf16.msra.mxu0 0
        %1199 = vmatprep.subr.bf16.mxu0 0
        %1200 = vmatpush2.bf16.msra.mxu0 0
        %1201 = vmatprep.mubr.bf16.mxu0 0
        %1202 = vmatmul.mubr.bf16.gmra.mxu0 %v1095
        %v1203 = vpop.f32.mrf.mxu0
        %v1204 = vadd.f32 %v1119, %v1203
        %v1205 = vpop.f32.mrf.mxu0
        %v1206 = vpop.f32.mrf.mxu0
        %v1207 = vadd.f32 %v1119, %v1206
        %v1208 = vpop.f32.mrf.mxu0
        %1209 = vdwg.mxu0
        %v1210 = vmax.f32 %v1204, 0.0
        %v1211 = vmax.f32 %v1207, 0.0
        %v1212 = vpack.c.bf16 %v1211, %v1210
        %s1213 = scalar_lea.vmem [#allocation8], 448
        %v1214 = vld [vmem:[%s1213] sm:$0xf]
        %v1215 = vld [vmem:[%s1213 + $0x4] sm:$0xf]
        %v1216 = vld [vmem:[%s1213 + $0x8] sm:$0xf]
        %v1217 = vld [vmem:[%s1213 + $0xc] sm:$0xf]
        %v1218 = vld [vmem:[%s1213 + $0x10] sm:$0xf]
        %v1219 = vld [vmem:[%s1213 + $0x14] sm:$0xf]
        %v1220 = vld [vmem:[%s1213 + $0x18] sm:$0xf]
        %v1221 = vld [vmem:[%s1213 + $0x1c] sm:$0xf]
        %v1222 = vld [vmem:[%s1213 + $0x20] sm:$0xf]
        %v1223 = vld [vmem:[%s1213 + $0x24] sm:$0xf]
        %v1224 = vld [vmem:[%s1213 + $0x28] sm:$0xf]
        %v1225 = vld [vmem:[%s1213 + $0x2c] sm:$0xf]
        %v1226 = vld [vmem:[%s1213 + $0x30] sm:$0xf]
        %v1227 = vld [vmem:[%s1213 + $0x34] sm:$0xf]
        %v1228 = vld [vmem:[%s1213 + $0x38] sm:$0xf]
        %v1229 = vld [vmem:[%s1213 + $0x3c] sm:$0xf]
        %s1230 = scalar_lea.vmem [#allocation10], 7
        %v1231 = vld [vmem:[%s1230] sm:$0x1]
        %v1233 = vlaneseq
        %v1234 = vshrl.u32 %v1233, 7
        %v1235 = vsub.s32 0, %v1234
        %v1236 = vrot.slane %v1231, %v1235
        %v1254 = vunpack.c.l.b16 %v1214
        %v1255 = vunpack.c.l.b16 %v1215
        %v1256 = vunpack.c.l.b16 %v1216
        %v1257 = vunpack.c.l.b16 %v1217
        %v1258 = vunpack.c.l.b16 %v1218
        %v1259 = vunpack.c.l.b16 %v1219
        %v1260 = vunpack.c.l.b16 %v1220
        %v1261 = vunpack.c.l.b16 %v1221
        %v1262 = vunpack.c.l.b16 %v1222
        %v1263 = vunpack.c.l.b16 %v1223
        %v1264 = vunpack.c.l.b16 %v1224
        %v1265 = vunpack.c.l.b16 %v1225
        %v1266 = vunpack.c.l.b16 %v1226
        %v1267 = vunpack.c.l.b16 %v1227
        %v1268 = vunpack.c.l.b16 %v1228
        %v1269 = vunpack.c.l.b16 %v1229
        %v1270 = vpack.c.b16 %v1255, %v1254
        %v1271 = vpack.c.b16 %v1257, %v1256
        %v1272 = vpack.c.b16 %v1259, %v1258
        %v1273 = vpack.c.b16 %v1261, %v1260
        %v1274 = vpack.c.b16 %v1263, %v1262
        %v1275 = vpack.c.b16 %v1265, %v1264
        %v1276 = vpack.c.b16 %v1267, %v1266
        %v1277 = vpack.c.b16 %v1269, %v1268
        %1286 = vmatprep.subr.bf16.mxu0 0
        %1287 = vmatpush1.bf16.msra.mxu0 %v1277
        %1288 = vmatprep.subr.bf16.mxu0 0
        %1289 = vmatpush1.bf16.msra.mxu0 %v1276
        %1290 = vmatprep.subr.bf16.mxu0 0
        %1291 = vmatpush1.bf16.msra.mxu0 %v1275
        %1292 = vmatprep.subr.bf16.mxu0 0
        %1293 = vmatpush1.bf16.msra.mxu0 %v1274
        %1294 = vmatprep.subr.bf16.mxu0 0
        %1295 = vmatpush1.bf16.msra.mxu0 %v1273
        %1296 = vmatprep.subr.bf16.mxu0 0
        %1297 = vmatpush1.bf16.msra.mxu0 %v1272
        %1298 = vmatprep.subr.bf16.mxu0 0
        %1299 = vmatpush1.bf16.msra.mxu0 %v1271
        %1300 = vmatprep.subr.bf16.mxu0 0
        %1301 = vmatpush1.bf16.msra.mxu0 %v1270
        %1302 = vmatprep.subr.bf16.mxu0 0
        %1303 = vmatpush2.bf16.msra.mxu0 0
        %1304 = vmatprep.subr.bf16.mxu0 0
        %1305 = vmatpush2.bf16.msra.mxu0 0
        %1306 = vmatprep.subr.bf16.mxu0 0
        %1307 = vmatpush2.bf16.msra.mxu0 0
        %1308 = vmatprep.subr.bf16.mxu0 0
        %1309 = vmatpush2.bf16.msra.mxu0 0
        %1310 = vmatprep.subr.bf16.mxu0 0
        %1311 = vmatpush2.bf16.msra.mxu0 0
        %1312 = vmatprep.subr.bf16.mxu0 0
        %1313 = vmatpush2.bf16.msra.mxu0 0
        %1314 = vmatprep.subr.bf16.mxu0 0
        %1315 = vmatpush2.bf16.msra.mxu0 0
        %1316 = vmatprep.subr.bf16.mxu0 0
        %1317 = vmatpush2.bf16.msra.mxu0 0
        %1318 = vmatprep.mubr.bf16.mxu0 0
        %1319 = vmatmul.mubr.bf16.gmra.mxu0 %v1212
        %v1320 = vpop.f32.mrf.mxu0
        %v1321 = vadd.f32 %v1236, %v1320
        %v1322 = vpop.f32.mrf.mxu0
        %v1323 = vpop.f32.mrf.mxu0
        %v1324 = vadd.f32 %v1236, %v1323
        %v1325 = vpop.f32.mrf.mxu0
        %1326 = vdwg.mxu0
        %v1327 = vmax.f32 %v1321, 0.0
        %v1328 = vmax.f32 %v1324, 0.0
        %v1329 = vpack.c.bf16 %v1328, %v1327
        %s1330 = scalar_lea.vmem [#allocation8], 512
        %v1331 = vld [vmem:[%s1330] sm:$0xf]
        %v1332 = vld [vmem:[%s1330 + $0x4] sm:$0xf]
        %v1333 = vld [vmem:[%s1330 + $0x8] sm:$0xf]
        %v1334 = vld [vmem:[%s1330 + $0xc] sm:$0xf]
        %v1335 = vld [vmem:[%s1330 + $0x10] sm:$0xf]
        %v1336 = vld [vmem:[%s1330 + $0x14] sm:$0xf]
        %v1337 = vld [vmem:[%s1330 + $0x18] sm:$0xf]
        %v1338 = vld [vmem:[%s1330 + $0x1c] sm:$0xf]
        %v1339 = vld [vmem:[%s1330 + $0x20] sm:$0xf]
        %v1340 = vld [vmem:[%s1330 + $0x24] sm:$0xf]
        %v1341 = vld [vmem:[%s1330 + $0x28] sm:$0xf]
        %v1342 = vld [vmem:[%s1330 + $0x2c] sm:$0xf]
        %v1343 = vld [vmem:[%s1330 + $0x30] sm:$0xf]
        %v1344 = vld [vmem:[%s1330 + $0x34] sm:$0xf]
        %v1345 = vld [vmem:[%s1330 + $0x38] sm:$0xf]
        %v1346 = vld [vmem:[%s1330 + $0x3c] sm:$0xf]
        %s1347 = scalar_lea.vmem [#allocation10], 8
        %v1348 = vld [vmem:[%s1347] sm:$0x1]
        %v1350 = vlaneseq
        %v1351 = vshrl.u32 %v1350, 7
        %v1352 = vsub.s32 0, %v1351
        %v1353 = vrot.slane %v1348, %v1352
        %v1371 = vunpack.c.l.b16 %v1331
        %v1372 = vunpack.c.l.b16 %v1332
        %v1373 = vunpack.c.l.b16 %v1333
        %v1374 = vunpack.c.l.b16 %v1334
        %v1375 = vunpack.c.l.b16 %v1335
        %v1376 = vunpack.c.l.b16 %v1336
        %v1377 = vunpack.c.l.b16 %v1337
        %v1378 = vunpack.c.l.b16 %v1338
        %v1379 = vunpack.c.l.b16 %v1339
        %v1380 = vunpack.c.l.b16 %v1340
        %v1381 = vunpack.c.l.b16 %v1341
        %v1382 = vunpack.c.l.b16 %v1342
        %v1383 = vunpack.c.l.b16 %v1343
        %v1384 = vunpack.c.l.b16 %v1344
        %v1385 = vunpack.c.l.b16 %v1345
        %v1386 = vunpack.c.l.b16 %v1346
        %v1387 = vpack.c.b16 %v1372, %v1371
        %v1388 = vpack.c.b16 %v1374, %v1373
        %v1389 = vpack.c.b16 %v1376, %v1375
        %v1390 = vpack.c.b16 %v1378, %v1377
        %v1391 = vpack.c.b16 %v1380, %v1379
        %v1392 = vpack.c.b16 %v1382, %v1381
        %v1393 = vpack.c.b16 %v1384, %v1383
        %v1394 = vpack.c.b16 %v1386, %v1385
        %1403 = vmatprep.subr.bf16.mxu0 0
        %1404 = vmatpush1.bf16.msra.mxu0 %v1394
        %1405 = vmatprep.subr.bf16.mxu0 0
        %1406 = vmatpush1.bf16.msra.mxu0 %v1393
        %1407 = vmatprep.subr.bf16.mxu0 0
        %1408 = vmatpush1.bf16.msra.mxu0 %v1392
        %1409 = vmatprep.subr.bf16.mxu0 0
        %1410 = vmatpush1.bf16.msra.mxu0 %v1391
        %1411 = vmatprep.subr.bf16.mxu0 0
        %1412 = vmatpush1.bf16.msra.mxu0 %v1390
        %1413 = vmatprep.subr.bf16.mxu0 0
        %1414 = vmatpush1.bf16.msra.mxu0 %v1389
        %1415 = vmatprep.subr.bf16.mxu0 0
        %1416 = vmatpush1.bf16.msra.mxu0 %v1388
        %1417 = vmatprep.subr.bf16.mxu0 0
        %1418 = vmatpush1.bf16.msra.mxu0 %v1387
        %1419 = vmatprep.subr.bf16.mxu0 0
        %1420 = vmatpush2.bf16.msra.mxu0 0
        %1421 = vmatprep.subr.bf16.mxu0 0
        %1422 = vmatpush2.bf16.msra.mxu0 0
        %1423 = vmatprep.subr.bf16.mxu0 0
        %1424 = vmatpush2.bf16.msra.mxu0 0
        %1425 = vmatprep.subr.bf16.mxu0 0
        %1426 = vmatpush2.bf16.msra.mxu0 0
        %1427 = vmatprep.subr.bf16.mxu0 0
        %1428 = vmatpush2.bf16.msra.mxu0 0
        %1429 = vmatprep.subr.bf16.mxu0 0
        %1430 = vmatpush2.bf16.msra.mxu0 0
        %1431 = vmatprep.subr.bf16.mxu0 0
        %1432 = vmatpush2.bf16.msra.mxu0 0
        %1433 = vmatprep.subr.bf16.mxu0 0
        %1434 = vmatpush2.bf16.msra.mxu0 0
        %1435 = vmatprep.mubr.bf16.mxu0 0
        %1436 = vmatmul.mubr.bf16.gmra.mxu0 %v1329
        %v1437 = vpop.f32.mrf.mxu0
        %v1438 = vadd.f32 %v1353, %v1437
        %v1439 = vpop.f32.mrf.mxu0
        %v1440 = vpop.f32.mrf.mxu0
        %v1441 = vadd.f32 %v1353, %v1440
        %v1442 = vpop.f32.mrf.mxu0
        %1443 = vdwg.mxu0
        %v1444 = vpack.c.bf16 %v739, %v736
        %v1445 = vpack.c.bf16 %v1441, %v1438
        %s1446 = scalar_lea.vmem [#allocation8], 576
        %v1447 = vld [vmem:[%s1446] sm:$0xf]
        %v1448 = vld [vmem:[%s1446 + $0x4] sm:$0xf]
        %v1449 = vld [vmem:[%s1446 + $0x8] sm:$0xf]
        %v1450 = vld [vmem:[%s1446 + $0xc] sm:$0xf]
        %v1451 = vld [vmem:[%s1446 + $0x10] sm:$0xf]
        %v1452 = vld [vmem:[%s1446 + $0x14] sm:$0xf]
        %v1453 = vld [vmem:[%s1446 + $0x18] sm:$0xf]
        %v1454 = vld [vmem:[%s1446 + $0x1c] sm:$0xf]
        %v1455 = vld [vmem:[%s1446 + $0x20] sm:$0xf]
        %v1456 = vld [vmem:[%s1446 + $0x24] sm:$0xf]
        %v1457 = vld [vmem:[%s1446 + $0x28] sm:$0xf]
        %v1458 = vld [vmem:[%s1446 + $0x2c] sm:$0xf]
        %v1459 = vld [vmem:[%s1446 + $0x30] sm:$0xf]
        %v1460 = vld [vmem:[%s1446 + $0x34] sm:$0xf]
        %v1461 = vld [vmem:[%s1446 + $0x38] sm:$0xf]
        %v1462 = vld [vmem:[%s1446 + $0x3c] sm:$0xf]
        %s1463 = scalar_lea.vmem [#allocation8], 640
        %v1464 = vld [vmem:[%s1463] sm:$0xf]
        %v1465 = vld [vmem:[%s1463 + $0x4] sm:$0xf]
        %v1466 = vld [vmem:[%s1463 + $0x8] sm:$0xf]
        %v1467 = vld [vmem:[%s1463 + $0xc] sm:$0xf]
        %v1468 = vld [vmem:[%s1463 + $0x10] sm:$0xf]
        %v1469 = vld [vmem:[%s1463 + $0x14] sm:$0xf]
        %v1470 = vld [vmem:[%s1463 + $0x18] sm:$0xf]
        %v1471 = vld [vmem:[%s1463 + $0x1c] sm:$0xf]
        %v1472 = vld [vmem:[%s1463 + $0x20] sm:$0xf]
        %v1473 = vld [vmem:[%s1463 + $0x24] sm:$0xf]
        %v1474 = vld [vmem:[%s1463 + $0x28] sm:$0xf]
        %v1475 = vld [vmem:[%s1463 + $0x2c] sm:$0xf]
        %v1476 = vld [vmem:[%s1463 + $0x30] sm:$0xf]
        %v1477 = vld [vmem:[%s1463 + $0x34] sm:$0xf]
        %v1478 = vld [vmem:[%s1463 + $0x38] sm:$0xf]
        %v1479 = vld [vmem:[%s1463 + $0x3c] sm:$0xf]
        %v1496 = vunpack.c.l.b16 %v1447
        %v1497 = vunpack.c.l.b16 %v1448
        %v1498 = vunpack.c.l.b16 %v1449
        %v1499 = vunpack.c.l.b16 %v1450
        %v1500 = vunpack.c.l.b16 %v1451
        %v1501 = vunpack.c.l.b16 %v1452
        %v1502 = vunpack.c.l.b16 %v1453
        %v1503 = vunpack.c.l.b16 %v1454
        %v1504 = vunpack.c.l.b16 %v1455
        %v1505 = vunpack.c.l.b16 %v1456
        %v1506 = vunpack.c.l.b16 %v1457
        %v1507 = vunpack.c.l.b16 %v1458
        %v1508 = vunpack.c.l.b16 %v1459
        %v1509 = vunpack.c.l.b16 %v1460
        %v1510 = vunpack.c.l.b16 %v1461
        %v1511 = vunpack.c.l.b16 %v1462
        %v1512 = vpack.c.b16 %v1497, %v1496
        %v1513 = vpack.c.b16 %v1499, %v1498
        %v1514 = vpack.c.b16 %v1501, %v1500
        %v1515 = vpack.c.b16 %v1503, %v1502
        %v1516 = vpack.c.b16 %v1505, %v1504
        %v1517 = vpack.c.b16 %v1507, %v1506
        %v1518 = vpack.c.b16 %v1509, %v1508
        %v1519 = vpack.c.b16 %v1511, %v1510
        %v1544 = vunpack.c.l.b16 %v1464
        %v1545 = vunpack.c.l.b16 %v1465
        %v1546 = vunpack.c.l.b16 %v1466
        %v1547 = vunpack.c.l.b16 %v1467
        %v1548 = vunpack.c.l.b16 %v1468
        %v1549 = vunpack.c.l.b16 %v1469
        %v1550 = vunpack.c.l.b16 %v1470
        %v1551 = vunpack.c.l.b16 %v1471
        %v1552 = vunpack.c.l.b16 %v1472
        %v1553 = vunpack.c.l.b16 %v1473
        %v1554 = vunpack.c.l.b16 %v1474
        %v1555 = vunpack.c.l.b16 %v1475
        %v1556 = vunpack.c.l.b16 %v1476
        %v1557 = vunpack.c.l.b16 %v1477
        %v1558 = vunpack.c.l.b16 %v1478
        %v1559 = vunpack.c.l.b16 %v1479
        %v1560 = vpack.c.b16 %v1545, %v1544
        %v1561 = vpack.c.b16 %v1547, %v1546
        %v1562 = vpack.c.b16 %v1549, %v1548
        %v1563 = vpack.c.b16 %v1551, %v1550
        %v1564 = vpack.c.b16 %v1553, %v1552
        %v1565 = vpack.c.b16 %v1555, %v1554
        %v1566 = vpack.c.b16 %v1557, %v1556
        %v1567 = vpack.c.b16 %v1559, %v1558
        %s1576 = scalar_lea.vmem [#allocation10], 9
        %v1577 = vld [vmem:[%s1576] sm:$0x1]
        %v1579 = vlaneseq
        %v1580 = vshrl.u32 %v1579, 7
        %v1581 = vsub.s32 0, %v1580
        %v1582 = vrot.slane %v1577, %v1581
        %1584 = vmatprep.subr.bf16.mxu0 0
        %1585 = vmatpush1.bf16.msra.mxu0 %v1519
        %1586 = vmatprep.subr.bf16.mxu0 0
        %1587 = vmatpush1.bf16.msra.mxu0 %v1518
        %1588 = vmatprep.subr.bf16.mxu0 0
        %1589 = vmatpush1.bf16.msra.mxu0 %v1517
        %1590 = vmatprep.subr.bf16.mxu0 0
        %1591 = vmatpush1.bf16.msra.mxu0 %v1516
        %1592 = vmatprep.subr.bf16.mxu0 0
        %1593 = vmatpush1.bf16.msra.mxu0 %v1515
        %1594 = vmatprep.subr.bf16.mxu0 0
        %1595 = vmatpush1.bf16.msra.mxu0 %v1514
        %1596 = vmatprep.subr.bf16.mxu0 0
        %1597 = vmatpush1.bf16.msra.mxu0 %v1513
        %1598 = vmatprep.subr.bf16.mxu0 0
        %1599 = vmatpush1.bf16.msra.mxu0 %v1512
        %1600 = vmatprep.subr.bf16.mxu0 0
        %1601 = vmatpush2.bf16.msra.mxu0 %v1567
        %1602 = vmatprep.subr.bf16.mxu0 0
        %1603 = vmatpush2.bf16.msra.mxu0 %v1566
        %1604 = vmatprep.subr.bf16.mxu0 0
        %1605 = vmatpush2.bf16.msra.mxu0 %v1565
        %1606 = vmatprep.subr.bf16.mxu0 0
        %1607 = vmatpush2.bf16.msra.mxu0 %v1564
        %1608 = vmatprep.subr.bf16.mxu0 0
        %1609 = vmatpush2.bf16.msra.mxu0 %v1563
        %1610 = vmatprep.subr.bf16.mxu0 0
        %1611 = vmatpush2.bf16.msra.mxu0 %v1562
        %1612 = vmatprep.subr.bf16.mxu0 0
        %1613 = vmatpush2.bf16.msra.mxu0 %v1561
        %1614 = vmatprep.subr.bf16.mxu0 0
        %1615 = vmatpush2.bf16.msra.mxu0 %v1560
        %1616 = vmatprep.mubr.bf16.mxu0 %v1445
        %1617 = vmatmul.mubr.bf16.gmra.mxu0 %v1444
        %v1618 = vpop.f32.mrf.mxu0
        %v1619 = vadd.f32 %v1582, %v1618
        %v1620 = vpop.f32.mrf.mxu0
        %v1621 = vpop.f32.mrf.mxu0
        %v1622 = vadd.f32 %v1582, %v1621
        %v1623 = vpop.f32.mrf.mxu0
        %1624 = vdwg.mxu0
        %v1625 = vmax.f32 %v1619, 0.0
        %v1626 = vmax.f32 %v1622, 0.0
        %v1627 = vpack.c.bf16 %v1626, %v1625
        %s1628 = scalar_lea.vmem [#allocation8], 704
        %v1629 = vld [vmem:[%s1628] sm:$0xf]
        %v1630 = vld [vmem:[%s1628 + $0x4] sm:$0xf]
        %v1631 = vld [vmem:[%s1628 + $0x8] sm:$0xf]
        %v1632 = vld [vmem:[%s1628 + $0xc] sm:$0xf]
        %v1633 = vld [vmem:[%s1628 + $0x10] sm:$0xf]
        %v1634 = vld [vmem:[%s1628 + $0x14] sm:$0xf]
        %v1635 = vld [vmem:[%s1628 + $0x18] sm:$0xf]
        %v1636 = vld [vmem:[%s1628 + $0x1c] sm:$0xf]
        %v1637 = vld [vmem:[%s1628 + $0x20] sm:$0xf]
        %v1638 = vld [vmem:[%s1628 + $0x24] sm:$0xf]
        %v1639 = vld [vmem:[%s1628 + $0x28] sm:$0xf]
        %v1640 = vld [vmem:[%s1628 + $0x2c] sm:$0xf]
        %v1641 = vld [vmem:[%s1628 + $0x30] sm:$0xf]
        %v1642 = vld [vmem:[%s1628 + $0x34] sm:$0xf]
        %v1643 = vld [vmem:[%s1628 + $0x38] sm:$0xf]
        %v1644 = vld [vmem:[%s1628 + $0x3c] sm:$0xf]
        %s1645 = scalar_lea.vmem [#allocation10], 10
        %v1646 = vld [vmem:[%s1645] sm:$0x1]
        %v1648 = vlaneseq
        %v1649 = vshrl.u32 %v1648, 7
        %v1650 = vsub.s32 0, %v1649
        %v1651 = vrot.slane %v1646, %v1650
        %v1669 = vunpack.c.l.b16 %v1629
        %v1670 = vunpack.c.l.b16 %v1630
        %v1671 = vunpack.c.l.b16 %v1631
        %v1672 = vunpack.c.l.b16 %v1632
        %v1673 = vunpack.c.l.b16 %v1633
        %v1674 = vunpack.c.l.b16 %v1634
        %v1675 = vunpack.c.l.b16 %v1635
        %v1676 = vunpack.c.l.b16 %v1636
        %v1677 = vunpack.c.l.b16 %v1637
        %v1678 = vunpack.c.l.b16 %v1638
        %v1679 = vunpack.c.l.b16 %v1639
        %v1680 = vunpack.c.l.b16 %v1640
        %v1681 = vunpack.c.l.b16 %v1641
        %v1682 = vunpack.c.l.b16 %v1642
        %v1683 = vunpack.c.l.b16 %v1643
        %v1684 = vunpack.c.l.b16 %v1644
        %v1685 = vpack.c.b16 %v1670, %v1669
        %v1686 = vpack.c.b16 %v1672, %v1671
        %v1687 = vpack.c.b16 %v1674, %v1673
        %v1688 = vpack.c.b16 %v1676, %v1675
        %v1689 = vpack.c.b16 %v1678, %v1677
        %v1690 = vpack.c.b16 %v1680, %v1679
        %v1691 = vpack.c.b16 %v1682, %v1681
        %v1692 = vpack.c.b16 %v1684, %v1683
        %1701 = vmatprep.subr.bf16.mxu0 0
        %1702 = vmatpush1.bf16.msra.mxu0 %v1692
        %1703 = vmatprep.subr.bf16.mxu0 0
        %1704 = vmatpush1.bf16.msra.mxu0 %v1691
        %1705 = vmatprep.subr.bf16.mxu0 0
        %1706 = vmatpush1.bf16.msra.mxu0 %v1690
        %1707 = vmatprep.subr.bf16.mxu0 0
        %1708 = vmatpush1.bf16.msra.mxu0 %v1689
        %1709 = vmatprep.subr.bf16.mxu0 0
        %1710 = vmatpush1.bf16.msra.mxu0 %v1688
        %1711 = vmatprep.subr.bf16.mxu0 0
        %1712 = vmatpush1.bf16.msra.mxu0 %v1687
        %1713 = vmatprep.subr.bf16.mxu0 0
        %1714 = vmatpush1.bf16.msra.mxu0 %v1686
        %1715 = vmatprep.subr.bf16.mxu0 0
        %1716 = vmatpush1.bf16.msra.mxu0 %v1685
        %1717 = vmatprep.subr.bf16.mxu0 0
        %1718 = vmatpush2.bf16.msra.mxu0 0
        %1719 = vmatprep.subr.bf16.mxu0 0
        %1720 = vmatpush2.bf16.msra.mxu0 0
        %1721 = vmatprep.subr.bf16.mxu0 0
        %1722 = vmatpush2.bf16.msra.mxu0 0
        %1723 = vmatprep.subr.bf16.mxu0 0
        %1724 = vmatpush2.bf16.msra.mxu0 0
        %1725 = vmatprep.subr.bf16.mxu0 0
        %1726 = vmatpush2.bf16.msra.mxu0 0
        %1727 = vmatprep.subr.bf16.mxu0 0
        %1728 = vmatpush2.bf16.msra.mxu0 0
        %1729 = vmatprep.subr.bf16.mxu0 0
        %1730 = vmatpush2.bf16.msra.mxu0 0
        %1731 = vmatprep.subr.bf16.mxu0 0
        %1732 = vmatpush2.bf16.msra.mxu0 0
        %1733 = vmatprep.mubr.bf16.mxu0 0
        %1734 = vmatmul.mubr.bf16.gmra.mxu0 %v1627
        %v1735 = vpop.f32.mrf.mxu0
        %v1736 = vadd.f32 %v1651, %v1735
        %v1737 = vpop.f32.mrf.mxu0
        %v1738 = vpop.f32.mrf.mxu0
        %v1739 = vadd.f32 %v1651, %v1738
        %v1740 = vpop.f32.mrf.mxu0
        %1741 = vdwg.mxu0
        %v1742 = vmax.f32 %v1736, 0.0
        %v1743 = vmax.f32 %v1739, 0.0
        %v1744 = vpack.c.bf16 %v1743, %v1742
        %s1745 = scalar_lea.vmem [#allocation8], 768
        %v1746 = vld [vmem:[%s1745] sm:$0xf]
        %v1747 = vld [vmem:[%s1745 + $0x4] sm:$0xf]
        %v1748 = vld [vmem:[%s1745 + $0x8] sm:$0xf]
        %v1749 = vld [vmem:[%s1745 + $0xc] sm:$0xf]
        %v1750 = vld [vmem:[%s1745 + $0x10] sm:$0xf]
        %v1751 = vld [vmem:[%s1745 + $0x14] sm:$0xf]
        %v1752 = vld [vmem:[%s1745 + $0x18] sm:$0xf]
        %v1753 = vld [vmem:[%s1745 + $0x1c] sm:$0xf]
        %v1754 = vld [vmem:[%s1745 + $0x20] sm:$0xf]
        %v1755 = vld [vmem:[%s1745 + $0x24] sm:$0xf]
        %v1756 = vld [vmem:[%s1745 + $0x28] sm:$0xf]
        %v1757 = vld [vmem:[%s1745 + $0x2c] sm:$0xf]
        %v1758 = vld [vmem:[%s1745 + $0x30] sm:$0xf]
        %v1759 = vld [vmem:[%s1745 + $0x34] sm:$0xf]
        %v1760 = vld [vmem:[%s1745 + $0x38] sm:$0xf]
        %v1761 = vld [vmem:[%s1745 + $0x3c] sm:$0xf]
        %s1762 = scalar_lea.vmem [#allocation10], 11
        %v1763 = vld [vmem:[%s1762] sm:$0x1]
        %v1765 = vlaneseq
        %v1766 = vshrl.u32 %v1765, 7
        %v1767 = vsub.s32 0, %v1766
        %v1768 = vrot.slane %v1763, %v1767
        %v1786 = vunpack.c.l.b16 %v1746
        %v1787 = vunpack.c.l.b16 %v1747
        %v1788 = vunpack.c.l.b16 %v1748
        %v1789 = vunpack.c.l.b16 %v1749
        %v1790 = vunpack.c.l.b16 %v1750
        %v1791 = vunpack.c.l.b16 %v1751
        %v1792 = vunpack.c.l.b16 %v1752
        %v1793 = vunpack.c.l.b16 %v1753
        %v1794 = vunpack.c.l.b16 %v1754
        %v1795 = vunpack.c.l.b16 %v1755
        %v1796 = vunpack.c.l.b16 %v1756
        %v1797 = vunpack.c.l.b16 %v1757
        %v1798 = vunpack.c.l.b16 %v1758
        %v1799 = vunpack.c.l.b16 %v1759
        %v1800 = vunpack.c.l.b16 %v1760
        %v1801 = vunpack.c.l.b16 %v1761
        %v1802 = vpack.c.b16 %v1787, %v1786
        %v1803 = vpack.c.b16 %v1789, %v1788
        %v1804 = vpack.c.b16 %v1791, %v1790
        %v1805 = vpack.c.b16 %v1793, %v1792
        %v1806 = vpack.c.b16 %v1795, %v1794
        %v1807 = vpack.c.b16 %v1797, %v1796
        %v1808 = vpack.c.b16 %v1799, %v1798
        %v1809 = vpack.c.b16 %v1801, %v1800
        %1818 = vmatprep.subr.bf16.mxu0 0
        %1819 = vmatpush1.bf16.msra.mxu0 %v1809
        %1820 = vmatprep.subr.bf16.mxu0 0
        %1821 = vmatpush1.bf16.msra.mxu0 %v1808
        %1822 = vmatprep.subr.bf16.mxu0 0
        %1823 = vmatpush1.bf16.msra.mxu0 %v1807
        %1824 = vmatprep.subr.bf16.mxu0 0
        %1825 = vmatpush1.bf16.msra.mxu0 %v1806
        %1826 = vmatprep.subr.bf16.mxu0 0
        %1827 = vmatpush1.bf16.msra.mxu0 %v1805
        %1828 = vmatprep.subr.bf16.mxu0 0
        %1829 = vmatpush1.bf16.msra.mxu0 %v1804
        %1830 = vmatprep.subr.bf16.mxu0 0
        %1831 = vmatpush1.bf16.msra.mxu0 %v1803
        %1832 = vmatprep.subr.bf16.mxu0 0
        %1833 = vmatpush1.bf16.msra.mxu0 %v1802
        %1834 = vmatprep.subr.bf16.mxu0 0
        %1835 = vmatpush2.bf16.msra.mxu0 0
        %1836 = vmatprep.subr.bf16.mxu0 0
        %1837 = vmatpush2.bf16.msra.mxu0 0
        %1838 = vmatprep.subr.bf16.mxu0 0
        %1839 = vmatpush2.bf16.msra.mxu0 0
        %1840 = vmatprep.subr.bf16.mxu0 0
        %1841 = vmatpush2.bf16.msra.mxu0 0
        %1842 = vmatprep.subr.bf16.mxu0 0
        %1843 = vmatpush2.bf16.msra.mxu0 0
        %1844 = vmatprep.subr.bf16.mxu0 0
        %1845 = vmatpush2.bf16.msra.mxu0 0
        %1846 = vmatprep.subr.bf16.mxu0 0
        %1847 = vmatpush2.bf16.msra.mxu0 0
        %1848 = vmatprep.subr.bf16.mxu0 0
        %1849 = vmatpush2.bf16.msra.mxu0 0
        %1850 = vmatprep.mubr.bf16.mxu0 0
        %1851 = vmatmul.mubr.bf16.gmra.mxu0 %v1744
        %v1852 = vpop.f32.mrf.mxu0
        %v1853 = vadd.f32 %v1768, %v1852
        %v1854 = vpop.f32.mrf.mxu0
        %v1855 = vpop.f32.mrf.mxu0
        %v1856 = vadd.f32 %v1768, %v1855
        %v1857 = vpop.f32.mrf.mxu0
        %1858 = vdwg.mxu0
        %v1859 = vpack.c.bf16 %v1090, %v1087
        %v1860 = vpack.c.bf16 %v1856, %v1853
        %s1861 = scalar_lea.vmem [#allocation8], 832
        %v1862 = vld [vmem:[%s1861] sm:$0xf]
        %v1863 = vld [vmem:[%s1861 + $0x4] sm:$0xf]
        %v1864 = vld [vmem:[%s1861 + $0x8] sm:$0xf]
        %v1865 = vld [vmem:[%s1861 + $0xc] sm:$0xf]
        %v1866 = vld [vmem:[%s1861 + $0x10] sm:$0xf]
        %v1867 = vld [vmem:[%s1861 + $0x14] sm:$0xf]
        %v1868 = vld [vmem:[%s1861 + $0x18] sm:$0xf]
        %v1869 = vld [vmem:[%s1861 + $0x1c] sm:$0xf]
        %v1870 = vld [vmem:[%s1861 + $0x20] sm:$0xf]
        %v1871 = vld [vmem:[%s1861 + $0x24] sm:$0xf]
        %v1872 = vld [vmem:[%s1861 + $0x28] sm:$0xf]
        %v1873 = vld [vmem:[%s1861 + $0x2c] sm:$0xf]
        %v1874 = vld [vmem:[%s1861 + $0x30] sm:$0xf]
        %v1875 = vld [vmem:[%s1861 + $0x34] sm:$0xf]
        %v1876 = vld [vmem:[%s1861 + $0x38] sm:$0xf]
        %v1877 = vld [vmem:[%s1861 + $0x3c] sm:$0xf]
        %s1878 = scalar_lea.vmem [#allocation8], 896
        %v1879 = vld [vmem:[%s1878] sm:$0xf]
        %v1880 = vld [vmem:[%s1878 + $0x4] sm:$0xf]
        %v1881 = vld [vmem:[%s1878 + $0x8] sm:$0xf]
        %v1882 = vld [vmem:[%s1878 + $0xc] sm:$0xf]
        %v1883 = vld [vmem:[%s1878 + $0x10] sm:$0xf]
        %v1884 = vld [vmem:[%s1878 + $0x14] sm:$0xf]
        %v1885 = vld [vmem:[%s1878 + $0x18] sm:$0xf]
        %v1886 = vld [vmem:[%s1878 + $0x1c] sm:$0xf]
        %v1887 = vld [vmem:[%s1878 + $0x20] sm:$0xf]
        %v1888 = vld [vmem:[%s1878 + $0x24] sm:$0xf]
        %v1889 = vld [vmem:[%s1878 + $0x28] sm:$0xf]
        %v1890 = vld [vmem:[%s1878 + $0x2c] sm:$0xf]
        %v1891 = vld [vmem:[%s1878 + $0x30] sm:$0xf]
        %v1892 = vld [vmem:[%s1878 + $0x34] sm:$0xf]
        %v1893 = vld [vmem:[%s1878 + $0x38] sm:$0xf]
        %v1894 = vld [vmem:[%s1878 + $0x3c] sm:$0xf]
        %v1911 = vunpack.c.l.b16 %v1862
        %v1912 = vunpack.c.l.b16 %v1863
        %v1913 = vunpack.c.l.b16 %v1864
        %v1914 = vunpack.c.l.b16 %v1865
        %v1915 = vunpack.c.l.b16 %v1866
        %v1916 = vunpack.c.l.b16 %v1867
        %v1917 = vunpack.c.l.b16 %v1868
        %v1918 = vunpack.c.l.b16 %v1869
        %v1919 = vunpack.c.l.b16 %v1870
        %v1920 = vunpack.c.l.b16 %v1871
        %v1921 = vunpack.c.l.b16 %v1872
        %v1922 = vunpack.c.l.b16 %v1873
        %v1923 = vunpack.c.l.b16 %v1874
        %v1924 = vunpack.c.l.b16 %v1875
        %v1925 = vunpack.c.l.b16 %v1876
        %v1926 = vunpack.c.l.b16 %v1877
        %v1927 = vpack.c.b16 %v1912, %v1911
        %v1928 = vpack.c.b16 %v1914, %v1913
        %v1929 = vpack.c.b16 %v1916, %v1915
        %v1930 = vpack.c.b16 %v1918, %v1917
        %v1931 = vpack.c.b16 %v1920, %v1919
        %v1932 = vpack.c.b16 %v1922, %v1921
        %v1933 = vpack.c.b16 %v1924, %v1923
        %v1934 = vpack.c.b16 %v1926, %v1925
        %v1959 = vunpack.c.l.b16 %v1879
        %v1960 = vunpack.c.l.b16 %v1880
        %v1961 = vunpack.c.l.b16 %v1881
        %v1962 = vunpack.c.l.b16 %v1882
        %v1963 = vunpack.c.l.b16 %v1883
        %v1964 = vunpack.c.l.b16 %v1884
        %v1965 = vunpack.c.l.b16 %v1885
        %v1966 = vunpack.c.l.b16 %v1886
        %v1967 = vunpack.c.l.b16 %v1887
        %v1968 = vunpack.c.l.b16 %v1888
        %v1969 = vunpack.c.l.b16 %v1889
        %v1970 = vunpack.c.l.b16 %v1890
        %v1971 = vunpack.c.l.b16 %v1891
        %v1972 = vunpack.c.l.b16 %v1892
        %v1973 = vunpack.c.l.b16 %v1893
        %v1974 = vunpack.c.l.b16 %v1894
        %v1975 = vpack.c.b16 %v1960, %v1959
        %v1976 = vpack.c.b16 %v1962, %v1961
        %v1977 = vpack.c.b16 %v1964, %v1963
        %v1978 = vpack.c.b16 %v1966, %v1965
        %v1979 = vpack.c.b16 %v1968, %v1967
        %v1980 = vpack.c.b16 %v1970, %v1969
        %v1981 = vpack.c.b16 %v1972, %v1971
        %v1982 = vpack.c.b16 %v1974, %v1973
        %s1991 = scalar_lea.vmem [#allocation10], 12
        %v1992 = vld [vmem:[%s1991] sm:$0x1]
        %v1994 = vlaneseq
        %v1995 = vshrl.u32 %v1994, 7
        %v1996 = vsub.s32 0, %v1995
        %v1997 = vrot.slane %v1992, %v1996
        %1999 = vmatprep.subr.bf16.mxu0 0
        %2000 = vmatpush1.bf16.msra.mxu0 %v1934
        %2001 = vmatprep.subr.bf16.mxu0 0
        %2002 = vmatpush1.bf16.msra.mxu0 %v1933
        %2003 = vmatprep.subr.bf16.mxu0 0
        %2004 = vmatpush1.bf16.msra.mxu0 %v1932
        %2005 = vmatprep.subr.bf16.mxu0 0
        %2006 = vmatpush1.bf16.msra.mxu0 %v1931
        %2007 = vmatprep.subr.bf16.mxu0 0
        %2008 = vmatpush1.bf16.msra.mxu0 %v1930
        %2009 = vmatprep.subr.bf16.mxu0 0
        %2010 = vmatpush1.bf16.msra.mxu0 %v1929
        %2011 = vmatprep.subr.bf16.mxu0 0
        %2012 = vmatpush1.bf16.msra.mxu0 %v1928
        %2013 = vmatprep.subr.bf16.mxu0 0
        %2014 = vmatpush1.bf16.msra.mxu0 %v1927
        %2015 = vmatprep.subr.bf16.mxu0 0
        %2016 = vmatpush2.bf16.msra.mxu0 %v1982
        %2017 = vmatprep.subr.bf16.mxu0 0
        %2018 = vmatpush2.bf16.msra.mxu0 %v1981
        %2019 = vmatprep.subr.bf16.mxu0 0
        %2020 = vmatpush2.bf16.msra.mxu0 %v1980
        %2021 = vmatprep.subr.bf16.mxu0 0
        %2022 = vmatpush2.bf16.msra.mxu0 %v1979
        %2023 = vmatprep.subr.bf16.mxu0 0
        %2024 = vmatpush2.bf16.msra.mxu0 %v1978
        %2025 = vmatprep.subr.bf16.mxu0 0
        %2026 = vmatpush2.bf16.msra.mxu0 %v1977
        %2027 = vmatprep.subr.bf16.mxu0 0
        %2028 = vmatpush2.bf16.msra.mxu0 %v1976
        %2029 = vmatprep.subr.bf16.mxu0 0
        %2030 = vmatpush2.bf16.msra.mxu0 %v1975
        %2031 = vmatprep.mubr.bf16.mxu0 %v1860
        %2032 = vmatmul.mubr.bf16.gmra.mxu0 %v1859
        %v2033 = vpop.f32.mrf.mxu0
        %v2034 = vadd.f32 %v1997, %v2033
        %v2035 = vpop.f32.mrf.mxu0
        %v2036 = vpop.f32.mrf.mxu0
        %v2037 = vadd.f32 %v1997, %v2036
        %v2038 = vpop.f32.mrf.mxu0
        %2039 = vdwg.mxu0
        %v2040 = vmax.f32 %v2034, 0.0
        %v2041 = vmax.f32 %v2037, 0.0
        %v2042 = vpack.c.bf16 %v2041, %v2040
        %s2043 = scalar_lea.vmem [#allocation8], 960
        %v2044 = vld [vmem:[%s2043] sm:$0xf]
        %v2045 = vld [vmem:[%s2043 + $0x4] sm:$0xf]
        %v2046 = vld [vmem:[%s2043 + $0x8] sm:$0xf]
        %v2047 = vld [vmem:[%s2043 + $0xc] sm:$0xf]
        %v2048 = vld [vmem:[%s2043 + $0x10] sm:$0xf]
        %v2049 = vld [vmem:[%s2043 + $0x14] sm:$0xf]
        %v2050 = vld [vmem:[%s2043 + $0x18] sm:$0xf]
        %v2051 = vld [vmem:[%s2043 + $0x1c] sm:$0xf]
        %v2052 = vld [vmem:[%s2043 + $0x20] sm:$0xf]
        %v2053 = vld [vmem:[%s2043 + $0x24] sm:$0xf]
        %v2054 = vld [vmem:[%s2043 + $0x28] sm:$0xf]
        %v2055 = vld [vmem:[%s2043 + $0x2c] sm:$0xf]
        %v2056 = vld [vmem:[%s2043 + $0x30] sm:$0xf]
        %v2057 = vld [vmem:[%s2043 + $0x34] sm:$0xf]
        %v2058 = vld [vmem:[%s2043 + $0x38] sm:$0xf]
        %v2059 = vld [vmem:[%s2043 + $0x3c] sm:$0xf]
        %s2060 = scalar_lea.vmem [#allocation10], 13
        %v2061 = vld [vmem:[%s2060] sm:$0x1]
        %v2063 = vlaneseq
        %v2064 = vshrl.u32 %v2063, 7
        %v2065 = vsub.s32 0, %v2064
        %v2066 = vrot.slane %v2061, %v2065
        %v2084 = vunpack.c.l.b16 %v2044
        %v2085 = vunpack.c.l.b16 %v2045
        %v2086 = vunpack.c.l.b16 %v2046
        %v2087 = vunpack.c.l.b16 %v2047
        %v2088 = vunpack.c.l.b16 %v2048
        %v2089 = vunpack.c.l.b16 %v2049
        %v2090 = vunpack.c.l.b16 %v2050
        %v2091 = vunpack.c.l.b16 %v2051
        %v2092 = vunpack.c.l.b16 %v2052
        %v2093 = vunpack.c.l.b16 %v2053
        %v2094 = vunpack.c.l.b16 %v2054
        %v2095 = vunpack.c.l.b16 %v2055
        %v2096 = vunpack.c.l.b16 %v2056
        %v2097 = vunpack.c.l.b16 %v2057
        %v2098 = vunpack.c.l.b16 %v2058
        %v2099 = vunpack.c.l.b16 %v2059
        %v2100 = vpack.c.b16 %v2085, %v2084
        %v2101 = vpack.c.b16 %v2087, %v2086
        %v2102 = vpack.c.b16 %v2089, %v2088
        %v2103 = vpack.c.b16 %v2091, %v2090
        %v2104 = vpack.c.b16 %v2093, %v2092
        %v2105 = vpack.c.b16 %v2095, %v2094
        %v2106 = vpack.c.b16 %v2097, %v2096
        %v2107 = vpack.c.b16 %v2099, %v2098
        %2116 = vmatprep.subr.bf16.mxu0 0
        %2117 = vmatpush1.bf16.msra.mxu0 %v2107
        %2118 = vmatprep.subr.bf16.mxu0 0
        %2119 = vmatpush1.bf16.msra.mxu0 %v2106
        %2120 = vmatprep.subr.bf16.mxu0 0
        %2121 = vmatpush1.bf16.msra.mxu0 %v2105
        %2122 = vmatprep.subr.bf16.mxu0 0
        %2123 = vmatpush1.bf16.msra.mxu0 %v2104
        %2124 = vmatprep.subr.bf16.mxu0 0
        %2125 = vmatpush1.bf16.msra.mxu0 %v2103
        %2126 = vmatprep.subr.bf16.mxu0 0
        %2127 = vmatpush1.bf16.msra.mxu0 %v2102
        %2128 = vmatprep.subr.bf16.mxu0 0
        %2129 = vmatpush1.bf16.msra.mxu0 %v2101
        %2130 = vmatprep.subr.bf16.mxu0 0
        %2131 = vmatpush1.bf16.msra.mxu0 %v2100
        %2132 = vmatprep.subr.bf16.mxu0 0
        %2133 = vmatpush2.bf16.msra.mxu0 0
        %2134 = vmatprep.subr.bf16.mxu0 0
        %2135 = vmatpush2.bf16.msra.mxu0 0
        %2136 = vmatprep.subr.bf16.mxu0 0
        %2137 = vmatpush2.bf16.msra.mxu0 0
        %2138 = vmatprep.subr.bf16.mxu0 0
        %2139 = vmatpush2.bf16.msra.mxu0 0
        %2140 = vmatprep.subr.bf16.mxu0 0
        %2141 = vmatpush2.bf16.msra.mxu0 0
        %2142 = vmatprep.subr.bf16.mxu0 0
        %2143 = vmatpush2.bf16.msra.mxu0 0
        %2144 = vmatprep.subr.bf16.mxu0 0
        %2145 = vmatpush2.bf16.msra.mxu0 0
        %2146 = vmatprep.subr.bf16.mxu0 0
        %2147 = vmatpush2.bf16.msra.mxu0 0
        %2148 = vmatprep.mubr.bf16.mxu0 0
        %2149 = vmatmul.mubr.bf16.gmra.mxu0 %v2042
        %v2150 = vpop.f32.mrf.mxu0
        %v2151 = vadd.f32 %v2066, %v2150
        %v2152 = vpop.f32.mrf.mxu0
        %v2153 = vpop.f32.mrf.mxu0
        %v2154 = vadd.f32 %v2066, %v2153
        %v2155 = vpop.f32.mrf.mxu0
        %2156 = vdwg.mxu0
        %v2157 = vmax.f32 %v2151, 0.0
        %v2158 = vmax.f32 %v2154, 0.0
        %v2159 = vpack.c.bf16 %v2158, %v2157
        %s2160 = scalar_lea.vmem [#allocation8], 1024
        %v2161 = vld [vmem:[%s2160] sm:$0xf]
        %v2162 = vld [vmem:[%s2160 + $0x4] sm:$0xf]
        %v2163 = vld [vmem:[%s2160 + $0x8] sm:$0xf]
        %v2164 = vld [vmem:[%s2160 + $0xc] sm:$0xf]
        %v2165 = vld [vmem:[%s2160 + $0x10] sm:$0xf]
        %v2166 = vld [vmem:[%s2160 + $0x14] sm:$0xf]
        %v2167 = vld [vmem:[%s2160 + $0x18] sm:$0xf]
        %v2168 = vld [vmem:[%s2160 + $0x1c] sm:$0xf]
        %v2169 = vld [vmem:[%s2160 + $0x20] sm:$0xf]
        %v2170 = vld [vmem:[%s2160 + $0x24] sm:$0xf]
        %v2171 = vld [vmem:[%s2160 + $0x28] sm:$0xf]
        %v2172 = vld [vmem:[%s2160 + $0x2c] sm:$0xf]
        %v2173 = vld [vmem:[%s2160 + $0x30] sm:$0xf]
        %v2174 = vld [vmem:[%s2160 + $0x34] sm:$0xf]
        %v2175 = vld [vmem:[%s2160 + $0x38] sm:$0xf]
        %v2176 = vld [vmem:[%s2160 + $0x3c] sm:$0xf]
        %s2177 = scalar_lea.vmem [#allocation10], 14
        %v2178 = vld [vmem:[%s2177] sm:$0x1]
        %v2180 = vlaneseq
        %v2181 = vshrl.u32 %v2180, 7
        %v2182 = vsub.s32 0, %v2181
        %v2183 = vrot.slane %v2178, %v2182
        %v2201 = vunpack.c.l.b16 %v2161
        %v2202 = vunpack.c.l.b16 %v2162
        %v2203 = vunpack.c.l.b16 %v2163
        %v2204 = vunpack.c.l.b16 %v2164
        %v2205 = vunpack.c.l.b16 %v2165
        %v2206 = vunpack.c.l.b16 %v2166
        %v2207 = vunpack.c.l.b16 %v2167
        %v2208 = vunpack.c.l.b16 %v2168
        %v2209 = vunpack.c.l.b16 %v2169
        %v2210 = vunpack.c.l.b16 %v2170
        %v2211 = vunpack.c.l.b16 %v2171
        %v2212 = vunpack.c.l.b16 %v2172
        %v2213 = vunpack.c.l.b16 %v2173
        %v2214 = vunpack.c.l.b16 %v2174
        %v2215 = vunpack.c.l.b16 %v2175
        %v2216 = vunpack.c.l.b16 %v2176
        %v2217 = vpack.c.b16 %v2202, %v2201
        %v2218 = vpack.c.b16 %v2204, %v2203
        %v2219 = vpack.c.b16 %v2206, %v2205
        %v2220 = vpack.c.b16 %v2208, %v2207
        %v2221 = vpack.c.b16 %v2210, %v2209
        %v2222 = vpack.c.b16 %v2212, %v2211
        %v2223 = vpack.c.b16 %v2214, %v2213
        %v2224 = vpack.c.b16 %v2216, %v2215
        %2233 = vmatprep.subr.bf16.mxu0 0
        %2234 = vmatpush1.bf16.msra.mxu0 %v2224
        %2235 = vmatprep.subr.bf16.mxu0 0
        %2236 = vmatpush1.bf16.msra.mxu0 %v2223
        %2237 = vmatprep.subr.bf16.mxu0 0
        %2238 = vmatpush1.bf16.msra.mxu0 %v2222
        %2239 = vmatprep.subr.bf16.mxu0 0
        %2240 = vmatpush1.bf16.msra.mxu0 %v2221
        %2241 = vmatprep.subr.bf16.mxu0 0
        %2242 = vmatpush1.bf16.msra.mxu0 %v2220
        %2243 = vmatprep.subr.bf16.mxu0 0
        %2244 = vmatpush1.bf16.msra.mxu0 %v2219
        %2245 = vmatprep.subr.bf16.mxu0 0
        %2246 = vmatpush1.bf16.msra.mxu0 %v2218
        %2247 = vmatprep.subr.bf16.mxu0 0
        %2248 = vmatpush1.bf16.msra.mxu0 %v2217
        %2249 = vmatprep.subr.bf16.mxu0 0
        %2250 = vmatpush2.bf16.msra.mxu0 0
        %2251 = vmatprep.subr.bf16.mxu0 0
        %2252 = vmatpush2.bf16.msra.mxu0 0
        %2253 = vmatprep.subr.bf16.mxu0 0
        %2254 = vmatpush2.bf16.msra.mxu0 0
        %2255 = vmatprep.subr.bf16.mxu0 0
        %2256 = vmatpush2.bf16.msra.mxu0 0
        %2257 = vmatprep.subr.bf16.mxu0 0
        %2258 = vmatpush2.bf16.msra.mxu0 0
        %2259 = vmatprep.subr.bf16.mxu0 0
        %2260 = vmatpush2.bf16.msra.mxu0 0
        %2261 = vmatprep.subr.bf16.mxu0 0
        %2262 = vmatpush2.bf16.msra.mxu0 0
        %2263 = vmatprep.subr.bf16.mxu0 0
        %2264 = vmatpush2.bf16.msra.mxu0 0
        %2265 = vmatprep.mubr.bf16.mxu0 0
        %2266 = vmatmul.mubr.bf16.gmra.mxu0 %v2159
        %v2267 = vpop.f32.mrf.mxu0
        %v2268 = vadd.f32 %v2183, %v2267
        %v2269 = vpop.f32.mrf.mxu0
        %v2270 = vpop.f32.mrf.mxu0
        %v2271 = vadd.f32 %v2183, %v2270
        %v2272 = vpop.f32.mrf.mxu0
        %2273 = vdwg.mxu0
        %s2274 = scalar_lea.vmem [#allocation10], 16
        %v2275 = vld [vmem:[%s2274] sm:$0x1]
        %vm2276 = vcmp.gt.f32.partialorder %v736, 0.0
        %vm2277 = vcmp.gt.f32.partialorder %v739, 0.0
        %v2279 = vlaneseq
        %v2280 = vshrl.u32 %v2279, 7
        %v2281 = vsub.s32 0, %v2280
        %v2282 = vrot.slane %v2275, %v2281
        %v2284 = vmul.f32 %v2282, %v736
        %v2285 = vmul.f32 %v2282, %v739
        %v2286 = vsel %vm2276, %v736, %v2284
        %v2287 = vsel %vm2277, %v739, %v2285
        %v2288 = vpack.c.bf16 %v2287, %v2286
        %s2289 = scalar_lea.vmem [#allocation8], 1088
        %v2290 = vld [vmem:[%s2289] sm:$0xf]
        %v2291 = vld [vmem:[%s2289 + $0x4] sm:$0xf]
        %v2292 = vld [vmem:[%s2289 + $0x8] sm:$0xf]
        %v2293 = vld [vmem:[%s2289 + $0xc] sm:$0xf]
        %v2294 = vld [vmem:[%s2289 + $0x10] sm:$0xf]
        %v2295 = vld [vmem:[%s2289 + $0x14] sm:$0xf]
        %v2296 = vld [vmem:[%s2289 + $0x18] sm:$0xf]
        %v2297 = vld [vmem:[%s2289 + $0x1c] sm:$0xf]
        %v2298 = vld [vmem:[%s2289 + $0x20] sm:$0xf]
        %v2299 = vld [vmem:[%s2289 + $0x24] sm:$0xf]
        %v2300 = vld [vmem:[%s2289 + $0x28] sm:$0xf]
        %v2301 = vld [vmem:[%s2289 + $0x2c] sm:$0xf]
        %v2302 = vld [vmem:[%s2289 + $0x30] sm:$0xf]
        %v2303 = vld [vmem:[%s2289 + $0x34] sm:$0xf]
        %v2304 = vld [vmem:[%s2289 + $0x38] sm:$0xf]
        %v2305 = vld [vmem:[%s2289 + $0x3c] sm:$0xf]
        %s2306 = scalar_lea.vmem [#allocation10], 15
        %v2307 = vld [vmem:[%s2306] sm:$0x1]
        %v2309 = vlaneseq
        %v2310 = vshrl.u32 %v2309, 7
        %v2311 = vsub.s32 0, %v2310
        %v2312 = vrot.slane %v2307, %v2311
        %v2330 = vunpack.c.l.b16 %v2290
        %v2331 = vunpack.c.l.b16 %v2291
        %v2332 = vunpack.c.l.b16 %v2292
        %v2333 = vunpack.c.l.b16 %v2293
        %v2334 = vunpack.c.l.b16 %v2294
        %v2335 = vunpack.c.l.b16 %v2295
        %v2336 = vunpack.c.l.b16 %v2296
        %v2337 = vunpack.c.l.b16 %v2297
        %v2338 = vunpack.c.l.b16 %v2298
        %v2339 = vunpack.c.l.b16 %v2299
        %v2340 = vunpack.c.l.b16 %v2300
        %v2341 = vunpack.c.l.b16 %v2301
        %v2342 = vunpack.c.l.b16 %v2302
        %v2343 = vunpack.c.l.b16 %v2303
        %v2344 = vunpack.c.l.b16 %v2304
        %v2345 = vunpack.c.l.b16 %v2305
        %v2346 = vpack.c.b16 %v2331, %v2330
        %v2347 = vpack.c.b16 %v2333, %v2332
        %v2348 = vpack.c.b16 %v2335, %v2334
        %v2349 = vpack.c.b16 %v2337, %v2336
        %v2350 = vpack.c.b16 %v2339, %v2338
        %v2351 = vpack.c.b16 %v2341, %v2340
        %v2352 = vpack.c.b16 %v2343, %v2342
        %v2353 = vpack.c.b16 %v2345, %v2344
        %2362 = vmatprep.subr.bf16.mxu0 0
        %2363 = vmatpush1.bf16.msra.mxu0 %v2353
        %2364 = vmatprep.subr.bf16.mxu0 0
        %2365 = vmatpush1.bf16.msra.mxu0 %v2352
        %2366 = vmatprep.subr.bf16.mxu0 0
        %2367 = vmatpush1.bf16.msra.mxu0 %v2351
        %2368 = vmatprep.subr.bf16.mxu0 0
        %2369 = vmatpush1.bf16.msra.mxu0 %v2350
        %2370 = vmatprep.subr.bf16.mxu0 0
        %2371 = vmatpush1.bf16.msra.mxu0 %v2349
        %2372 = vmatprep.subr.bf16.mxu0 0
        %2373 = vmatpush1.bf16.msra.mxu0 %v2348
        %2374 = vmatprep.subr.bf16.mxu0 0
        %2375 = vmatpush1.bf16.msra.mxu0 %v2347
        %2376 = vmatprep.subr.bf16.mxu0 0
        %2377 = vmatpush1.bf16.msra.mxu0 %v2346
        %2378 = vmatprep.subr.bf16.mxu0 0
        %2379 = vmatpush2.bf16.msra.mxu0 0
        %2380 = vmatprep.subr.bf16.mxu0 0
        %2381 = vmatpush2.bf16.msra.mxu0 0
        %2382 = vmatprep.subr.bf16.mxu0 0
        %2383 = vmatpush2.bf16.msra.mxu0 0
        %2384 = vmatprep.subr.bf16.mxu0 0
        %2385 = vmatpush2.bf16.msra.mxu0 0
        %2386 = vmatprep.subr.bf16.mxu0 0
        %2387 = vmatpush2.bf16.msra.mxu0 0
        %2388 = vmatprep.subr.bf16.mxu0 0
        %2389 = vmatpush2.bf16.msra.mxu0 0
        %2390 = vmatprep.subr.bf16.mxu0 0
        %2391 = vmatpush2.bf16.msra.mxu0 0
        %2392 = vmatprep.subr.bf16.mxu0 0
        %2393 = vmatpush2.bf16.msra.mxu0 0
        %2394 = vmatprep.mubr.bf16.mxu0 0
        %2395 = vmatmul.mubr.bf16.gmra.mxu0 %v2288
        %v2396 = vpop.f32.mrf.mxu0
        %v2397 = vadd.f32 %v2312, %v2396
        %v2398 = vpop.f32.mrf.mxu0
        %v2399 = vpop.f32.mrf.mxu0
        %v2400 = vadd.f32 %v2312, %v2399
        %v2401 = vpop.f32.mrf.mxu0
        %2402 = vdwg.mxu0
        %2403 = vmax.xlane.f32.xlu0 %v2397
        %v2404 = vpop.xlane.xlu0 %2403
        %2405 = vmax.xlane.f32.xlu0 %v2400
        %v2406 = vpop.xlane.xlu0 %2405
        %v2407 = vsub.f32 %v2397, %v2404
        %v2408 = vsub.f32 %v2400, %v2406
        %v2409 = vmul.f32 %v2407, 1.442695
        %v2410 = vpow.pop %v2409
        %v2411 = vmul.f32 %v2408, 1.442695
        %v2412 = vpow.pop %v2411
        %2413 = vadd.xlane.f32.xlu0 %v2410
        %v2414 = vpop.xlane.xlu0 %2413
        %2415 = vadd.xlane.f32.xlu0 %v2412
        %v2416 = vpop.xlane.xlu0 %2415
        %v2417 = vlog2.pop %v2414
        %v2418 = vmul.f32 %v2417, 0.6931472
        %v2419 = vlog2.pop %v2416
        %v2420 = vmul.f32 %v2419, 0.6931472
        %v2421 = vsub.f32 %v2407, %v2418
        %v2422 = vsub.f32 %v2408, %v2420
        %2423 = vst [vmem:[%s379] sm:$0xff] %v2421
        %2424 = vst [vmem:[%s379 + $0x20] sm:$0xff] %v2422
        %s2425 = scalar_lea.vmem [#allocation10], 18
        %v2426 = vld [vmem:[%s2425] sm:$0x1]
        %vm2427 = vcmp.gt.f32.partialorder %v1087, 0.0
        %vm2428 = vcmp.gt.f32.partialorder %v1090, 0.0
        %v2430 = vlaneseq
        %v2431 = vshrl.u32 %v2430, 7
        %v2432 = vsub.s32 0, %v2431
        %v2433 = vrot.slane %v2426, %v2432
        %v2435 = vmul.f32 %v2433, %v1087
        %v2436 = vmul.f32 %v2433, %v1090
        %v2437 = vsel %vm2427, %v1087, %v2435
        %v2438 = vsel %vm2428, %v1090, %v2436
        %v2439 = vpack.c.bf16 %v2438, %v2437
        %s2440 = scalar_lea.vmem [#allocation8], 1152
        %v2441 = vld [vmem:[%s2440] sm:$0xf]
        %v2442 = vld [vmem:[%s2440 + $0x4] sm:$0xf]
        %v2443 = vld [vmem:[%s2440 + $0x8] sm:$0xf]
        %v2444 = vld [vmem:[%s2440 + $0xc] sm:$0xf]
        %v2445 = vld [vmem:[%s2440 + $0x10] sm:$0xf]
        %v2446 = vld [vmem:[%s2440 + $0x14] sm:$0xf]
        %v2447 = vld [vmem:[%s2440 + $0x18] sm:$0xf]
        %v2448 = vld [vmem:[%s2440 + $0x1c] sm:$0xf]
        %v2449 = vld [vmem:[%s2440 + $0x20] sm:$0xf]
        %v2450 = vld [vmem:[%s2440 + $0x24] sm:$0xf]
        %v2451 = vld [vmem:[%s2440 + $0x28] sm:$0xf]
        %v2452 = vld [vmem:[%s2440 + $0x2c] sm:$0xf]
        %v2453 = vld [vmem:[%s2440 + $0x30] sm:$0xf]
        %v2454 = vld [vmem:[%s2440 + $0x34] sm:$0xf]
        %v2455 = vld [vmem:[%s2440 + $0x38] sm:$0xf]
        %v2456 = vld [vmem:[%s2440 + $0x3c] sm:$0xf]
        %s2457 = scalar_lea.vmem [#allocation10], 17
        %v2458 = vld [vmem:[%s2457] sm:$0x1]
        %v2460 = vlaneseq
        %v2461 = vshrl.u32 %v2460, 7
        %v2462 = vsub.s32 0, %v2461
        %v2463 = vrot.slane %v2458, %v2462
        %v2481 = vunpack.c.l.b16 %v2441
        %v2482 = vunpack.c.l.b16 %v2442
        %v2483 = vunpack.c.l.b16 %v2443
        %v2484 = vunpack.c.l.b16 %v2444
        %v2485 = vunpack.c.l.b16 %v2445
        %v2486 = vunpack.c.l.b16 %v2446
        %v2487 = vunpack.c.l.b16 %v2447
        %v2488 = vunpack.c.l.b16 %v2448
        %v2489 = vunpack.c.l.b16 %v2449
        %v2490 = vunpack.c.l.b16 %v2450
        %v2491 = vunpack.c.l.b16 %v2451
        %v2492 = vunpack.c.l.b16 %v2452
        %v2493 = vunpack.c.l.b16 %v2453
        %v2494 = vunpack.c.l.b16 %v2454
        %v2495 = vunpack.c.l.b16 %v2455
        %v2496 = vunpack.c.l.b16 %v2456
        %v2497 = vpack.c.b16 %v2482, %v2481
        %v2498 = vpack.c.b16 %v2484, %v2483
        %v2499 = vpack.c.b16 %v2486, %v2485
        %v2500 = vpack.c.b16 %v2488, %v2487
        %v2501 = vpack.c.b16 %v2490, %v2489
        %v2502 = vpack.c.b16 %v2492, %v2491
        %v2503 = vpack.c.b16 %v2494, %v2493
        %v2504 = vpack.c.b16 %v2496, %v2495
        %2513 = vmatprep.subr.bf16.mxu0 0
        %2514 = vmatpush1.bf16.msra.mxu0 %v2504
        %2515 = vmatprep.subr.bf16.mxu0 0
        %2516 = vmatpush1.bf16.msra.mxu0 %v2503
        %2517 = vmatprep.subr.bf16.mxu0 0
        %2518 = vmatpush1.bf16.msra.mxu0 %v2502
        %2519 = vmatprep.subr.bf16.mxu0 0
        %2520 = vmatpush1.bf16.msra.mxu0 %v2501
        %2521 = vmatprep.subr.bf16.mxu0 0
        %2522 = vmatpush1.bf16.msra.mxu0 %v2500
        %2523 = vmatprep.subr.bf16.mxu0 0
        %2524 = vmatpush1.bf16.msra.mxu0 %v2499
        %2525 = vmatprep.subr.bf16.mxu0 0
        %2526 = vmatpush1.bf16.msra.mxu0 %v2498
        %2527 = vmatprep.subr.bf16.mxu0 0
        %2528 = vmatpush1.bf16.msra.mxu0 %v2497
        %2529 = vmatprep.subr.bf16.mxu0 0
        %2530 = vmatpush2.bf16.msra.mxu0 0
        %2531 = vmatprep.subr.bf16.mxu0 0
        %2532 = vmatpush2.bf16.msra.mxu0 0
        %2533 = vmatprep.subr.bf16.mxu0 0
        %2534 = vmatpush2.bf16.msra.mxu0 0
        %2535 = vmatprep.subr.bf16.mxu0 0
        %2536 = vmatpush2.bf16.msra.mxu0 0
        %2537 = vmatprep.subr.bf16.mxu0 0
        %2538 = vmatpush2.bf16.msra.mxu0 0
        %2539 = vmatprep.subr.bf16.mxu0 0
        %2540 = vmatpush2.bf16.msra.mxu0 0
        %2541 = vmatprep.subr.bf16.mxu0 0
        %2542 = vmatpush2.bf16.msra.mxu0 0
        %2543 = vmatprep.subr.bf16.mxu0 0
        %2544 = vmatpush2.bf16.msra.mxu0 0
        %2545 = vmatprep.mubr.bf16.mxu0 0
        %2546 = vmatmul.mubr.bf16.gmra.mxu0 %v2439
        %v2547 = vpop.f32.mrf.mxu0
        %v2548 = vadd.f32 %v2463, %v2547
        %v2549 = vpop.f32.mrf.mxu0
        %v2550 = vpop.f32.mrf.mxu0
        %v2551 = vadd.f32 %v2463, %v2550
        %v2552 = vpop.f32.mrf.mxu0
        %2553 = vdwg.mxu0
        %2554 = vmax.xlane.f32.xlu0 %v2548
        %v2555 = vpop.xlane.xlu0 %2554
        %2556 = vmax.xlane.f32.xlu0 %v2551
        %v2557 = vpop.xlane.xlu0 %2556
        %v2558 = vsub.f32 %v2548, %v2555
        %v2559 = vsub.f32 %v2551, %v2557
        %v2560 = vmul.f32 %v2558, 1.442695
        %v2561 = vpow.pop %v2560
        %v2562 = vmul.f32 %v2559, 1.442695
        %v2563 = vpow.pop %v2562
        %2564 = vadd.xlane.f32.xlu0 %v2561
        %v2565 = vpop.xlane.xlu0 %2564
        %2566 = vadd.xlane.f32.xlu0 %v2563
        %v2567 = vpop.xlane.xlu0 %2566
        %v2568 = vlog2.pop %v2565
        %v2569 = vmul.f32 %v2568, 0.6931472
        %v2570 = vlog2.pop %v2567
        %v2571 = vmul.f32 %v2570, 0.6931472
        %v2572 = vsub.f32 %v2558, %v2569
        %v2573 = vsub.f32 %v2559, %v2571
        %2574 = vst [vmem:[%s379 + $0x8] sm:$0xff] %v2572
        %2575 = vst [vmem:[%s379 + $0x28] sm:$0xff] %v2573
        %s2576 = scalar_lea.vmem [#allocation10], 20
        %v2577 = vld [vmem:[%s2576] sm:$0x1]
        %vm2578 = vcmp.gt.f32.partialorder %v1438, 0.0
        %vm2579 = vcmp.gt.f32.partialorder %v1441, 0.0
        %v2581 = vlaneseq
        %v2582 = vshrl.u32 %v2581, 7
        %v2583 = vsub.s32 0, %v2582
        %v2584 = vrot.slane %v2577, %v2583
        %v2586 = vmul.f32 %v2584, %v1438
        %v2587 = vmul.f32 %v2584, %v1441
        %v2588 = vsel %vm2578, %v1438, %v2586
        %v2589 = vsel %vm2579, %v1441, %v2587
        %v2590 = vpack.c.bf16 %v2589, %v2588
        %s2591 = scalar_lea.vmem [#allocation8], 1216
        %v2592 = vld [vmem:[%s2591] sm:$0xf]
        %v2593 = vld [vmem:[%s2591 + $0x4] sm:$0xf]
        %v2594 = vld [vmem:[%s2591 + $0x8] sm:$0xf]
        %v2595 = vld [vmem:[%s2591 + $0xc] sm:$0xf]
        %v2596 = vld [vmem:[%s2591 + $0x10] sm:$0xf]
        %v2597 = vld [vmem:[%s2591 + $0x14] sm:$0xf]
        %v2598 = vld [vmem:[%s2591 + $0x18] sm:$0xf]
        %v2599 = vld [vmem:[%s2591 + $0x1c] sm:$0xf]
        %v2600 = vld [vmem:[%s2591 + $0x20] sm:$0xf]
        %v2601 = vld [vmem:[%s2591 + $0x24] sm:$0xf]
        %v2602 = vld [vmem:[%s2591 + $0x28] sm:$0xf]
        %v2603 = vld [vmem:[%s2591 + $0x2c] sm:$0xf]
        %v2604 = vld [vmem:[%s2591 + $0x30] sm:$0xf]
        %v2605 = vld [vmem:[%s2591 + $0x34] sm:$0xf]
        %v2606 = vld [vmem:[%s2591 + $0x38] sm:$0xf]
        %v2607 = vld [vmem:[%s2591 + $0x3c] sm:$0xf]
        %s2608 = scalar_lea.vmem [#allocation10], 19
        %v2609 = vld [vmem:[%s2608] sm:$0x1]
        %v2611 = vlaneseq
        %v2612 = vshrl.u32 %v2611, 7
        %v2613 = vsub.s32 0, %v2612
        %v2614 = vrot.slane %v2609, %v2613
        %v2632 = vunpack.c.l.b16 %v2592
        %v2633 = vunpack.c.l.b16 %v2593
        %v2634 = vunpack.c.l.b16 %v2594
        %v2635 = vunpack.c.l.b16 %v2595
        %v2636 = vunpack.c.l.b16 %v2596
        %v2637 = vunpack.c.l.b16 %v2597
        %v2638 = vunpack.c.l.b16 %v2598
        %v2639 = vunpack.c.l.b16 %v2599
        %v2640 = vunpack.c.l.b16 %v2600
        %v2641 = vunpack.c.l.b16 %v2601
        %v2642 = vunpack.c.l.b16 %v2602
        %v2643 = vunpack.c.l.b16 %v2603
        %v2644 = vunpack.c.l.b16 %v2604
        %v2645 = vunpack.c.l.b16 %v2605
        %v2646 = vunpack.c.l.b16 %v2606
        %v2647 = vunpack.c.l.b16 %v2607
        %v2648 = vpack.c.b16 %v2633, %v2632
        %v2649 = vpack.c.b16 %v2635, %v2634
        %v2650 = vpack.c.b16 %v2637, %v2636
        %v2651 = vpack.c.b16 %v2639, %v2638
        %v2652 = vpack.c.b16 %v2641, %v2640
        %v2653 = vpack.c.b16 %v2643, %v2642
        %v2654 = vpack.c.b16 %v2645, %v2644
        %v2655 = vpack.c.b16 %v2647, %v2646
        %2664 = vmatprep.subr.bf16.mxu0 0
        %2665 = vmatpush1.bf16.msra.mxu0 %v2655
        %2666 = vmatprep.subr.bf16.mxu0 0
        %2667 = vmatpush1.bf16.msra.mxu0 %v2654
        %2668 = vmatprep.subr.bf16.mxu0 0
        %2669 = vmatpush1.bf16.msra.mxu0 %v2653
        %2670 = vmatprep.subr.bf16.mxu0 0
        %2671 = vmatpush1.bf16.msra.mxu0 %v2652
        %2672 = vmatprep.subr.bf16.mxu0 0
        %2673 = vmatpush1.bf16.msra.mxu0 %v2651
        %2674 = vmatprep.subr.bf16.mxu0 0
        %2675 = vmatpush1.bf16.msra.mxu0 %v2650
        %2676 = vmatprep.subr.bf16.mxu0 0
        %2677 = vmatpush1.bf16.msra.mxu0 %v2649
        %2678 = vmatprep.subr.bf16.mxu0 0
        %2679 = vmatpush1.bf16.msra.mxu0 %v2648
        %2680 = vmatprep.subr.bf16.mxu0 0
        %2681 = vmatpush2.bf16.msra.mxu0 0
        %2682 = vmatprep.subr.bf16.mxu0 0
        %2683 = vmatpush2.bf16.msra.mxu0 0
        %2684 = vmatprep.subr.bf16.mxu0 0
        %2685 = vmatpush2.bf16.msra.mxu0 0
        %2686 = vmatprep.subr.bf16.mxu0 0
        %2687 = vmatpush2.bf16.msra.mxu0 0
        %2688 = vmatprep.subr.bf16.mxu0 0
        %2689 = vmatpush2.bf16.msra.mxu0 0
        %2690 = vmatprep.subr.bf16.mxu0 0
        %2691 = vmatpush2.bf16.msra.mxu0 0
        %2692 = vmatprep.subr.bf16.mxu0 0
        %2693 = vmatpush2.bf16.msra.mxu0 0
        %2694 = vmatprep.subr.bf16.mxu0 0
        %2695 = vmatpush2.bf16.msra.mxu0 0
        %2696 = vmatprep.mubr.bf16.mxu0 0
        %2697 = vmatmul.mubr.bf16.gmra.mxu0 %v2590
        %v2698 = vpop.f32.mrf.mxu0
        %v2699 = vadd.f32 %v2614, %v2698
        %v2700 = vpop.f32.mrf.mxu0
        %v2701 = vpop.f32.mrf.mxu0
        %v2702 = vadd.f32 %v2614, %v2701
        %v2703 = vpop.f32.mrf.mxu0
        %2704 = vdwg.mxu0
        %2705 = vmax.xlane.f32.xlu0 %v2699
        %v2706 = vpop.xlane.xlu0 %2705
        %2707 = vmax.xlane.f32.xlu0 %v2702
        %v2708 = vpop.xlane.xlu0 %2707
        %v2709 = vsub.f32 %v2699, %v2706
        %v2710 = vsub.f32 %v2702, %v2708
        %v2711 = vmul.f32 %v2709, 1.442695
        %v2712 = vpow.pop %v2711
        %v2713 = vmul.f32 %v2710, 1.442695
        %v2714 = vpow.pop %v2713
        %2715 = vadd.xlane.f32.xlu0 %v2712
        %v2716 = vpop.xlane.xlu0 %2715
        %2717 = vadd.xlane.f32.xlu0 %v2714
        %v2718 = vpop.xlane.xlu0 %2717
        %v2719 = vlog2.pop %v2716
        %v2720 = vmul.f32 %v2719, 0.6931472
        %v2721 = vlog2.pop %v2718
        %v2722 = vmul.f32 %v2721, 0.6931472
        %v2723 = vsub.f32 %v2709, %v2720
        %v2724 = vsub.f32 %v2710, %v2722
        %2725 = vst [vmem:[%s379 + $0x10] sm:$0xff] %v2723
        %2726 = vst [vmem:[%s379 + $0x30] sm:$0xff] %v2724
        %s2727 = scalar_lea.vmem [#allocation10], 22
        %v2728 = vld [vmem:[%s2727] sm:$0x1]
        %vm2729 = vcmp.gt.f32.partialorder %v2268, 0.0
        %vm2730 = vcmp.gt.f32.partialorder %v2271, 0.0
        %v2732 = vlaneseq
        %v2733 = vshrl.u32 %v2732, 7
        %v2734 = vsub.s32 0, %v2733
        %v2735 = vrot.slane %v2728, %v2734
        %v2737 = vmul.f32 %v2735, %v2268
        %v2738 = vmul.f32 %v2735, %v2271
        %v2739 = vsel %vm2729, %v2268, %v2737
        %v2740 = vsel %vm2730, %v2271, %v2738
        %v2741 = vpack.c.bf16 %v2740, %v2739
        %s2742 = scalar_lea.vmem [#allocation8], 1280
        %v2743 = vld [vmem:[%s2742] sm:$0xf]
        %v2744 = vld [vmem:[%s2742 + $0x4] sm:$0xf]
        %v2745 = vld [vmem:[%s2742 + $0x8] sm:$0xf]
        %v2746 = vld [vmem:[%s2742 + $0xc] sm:$0xf]
        %v2747 = vld [vmem:[%s2742 + $0x10] sm:$0xf]
        %v2748 = vld [vmem:[%s2742 + $0x14] sm:$0xf]
        %v2749 = vld [vmem:[%s2742 + $0x18] sm:$0xf]
        %v2750 = vld [vmem:[%s2742 + $0x1c] sm:$0xf]
        %v2751 = vld [vmem:[%s2742 + $0x20] sm:$0xf]
        %v2752 = vld [vmem:[%s2742 + $0x24] sm:$0xf]
        %v2753 = vld [vmem:[%s2742 + $0x28] sm:$0xf]
        %v2754 = vld [vmem:[%s2742 + $0x2c] sm:$0xf]
        %v2755 = vld [vmem:[%s2742 + $0x30] sm:$0xf]
        %v2756 = vld [vmem:[%s2742 + $0x34] sm:$0xf]
        %v2757 = vld [vmem:[%s2742 + $0x38] sm:$0xf]
        %v2758 = vld [vmem:[%s2742 + $0x3c] sm:$0xf]
        %s2759 = scalar_lea.vmem [#allocation10], 21
        %v2760 = vld [vmem:[%s2759] sm:$0x1]
        %v2762 = vlaneseq
        %v2763 = vshrl.u32 %v2762, 7
        %v2764 = vsub.s32 0, %v2763
        %v2765 = vrot.slane %v2760, %v2764
        %v2783 = vunpack.c.l.b16 %v2743
        %v2784 = vunpack.c.l.b16 %v2744
        %v2785 = vunpack.c.l.b16 %v2745
        %v2786 = vunpack.c.l.b16 %v2746
        %v2787 = vunpack.c.l.b16 %v2747
        %v2788 = vunpack.c.l.b16 %v2748
        %v2789 = vunpack.c.l.b16 %v2749
        %v2790 = vunpack.c.l.b16 %v2750
        %v2791 = vunpack.c.l.b16 %v2751
        %v2792 = vunpack.c.l.b16 %v2752
        %v2793 = vunpack.c.l.b16 %v2753
        %v2794 = vunpack.c.l.b16 %v2754
        %v2795 = vunpack.c.l.b16 %v2755
        %v2796 = vunpack.c.l.b16 %v2756
        %v2797 = vunpack.c.l.b16 %v2757
        %v2798 = vunpack.c.l.b16 %v2758
        %v2799 = vpack.c.b16 %v2784, %v2783
        %v2800 = vpack.c.b16 %v2786, %v2785
        %v2801 = vpack.c.b16 %v2788, %v2787
        %v2802 = vpack.c.b16 %v2790, %v2789
        %v2803 = vpack.c.b16 %v2792, %v2791
        %v2804 = vpack.c.b16 %v2794, %v2793
        %v2805 = vpack.c.b16 %v2796, %v2795
        %v2806 = vpack.c.b16 %v2798, %v2797
        %2815 = vmatprep.subr.bf16.mxu0 0
        %2816 = vmatpush1.bf16.msra.mxu0 %v2806
        %2817 = vmatprep.subr.bf16.mxu0 0
        %2818 = vmatpush1.bf16.msra.mxu0 %v2805
        %2819 = vmatprep.subr.bf16.mxu0 0
        %2820 = vmatpush1.bf16.msra.mxu0 %v2804
        %2821 = vmatprep.subr.bf16.mxu0 0
        %2822 = vmatpush1.bf16.msra.mxu0 %v2803
        %2823 = vmatprep.subr.bf16.mxu0 0
        %2824 = vmatpush1.bf16.msra.mxu0 %v2802
        %2825 = vmatprep.subr.bf16.mxu0 0
        %2826 = vmatpush1.bf16.msra.mxu0 %v2801
        %2827 = vmatprep.subr.bf16.mxu0 0
        %2828 = vmatpush1.bf16.msra.mxu0 %v2800
        %2829 = vmatprep.subr.bf16.mxu0 0
        %2830 = vmatpush1.bf16.msra.mxu0 %v2799
        %2831 = vmatprep.subr.bf16.mxu0 0
        %2832 = vmatpush2.bf16.msra.mxu0 0
        %2833 = vmatprep.subr.bf16.mxu0 0
        %2834 = vmatpush2.bf16.msra.mxu0 0
        %2835 = vmatprep.subr.bf16.mxu0 0
        %2836 = vmatpush2.bf16.msra.mxu0 0
        %2837 = vmatprep.subr.bf16.mxu0 0
        %2838 = vmatpush2.bf16.msra.mxu0 0
        %2839 = vmatprep.subr.bf16.mxu0 0
        %2840 = vmatpush2.bf16.msra.mxu0 0
        %2841 = vmatprep.subr.bf16.mxu0 0
        %2842 = vmatpush2.bf16.msra.mxu0 0
        %2843 = vmatprep.subr.bf16.mxu0 0
        %2844 = vmatpush2.bf16.msra.mxu0 0
        %2845 = vmatprep.subr.bf16.mxu0 0
        %2846 = vmatpush2.bf16.msra.mxu0 0
        %2847 = vmatprep.mubr.bf16.mxu0 0
        %2848 = vmatmul.mubr.bf16.gmra.mxu0 %v2741
        %v2849 = vpop.f32.mrf.mxu0
        %v2850 = vadd.f32 %v2765, %v2849
        %v2851 = vpop.f32.mrf.mxu0
        %v2852 = vpop.f32.mrf.mxu0
        %v2853 = vadd.f32 %v2765, %v2852
        %v2854 = vpop.f32.mrf.mxu0
        %2855 = vdwg.mxu0
        %2856 = vmax.xlane.f32.xlu0 %v2850
        %v2857 = vpop.xlane.xlu0 %2856
        %2858 = vmax.xlane.f32.xlu0 %v2853
        %v2859 = vpop.xlane.xlu0 %2858
        %v2860 = vsub.f32 %v2850, %v2857
        %v2861 = vsub.f32 %v2853, %v2859
        %v2862 = vmul.f32 %v2860, 1.442695
        %v2863 = vpow.pop %v2862
        %v2864 = vmul.f32 %v2861, 1.442695
        %v2865 = vpow.pop %v2864
        %2866 = vadd.xlane.f32.xlu0 %v2863
        %v2867 = vpop.xlane.xlu0 %2866
        %2868 = vadd.xlane.f32.xlu0 %v2865
        %v2869 = vpop.xlane.xlu0 %2868
        %v2870 = vlog2.pop %v2867
        %v2871 = vmul.f32 %v2870, 0.6931472
        %v2872 = vlog2.pop %v2869
        %v2873 = vmul.f32 %v2872, 0.6931472
        %v2874 = vsub.f32 %v2860, %v2871
        %v2875 = vsub.f32 %v2861, %v2873
        %2876 = vst [vmem:[%s379 + $0x18] sm:$0xff] %v2874
        %2877 = vst [vmem:[%s379 + $0x38] sm:$0xff] %v2875
        %2878 = vst [vmem:[%s386] sm:$0xff] %v2268
        %2879 = vst [vmem:[%s386 + $0x8] sm:$0xff] %v2271
        %s2880 = sand.u32 %s159, 1
        %s2881 = scalar_lea.sflag [#allocation4], %s2880
        %s2882 = sand.u32 %s159, 1
        %s2883 = smul.addr %s2882, 64
        %s2884 = scalar_lea.vmem [#allocation11], %s2883
        %s2885 = sand.u32 %s185, 1
        %s2886 = scalar_lea.sflag [#allocation13], %s2885
        %s2887 = sand.u32 %s185, 1
        %s2888 = smul.addr %s2887, 16
        %s2889 = scalar_lea.vmem [#allocation12], %s2888
        // Predicated region
        $region61: #{tpu_custom_call.1} parent=39 // pred_check
          %p2890 = pneg %p169
        $region62: #{tpu_custom_call.1} parent=39 // pred_check_branch
          %2892 = sbr.rel (%p2890) target = $region64
        $region63: #{tpu_custom_call.1} parent=39 // pred_region
          %s2893 = smul.u32 2, %s31
          %s2895 = ssub.s32 1024, 1024
          %2896 = vsyncadd %s2881, %s2895
          %s2897 = smul.addr %s2893, 4
          %s2898 = smul.addr %s2897, 128
          %s2899 = scalar_lea.hbm %s5, %s2898
          %s2900 = sshll.u32 %s2884, 4
          %s2901 = int_to_ptr.vmem [resolvable:$true] %s2900
          %2906 = dma.vmem_to_hbm [thread:$0]  %s2901, 1024, %s2899, %s2881, 512, 512, 32
        $region64: #{tpu_custom_call.1} parent=39 // pred_fallthru
          _
        // Predicated region
        $region65: #{tpu_custom_call.1} parent=39 // pred_check
          %p2907 = pneg %p195
        $region66: #{tpu_custom_call.1} parent=39 // pred_check_branch
          %2909 = sbr.rel (%p2907) target = $region68
        $region67: #{tpu_custom_call.1} parent=39 // pred_region
          %s2910 = smul.u32 2, %s31
          %s2912 = ssub.s32 256, 256
          %2913 = vsyncadd %s2886, %s2912
          %s2914 = smul.addr %s2910, 128
          %s2915 = scalar_lea.hbm %s6, %s2914
          %s2916 = sshll.u32 %s2889, 4
          %s2917 = int_to_ptr.vmem [resolvable:$true] %s2916
          %2922 = dma.vmem_to_hbm [thread:$0]  %s2917, 256, %s2915, %s2886, 128, 128, 8
        $region68: #{tpu_custom_call.1} parent=39 // pred_fallthru
          _
      $region40: #{tpu_custom_call.1} parent=5 // pred_fallthru
        _
      %p2923 = scmp.le.s32.totalorder 2, %s26
      // Predicated region
      $region69: #{tpu_custom_call.1} parent=5 // pred_check
        %p2924 = pneg %p2923
      $region70: #{tpu_custom_call.1} parent=5 // pred_check_branch
        %2926 = sbr.rel (%p2924) target = $region72
      $region71: #{tpu_custom_call.1} parent=5 // pred_region
        %s2927 = ssub.s32 %s26, 2
        // Predicated region
        $region73: #{tpu_custom_call.1} parent=71 // pred_check
          %p2928 = pneg %p175
        $region74: #{tpu_custom_call.1} parent=71 // pred_check_branch
          %2930 = sbr.rel (%p2928) target = $region76
        $region75: #{tpu_custom_call.1} parent=71 // pred_region
          %s2931 = sand.u32 %s160, 1
          %s2932 = scalar_lea.sflag [#allocation4], %s2931
          %s2933 = sand.u32 %s160, 1
          %s2934 = smul.addr %s2933, 64
          %s2935 = scalar_lea.vmem [#allocation11], %s2934
          %2936 = dma.done %s2932, 1024
        $region76: #{tpu_custom_call.1} parent=71 // pred_fallthru
          _
        // Predicated region
        $region77: #{tpu_custom_call.1} parent=71 // pred_check
          %p2937 = pneg %p201
        $region78: #{tpu_custom_call.1} parent=71 // pred_check_branch
          %2939 = sbr.rel (%p2937) target = $region80
        $region79: #{tpu_custom_call.1} parent=71 // pred_region
          %s2940 = sand.u32 %s186, 1
          %s2941 = scalar_lea.sflag [#allocation13], %s2940
          %s2942 = sand.u32 %s186, 1
          %s2943 = smul.addr %s2942, 16
          %s2944 = scalar_lea.vmem [#allocation12], %s2943
          %2945 = dma.done %s2941, 256
        $region80: #{tpu_custom_call.1} parent=71 // pred_fallthru
          _
      $region72: #{tpu_custom_call.1} parent=5 // pred_fallthru
        _
    $region6: #{tpu_custom_call.1} parent=1 // loop_footer
      %s30 = sadd.s32 1, %s26
    $region7: #{tpu_custom_call.1} parent=1 // loop_footer_branch
      %25 = sbr.rel target = $region3
    $region8: #{tpu_custom_call.1} parent=1 // loop_exit
      _
    %2946 = vsyncpa [#allocation3], 1
    %s2947 = scalar_lea.sflag [#allocation3], 1
    %2948 = vsyncpa %s2947, 1
    %2949 = vsyncpa [#allocation6], 1
    %s2950 = scalar_lea.sflag [#allocation6], 1
    %2951 = vsyncpa %s2950, 1
    %2952 = vsyncpa [#allocation9], 1
    %2953 = vsyncpa [#allocation4], 1
    %s2954 = scalar_lea.sflag [#allocation4], 1
    %2955 = vsyncpa %s2954, 1
    %2956 = vsyncpa [#allocation13], 1
    %s2957 = scalar_lea.sflag [#allocation13], 1
    %2958 = vsyncpa %s2957, 1

</llo_original>
